<compile_context>
chip_gen: v7x
topology: tpu7x:2x2x1
jax: 0.10.0
libtpu: 0.0.40
codegen_flags: <defaults>
</compile_context>

<pallas_src>
import math

import jax
import jax.numpy as jnp
from jax import lax
from jax.experimental import pallas as pl
from jax.experimental.pallas import tpu as pltpu

EMBED = 32
HEADS = 4
HEAD_DIM = EMBED // HEADS
FF_EXPANSION = 4
HIDDEN = FF_EXPANSION * EMBED
SEQ = 8
BATCH = 2
LN_EPS = 1e-5
SCALE = 1.0 / math.sqrt(EMBED)

# dot_general dimension numbers
_DN_XWT = (((1,), (1,)), ((), ()))        # x @ W.T                       (2-D)
_DN_QKT = (((2,), (2,)), ((0,), (0,)))    # (H,q,d)·(H,k,d) -> (H,q,k)    (head-batched)
_DN_BAT = (((2,), (1,)), ((0,), (0,)))    # (H,q,k)·(H,k,d) -> (H,q,d)  /  (H,q,d)·(H,d,E) -> (H,q,E)


# ---------------------------- in-kernel helpers ----------------------------

def _mha(q, k, v, bias, wq_blk, wk_blk, wv_blk, wo_r, bo):
    """Multi-head attention for one batch element.

    q:(Lq,E) k,v:(Lk,E); bias:(Lq,Lk) additive (-1e20 on masked positions);
    wq/wk/wv_blk: block-diagonal (E,E); wo_r: (H,D,E) = Wo.T reshaped; bo:(1,E).
    """
    Q = lax.dot_general(q, wq_blk, _DN_XWT, preferred_element_type=jnp.float32)  # (Lq,E)
    K = lax.dot_general(k, wk_blk, _DN_XWT, preferred_element_type=jnp.float32)  # (Lk,E)
    V = lax.dot_general(v, wv_blk, _DN_XWT, preferred_element_type=jnp.float32)  # (Lk,E)

    # Split heads via lane slices, stack on a new leading axis -> (H, L, D).
    Qh = jnp.stack([Q[:, h * HEAD_DIM:(h + 1) * HEAD_DIM] for h in range(HEADS)], axis=0)
    Kh = jnp.stack([K[:, h * HEAD_DIM:(h + 1) * HEAD_DIM] for h in range(HEADS)], axis=0)
    Vh = jnp.stack([V[:, h * HEAD_DIM:(h + 1) * HEAD_DIM] for h in range(HEADS)], axis=0)

    # All-head scores in one head-batched matmul: (H, Lq, Lk).
    s = lax.dot_general(Qh, Kh, _DN_QKT, preferred_element_type=jnp.float32)
    # masked_fill(-1e20) folded into an additive bias, THEN /sqrt(E)  (PyTorch order).
    s = (s + bias[None, :, :]) * SCALE

    m = jnp.max(s, axis=-1, keepdims=True)
    e = jnp.exp(s - m)
    p = e * pl.reciprocal(jnp.sum(e, axis=-1, keepdims=True), approx=True)

    # (H, Lq, D), then fc_out as a head-batched matmul + sum over heads
    # (== concat(heads) @ Wo.T), finishing with the bias.
    o = lax.dot_general(p, Vh, _DN_BAT, preferred_element_type=jnp.float32)
    ob = lax.dot_general(o, wo_r, _DN_BAT, preferred_element_type=jnp.float32)   # (H, Lq, E)
    return jnp.sum(ob, axis=0) + bo


def _add_ln(a, b, g, beta):
    """LayerNorm(a + b) over the last (embed) axis, float32."""
    x = a + b
    mu = jnp.sum(x, axis=-1, keepdims=True) * (1.0 / EMBED)
    xc = x - mu
    var = jnp.sum(xc * xc, axis=-1, keepdims=True) * (1.0 / EMBED)
    return xc * lax.rsqrt(var + LN_EPS) * g + beta


# ---------------------------- fused Pallas kernel ----------------------------

def _decoder_block_kernel(x_ref, val_ref, key_ref, tbias_ref, sbias_ref,
                          sa_wq, sa_wk, sa_wv, sa_wo_r, sa_bo,
                          n_g, n_b,
                          ca_wq, ca_wk, ca_wv, ca_wo_r, ca_bo,
                          n1_g, n1_b,
                          ff_w1, ff_b1, ff_w2, ff_b2,
                          n2_g, n2_b,
                          out_ref):
    x = x_ref[0].astype(jnp.float32)      # (L, E)
    val = val_ref[0].astype(jnp.float32)  # (Lk, E)
    key = key_ref[0].astype(jnp.float32)  # (Lk, E)

    # 1) masked self-attention + Add&LayerNorm
    att = _mha(x, x, x, tbias_ref[0],
               sa_wq[...], sa_wk[...], sa_wv[...], sa_wo_r[...], sa_bo[...])
    query = _add_ln(att, x, n_g[...], n_b[...])

    # 2) cross-attention (q=query, k=key, v=value) + Add&LayerNorm
    att2 = _mha(query, key, val, sbias_ref[0],
                ca_wq[...], ca_wk[...], ca_wv[...], ca_wo_r[...], ca_bo[...])
    x2 = _add_ln(att2, query, n1_g[...], n1_b[...])

    # 3) FFN (Linear -> ReLU -> Linear) + Add&LayerNorm
    h = lax.dot_general(x2, ff_w1[...], _DN_XWT, preferred_element_type=jnp.float32) + ff_b1[...]
    h = jnp.maximum(h, 0.0)
    y = lax.dot_general(h, ff_w2[...], _DN_XWT, preferred_element_type=jnp.float32) + ff_b2[...]

    out_ref[0] = _add_ln(y, x2, n2_g[...], n2_b[...]).astype(out_ref.dtype)


# ---------------------------- wrapper ----------------------------

def decoder_block(x, value, key_, src_mask, target_mask, params):
    B, L, E = x.shape
    Lk = key_.shape[1]

    def blk(w):   # per-head (D,D) weight -> block-diagonal (E,E): one MXU matmul per projection
        return jnp.kron(jnp.eye(HEADS, dtype=w.dtype), w)

    def wo_reshape(wo):   # (E,E) -> (H, D, E), so fc_out is a head-batched matmul
        return wo.T.reshape(HEADS, HEAD_DIM, EMBED)

    # masked_fill(mask == 0, -1e20) as precomputed additive biases (host-side, once).
    tbias = jnp.where(target_mask == 0, jnp.float32(-1e20), jnp.float32(0.0))
    sbias = jnp.where(src_mask == 0, jnp.float32(-1e20), jnp.float32(0.0))

    sa, ca, ff = params['self_attn'], params['tb_attn'], params['ff']
    n, n1, n2 = params['norm'], params['tb_norm1'], params['tb_norm2']

    def seq_spec(l, e):
        return pl.BlockSpec((1, l, e), lambda b: (b, 0, 0))

    def full_spec(shape):
        if len(shape) == 3:
            return pl.BlockSpec(shape, lambda b: (0, 0, 0))
        return pl.BlockSpec(shape, lambda b: (0, 0))

    in_specs = [
        seq_spec(L, E),                 # x
        seq_spec(Lk, E),                # value
        seq_spec(Lk, E),                # key
        seq_spec(L, L),                 # target-mask additive bias
        seq_spec(L, Lk),                # src-mask additive bias
        full_spec((E, E)), full_spec((E, E)), full_spec((E, E)),            # self-attn Wq/Wk/Wv (block-diag)
        full_spec((HEADS, HEAD_DIM, E)), full_spec((1, E)),                 # self-attn Wo (reshaped), bo
        full_spec((1, E)), full_spec((1, E)),                               # norm g, b
        full_spec((E, E)), full_spec((E, E)), full_spec((E, E)),            # cross-attn Wq/Wk/Wv (block-diag)
        full_spec((HEADS, HEAD_DIM, E)), full_spec((1, E)),                 # cross-attn Wo (reshaped), bo
        full_spec((1, E)), full_spec((1, E)),                               # tb_norm1 g, b
        full_spec((HIDDEN, E)), full_spec((1, HIDDEN)),                     # ffn W1, b1
        full_spec((E, HIDDEN)), full_spec((1, E)),                          # ffn W2, b2
        full_spec((1, E)), full_spec((1, E)),                               # tb_norm2 g, b
    ]

    return pl.pallas_call(
        _decoder_block_kernel,
        out_shape=jax.ShapeDtypeStruct((B, L, E), x.dtype),
        grid=(B,),
        in_specs=in_specs,
        out_specs=pl.BlockSpec((1, L, E), lambda b: (b, 0, 0)),
        compiler_params=pltpu.CompilerParams(dimension_semantics=("parallel",)),
    )(x, value, key_, tbias, sbias,
      blk(sa['wq']), blk(sa['wk']), blk(sa['wv']), wo_reshape(sa['wo']), sa['bo'],
      n['g'], n['b'],
      blk(ca['wq']), blk(ca['wk']), blk(ca['wv']), wo_reshape(ca['wo']), ca['bo'],
      n1['g'], n1['b'],
      ff['w1'], ff['b1'], ff['w2'], ff['b2'],
      n2['g'], n2['b'])


# ---------------------------- pure-JAX reference ----------------------------

def _ref_attention(values, keys, query, mask, p):
    B, Lq, E = query.shape
    H, D = HEADS, HEAD_DIM
    vv = values.reshape(B, -1, H, D) @ p['wv'].T
    kk = keys.reshape(B, -1, H, D) @ p['wk'].T
    qq = query.reshape(B, Lq, H, D) @ p['wq'].T
    qk = jnp.einsum('bqhd,bkhd->bhqk', qq, kk)
    qk = jnp.where(mask[:, None, :, :] == 0, -1e20, qk)
    att = jax.nn.softmax(qk / (E ** 0.5), axis=3)
    out = jnp.einsum('bhqk,bkhd->bqhd', att, vv).reshape(B, Lq, E)
    return out @ p['wo'].T + p['bo']


def _ref_add_ln(a, b, p):
    x = a + b
    mu = x.mean(-1, keepdims=True)
    var = ((x - mu) ** 2).mean(-1, keepdims=True)
    return (x - mu) / jnp.sqrt(var + LN_EPS) * p['g'] + p['b']


def _ref_ff(x, p):
    h = jnp.maximum(x @ p['w1'].T + p['b1'], 0.0)
    return h @ p['w2'].T + p['b2']


def _ref_decoder_block(x, value, key_, src_mask, target_mask, params):
    att = _ref_attention(x, x, x, target_mask, params['self_attn'])
    query = _ref_add_ln(att, x, params['norm'])
    att2 = _ref_attention(value, key_, query, src_mask, params['tb_attn'])
    x2 = _ref_add_ln(att2, query, params['tb_norm1'])
    ff = _ref_ff(x2, params['ff'])
    return _ref_add_ln(ff, x2, params['tb_norm2'])


# ---------------------------- main ----------------------------

if __name__ == "__main__":
    key = jax.random.PRNGKey(0)
    ks = jax.random.split(key, 24)

    def nrm(k, shape, s=0.05):
        return jax.random.normal(k, shape, jnp.float32) * s

    params = {
        'self_attn': dict(wq=nrm(ks[0], (HEAD_DIM, HEAD_DIM)),
                          wk=nrm(ks[1], (HEAD_DIM, HEAD_DIM)),
                          wv=nrm(ks[2], (HEAD_DIM, HEAD_DIM)),
                          wo=nrm(ks[3], (EMBED, EMBED)),
                          bo=nrm(ks[4], (1, EMBED))),
        'norm': dict(g=1.0 + nrm(ks[5], (1, EMBED)), b=nrm(ks[6], (1, EMBED))),
        'tb_attn': dict(wq=nrm(ks[7], (HEAD_DIM, HEAD_DIM)),
                        wk=nrm(ks[8], (HEAD_DIM, HEAD_DIM)),
                        wv=nrm(ks[9], (HEAD_DIM, HEAD_DIM)),
                        wo=nrm(ks[10], (EMBED, EMBED)),
                        bo=nrm(ks[11], (1, EMBED))),
        'tb_norm1': dict(g=1.0 + nrm(ks[12], (1, EMBED)), b=nrm(ks[13], (1, EMBED))),
        'tb_norm2': dict(g=1.0 + nrm(ks[14], (1, EMBED)), b=nrm(ks[15], (1, EMBED))),
        'ff': dict(w1=nrm(ks[16], (HIDDEN, EMBED)), b1=nrm(ks[17], (1, HIDDEN)),
                   w2=nrm(ks[18], (EMBED, HIDDEN)), b2=nrm(ks[19], (1, EMBED))),
    }

    x = jax.random.normal(ks[20], (BATCH, SEQ, EMBED), jnp.float32)
    value = jax.random.normal(ks[21], (BATCH, SEQ, EMBED), jnp.float32)
    key_ = jax.random.normal(ks[22], (BATCH, SEQ, EMBED), jnp.float32)
    target_mask = jnp.broadcast_to(jnp.tril(jnp.ones((SEQ, SEQ), jnp.float32)),
                                   (BATCH, SEQ, SEQ))
    src_mask = jnp.ones((BATCH, SEQ, SEQ), jnp.float32)

    out = decoder_block(x, value, key_, src_mask, target_mask, params)
    out = jax.block_until_ready(out)

    ref = _ref_decoder_block(x, value, key_, src_mask, target_mask, params)
    max_err = float(jnp.max(jnp.abs(out - ref)))
    # Tolerance accounts for the EUP approximate reciprocal in the softmax denominator.
    assert jnp.allclose(out, ref, atol=1e-3, rtol=1e-3), f"max abs err = {max_err}"
    print("KERNEL_OK")
</pallas_src>

<mosaic_0001>
module attributes {stable_mosaic.version = 11 : i64} {
  func.func @_decoder_block_kernel(%arg0: i32, %arg1: memref<1x8x32xf32, #tpu.memory_space<vmem>>, %arg2: memref<1x8x32xf32, #tpu.memory_space<vmem>>, %arg3: memref<1x8x32xf32, #tpu.memory_space<vmem>>, %arg4: memref<1x8x8xf32, #tpu.memory_space<vmem>>, %arg5: memref<1x8x8xf32, #tpu.memory_space<vmem>>, %arg6: memref<32x32xf32, #tpu.memory_space<vmem>>, %arg7: memref<32x32xf32, #tpu.memory_space<vmem>>, %arg8: memref<32x32xf32, #tpu.memory_space<vmem>>, %arg9: memref<4x8x32xf32, #tpu.memory_space<vmem>>, %arg10: memref<1x32xf32, #tpu.memory_space<vmem>>, %arg11: memref<1x32xf32, #tpu.memory_space<vmem>>, %arg12: memref<1x32xf32, #tpu.memory_space<vmem>>, %arg13: memref<32x32xf32, #tpu.memory_space<vmem>>, %arg14: memref<32x32xf32, #tpu.memory_space<vmem>>, %arg15: memref<32x32xf32, #tpu.memory_space<vmem>>, %arg16: memref<4x8x32xf32, #tpu.memory_space<vmem>>, %arg17: memref<1x32xf32, #tpu.memory_space<vmem>>, %arg18: memref<1x32xf32, #tpu.memory_space<vmem>>, %arg19: memref<1x32xf32, #tpu.memory_space<vmem>>, %arg20: memref<128x32xf32, #tpu.memory_space<vmem>>, %arg21: memref<1x128xf32, #tpu.memory_space<vmem>>, %arg22: memref<32x128xf32, #tpu.memory_space<vmem>>, %arg23: memref<1x32xf32, #tpu.memory_space<vmem>>, %arg24: memref<1x32xf32, #tpu.memory_space<vmem>>, %arg25: memref<1x32xf32, #tpu.memory_space<vmem>>, %arg26: memref<1x8x32xf32, #tpu.memory_space<vmem>>) attributes {dimension_semantics = [#tpu.dimension_semantics<parallel>], iteration_bounds = array<i64: 2>, scalar_prefetch = 0 : i64, scratch_operands = 0 : i64, tpu.core_type = #tpu.core_type<tc>, window_params = [{transform_indices = @transform_0, window_bounds = array<i64: 1, 8, 32>}, {transform_indices = @transform_1, window_bounds = array<i64: 1, 8, 32>}, {transform_indices = @transform_2, window_bounds = array<i64: 1, 8, 32>}, {transform_indices = @transform_3, window_bounds = array<i64: 1, 8, 8>}, {transform_indices = @transform_4, window_bounds = array<i64: 1, 8, 8>}, {pipeline_mode = #tpu.pipeline_mode<synchronous>, transform_indices = @transform_5, window_bounds = array<i64: 32, 32>}, {pipeline_mode = #tpu.pipeline_mode<synchronous>, transform_indices = @transform_6, window_bounds = array<i64: 32, 32>}, {pipeline_mode = #tpu.pipeline_mode<synchronous>, transform_indices = @transform_7, window_bounds = array<i64: 32, 32>}, {pipeline_mode = #tpu.pipeline_mode<synchronous>, transform_indices = @transform_8, window_bounds = array<i64: 4, 8, 32>}, {pipeline_mode = #tpu.pipeline_mode<synchronous>, transform_indices = @transform_9, window_bounds = array<i64: 1, 32>}, {pipeline_mode = #tpu.pipeline_mode<synchronous>, transform_indices = @transform_10, window_bounds = array<i64: 1, 32>}, {pipeline_mode = #tpu.pipeline_mode<synchronous>, transform_indices = @transform_11, window_bounds = array<i64: 1, 32>}, {pipeline_mode = #tpu.pipeline_mode<synchronous>, transform_indices = @transform_12, window_bounds = array<i64: 32, 32>}, {pipeline_mode = #tpu.pipeline_mode<synchronous>, transform_indices = @transform_13, window_bounds = array<i64: 32, 32>}, {pipeline_mode = #tpu.pipeline_mode<synchronous>, transform_indices = @transform_14, window_bounds = array<i64: 32, 32>}, {pipeline_mode = #tpu.pipeline_mode<synchronous>, transform_indices = @transform_15, window_bounds = array<i64: 4, 8, 32>}, {pipeline_mode = #tpu.pipeline_mode<synchronous>, transform_indices = @transform_16, window_bounds = array<i64: 1, 32>}, {pipeline_mode = #tpu.pipeline_mode<synchronous>, transform_indices = @transform_17, window_bounds = array<i64: 1, 32>}, {pipeline_mode = #tpu.pipeline_mode<synchronous>, transform_indices = @transform_18, window_bounds = array<i64: 1, 32>}, {pipeline_mode = #tpu.pipeline_mode<synchronous>, transform_indices = @transform_19, window_bounds = array<i64: 128, 32>}, {pipeline_mode = #tpu.pipeline_mode<synchronous>, transform_indices = @transform_20, window_bounds = array<i64: 1, 128>}, {pipeline_mode = #tpu.pipeline_mode<synchronous>, transform_indices = @transform_21, window_bounds = array<i64: 32, 128>}, {pipeline_mode = #tpu.pipeline_mode<synchronous>, transform_indices = @transform_22, window_bounds = array<i64: 1, 32>}, {pipeline_mode = #tpu.pipeline_mode<synchronous>, transform_indices = @transform_23, window_bounds = array<i64: 1, 32>}, {pipeline_mode = #tpu.pipeline_mode<synchronous>, transform_indices = @transform_24, window_bounds = array<i64: 1, 32>}, {transform_indices = @transform_25, window_bounds = array<i64: 1, 8, 32>}]} {
    %c0 = arith.constant 0 : index
    %c0_0 = arith.constant 0 : index
    %c0_1 = arith.constant 0 : index
    %0 = vector.load %arg1[%c0, %c0_0, %c0_1] : memref<1x8x32xf32, #tpu.memory_space<vmem>>, vector<1x8x32xf32>
    %1 = vector.shape_cast %0 : vector<1x8x32xf32> to vector<8x32xf32>
    %c0_2 = arith.constant 0 : index
    %c0_3 = arith.constant 0 : index
    %c0_4 = arith.constant 0 : index
    %2 = vector.load %arg2[%c0_2, %c0_3, %c0_4] : memref<1x8x32xf32, #tpu.memory_space<vmem>>, vector<1x8x32xf32>
    %3 = vector.shape_cast %2 : vector<1x8x32xf32> to vector<8x32xf32>
    %c0_5 = arith.constant 0 : index
    %c0_6 = arith.constant 0 : index
    %c0_7 = arith.constant 0 : index
    %4 = vector.load %arg3[%c0_5, %c0_6, %c0_7] : memref<1x8x32xf32, #tpu.memory_space<vmem>>, vector<1x8x32xf32>
    %5 = vector.shape_cast %4 : vector<1x8x32xf32> to vector<8x32xf32>
    %c0_8 = arith.constant 0 : index
    %c0_9 = arith.constant 0 : index
    %c0_10 = arith.constant 0 : index
    %6 = vector.load %arg4[%c0_8, %c0_9, %c0_10] : memref<1x8x8xf32, #tpu.memory_space<vmem>>, vector<1x8x8xf32>
    %7 = vector.shape_cast %6 : vector<1x8x8xf32> to vector<8x8xf32>
    %c0_11 = arith.constant 0 : index
    %c0_12 = arith.constant 0 : index
    %8 = vector.load %arg6[%c0_11, %c0_12] : memref<32x32xf32, #tpu.memory_space<vmem>>, vector<32x32xf32>
    %c0_13 = arith.constant 0 : index
    %c0_14 = arith.constant 0 : index
    %9 = vector.load %arg7[%c0_13, %c0_14] : memref<32x32xf32, #tpu.memory_space<vmem>>, vector<32x32xf32>
    %c0_15 = arith.constant 0 : index
    %c0_16 = arith.constant 0 : index
    %10 = vector.load %arg8[%c0_15, %c0_16] : memref<32x32xf32, #tpu.memory_space<vmem>>, vector<32x32xf32>
    %c0_17 = arith.constant 0 : index
    %c0_18 = arith.constant 0 : index
    %c0_19 = arith.constant 0 : index
    %11 = vector.load %arg9[%c0_17, %c0_18, %c0_19] : memref<4x8x32xf32, #tpu.memory_space<vmem>>, vector<4x8x32xf32>
    %c0_20 = arith.constant 0 : index
    %c0_21 = arith.constant 0 : index
    %12 = vector.load %arg10[%c0_20, %c0_21] : memref<1x32xf32, #tpu.memory_space<vmem>>, vector<1x32xf32>
    %cst = arith.constant dense<0.000000e+00> : vector<8x32xf32>
    %13 = tpu.matmul %1, %8, %cst {dimension_numbers = #tpu.dot_dimension_numbers<[1], [1], [0], [0], [0, 0, 1, 0], [], []>} : vector<8x32xf32>, vector<32x32xf32>, vector<8x32xf32> -> vector<8x32xf32>
    %cst_22 = arith.constant dense<0.000000e+00> : vector<8x32xf32>
    %14 = tpu.matmul %1, %9, %cst_22 {dimension_numbers = #tpu.dot_dimension_numbers<[1], [1], [0], [0], [0, 0, 1, 0], [], []>} : vector<8x32xf32>, vector<32x32xf32>, vector<8x32xf32> -> vector<8x32xf32>
    %cst_23 = arith.constant dense<0.000000e+00> : vector<8x32xf32>
    %15 = tpu.matmul %1, %10, %cst_23 {dimension_numbers = #tpu.dot_dimension_numbers<[1], [1], [0], [0], [0, 0, 1, 0], [], []>} : vector<8x32xf32>, vector<32x32xf32>, vector<8x32xf32> -> vector<8x32xf32>
    %16 = vector.extract_strided_slice %13 {offsets = [0, 0], sizes = [8, 8], strides = [1, 1]} : vector<8x32xf32> to vector<8x8xf32>
    %17 = vector.extract_strided_slice %13 {offsets = [0, 8], sizes = [8, 8], strides = [1, 1]} : vector<8x32xf32> to vector<8x8xf32>
    %18 = vector.extract_strided_slice %13 {offsets = [0, 16], sizes = [8, 8], strides = [1, 1]} : vector<8x32xf32> to vector<8x8xf32>
    %19 = vector.extract_strided_slice %13 {offsets = [0, 24], sizes = [8, 8], strides = [1, 1]} : vector<8x32xf32> to vector<8x8xf32>
    %20 = vector.shape_cast %16 : vector<8x8xf32> to vector<1x8x8xf32>
    %21 = vector.shape_cast %17 : vector<8x8xf32> to vector<1x8x8xf32>
    %22 = vector.shape_cast %18 : vector<8x8xf32> to vector<1x8x8xf32>
    %23 = vector.shape_cast %19 : vector<8x8xf32> to vector<1x8x8xf32>
    %24 = tpu.concatenate %20, %21, %22, %23 in 0 : vector<1x8x8xf32>, vector<1x8x8xf32>, vector<1x8x8xf32>, vector<1x8x8xf32> -> vector<4x8x8xf32>
    %25 = vector.extract_strided_slice %14 {offsets = [0, 0], sizes = [8, 8], strides = [1, 1]} : vector<8x32xf32> to vector<8x8xf32>
    %26 = vector.extract_strided_slice %14 {offsets = [0, 8], sizes = [8, 8], strides = [1, 1]} : vector<8x32xf32> to vector<8x8xf32>
    %27 = vector.extract_strided_slice %14 {offsets = [0, 16], sizes = [8, 8], strides = [1, 1]} : vector<8x32xf32> to vector<8x8xf32>
    %28 = vector.extract_strided_slice %14 {offsets = [0, 24], sizes = [8, 8], strides = [1, 1]} : vector<8x32xf32> to vector<8x8xf32>
    %29 = vector.shape_cast %25 : vector<8x8xf32> to vector<1x8x8xf32>
    %30 = vector.shape_cast %26 : vector<8x8xf32> to vector<1x8x8xf32>
    %31 = vector.shape_cast %27 : vector<8x8xf32> to vector<1x8x8xf32>
    %32 = vector.shape_cast %28 : vector<8x8xf32> to vector<1x8x8xf32>
    %33 = tpu.concatenate %29, %30, %31, %32 in 0 : vector<1x8x8xf32>, vector<1x8x8xf32>, vector<1x8x8xf32>, vector<1x8x8xf32> -> vector<4x8x8xf32>
    %34 = vector.extract_strided_slice %15 {offsets = [0, 0], sizes = [8, 8], strides = [1, 1]} : vector<8x32xf32> to vector<8x8xf32>
    %35 = vector.extract_strided_slice %15 {offsets = [0, 8], sizes = [8, 8], strides = [1, 1]} : vector<8x32xf32> to vector<8x8xf32>
    %36 = vector.extract_strided_slice %15 {offsets = [0, 16], sizes = [8, 8], strides = [1, 1]} : vector<8x32xf32> to vector<8x8xf32>
    %37 = vector.extract_strided_slice %15 {offsets = [0, 24], sizes = [8, 8], strides = [1, 1]} : vector<8x32xf32> to vector<8x8xf32>
    %38 = vector.shape_cast %34 : vector<8x8xf32> to vector<1x8x8xf32>
    %39 = vector.shape_cast %35 : vector<8x8xf32> to vector<1x8x8xf32>
    %40 = vector.shape_cast %36 : vector<8x8xf32> to vector<1x8x8xf32>
    %41 = vector.shape_cast %37 : vector<8x8xf32> to vector<1x8x8xf32>
    %42 = tpu.concatenate %38, %39, %40, %41 in 0 : vector<1x8x8xf32>, vector<1x8x8xf32>, vector<1x8x8xf32>, vector<1x8x8xf32> -> vector<4x8x8xf32>
    %cst_24 = arith.constant dense<0.000000e+00> : vector<4x8x8xf32>
    %43 = tpu.matmul %24, %33, %cst_24 {dimension_numbers = #tpu.dot_dimension_numbers<[2], [2], [1], [1], [0, 0, 0, 1, 1, 1], [0], [0]>} : vector<4x8x8xf32>, vector<4x8x8xf32>, vector<4x8x8xf32> -> vector<4x8x8xf32>
    %44 = vector.shape_cast %7 : vector<8x8xf32> to vector<1x8x8xf32>
    %45 = vector.broadcast %44 : vector<1x8x8xf32> to vector<4x8x8xf32>
    %46 = arith.addf %43, %45 : vector<4x8x8xf32>
    %cst_25 = arith.constant 0.176776692 : f32
    %47 = vector.broadcast %cst_25 : f32 to vector<4x8x8xf32>
    %48 = arith.mulf %46, %47 : vector<4x8x8xf32>
    %cst_26 = arith.constant dense<0xFF800000> : vector<4x8xf32>
    %49 = vector.multi_reduction <maximumf>, %48, %cst_26 [2] : vector<4x8x8xf32> to vector<4x8xf32>
    %50 = vector.shape_cast %49 : vector<4x8xf32> to vector<4x8x1xf32>
    %51 = vector.broadcast %50 : vector<4x8x1xf32> to vector<4x8x8xf32>
    %52 = arith.subf %48, %51 : vector<4x8x8xf32>
    %53 = math.exp %52 : vector<4x8x8xf32>
    %cst_27 = arith.constant dense<0.000000e+00> : vector<4x8xf32>
    %54 = vector.multi_reduction <add>, %53, %cst_27 [2] : vector<4x8x8xf32> to vector<4x8xf32>
    %55 = vector.shape_cast %54 : vector<4x8xf32> to vector<4x8x1xf32>
    %56 = tpu.reciprocal %55 {approx = true} : vector<4x8x1xf32> -> vector<4x8x1xf32>
    %57 = vector.broadcast %56 : vector<4x8x1xf32> to vector<4x8x8xf32>
    %58 = arith.mulf %53, %57 : vector<4x8x8xf32>
    %cst_28 = arith.constant dense<0.000000e+00> : vector<4x8x8xf32>
    %59 = tpu.matmul %58, %42, %cst_28 {dimension_numbers = #tpu.dot_dimension_numbers<[2], [1], [1], [2], [0, 0, 0, 1, 1, 2], [0], [0]>} : vector<4x8x8xf32>, vector<4x8x8xf32>, vector<4x8x8xf32> -> vector<4x8x8xf32>
    %cst_29 = arith.constant dense<0.000000e+00> : vector<4x8x32xf32>
    %60 = tpu.matmul %59, %11, %cst_29 {dimension_numbers = #tpu.dot_dimension_numbers<[2], [1], [1], [2], [0, 0, 0, 1, 1, 2], [0], [0]>} : vector<4x8x8xf32>, vector<4x8x32xf32>, vector<4x8x32xf32> -> vector<4x8x32xf32>
    %cst_30 = arith.constant dense<0.000000e+00> : vector<8x32xf32>
    %61 = vector.multi_reduction <add>, %60, %cst_30 [0] : vector<4x8x32xf32> to vector<8x32xf32>
    %62 = vector.broadcast %12 : vector<1x32xf32> to vector<8x32xf32>
    %63 = arith.addf %61, %62 : vector<8x32xf32>
    %c0_31 = arith.constant 0 : index
    %c0_32 = arith.constant 0 : index
    %64 = vector.load %arg11[%c0_31, %c0_32] : memref<1x32xf32, #tpu.memory_space<vmem>>, vector<1x32xf32>
    %c0_33 = arith.constant 0 : index
    %c0_34 = arith.constant 0 : index
    %65 = vector.load %arg12[%c0_33, %c0_34] : memref<1x32xf32, #tpu.memory_space<vmem>>, vector<1x32xf32>
    %66 = arith.addf %63, %1 : vector<8x32xf32>
    %cst_35 = arith.constant dense<0.000000e+00> : vector<8xf32>
    %67 = vector.multi_reduction <add>, %66, %cst_35 [1] : vector<8x32xf32> to vector<8xf32>
    %68 = vector.shape_cast %67 : vector<8xf32> to vector<8x1xf32>
    %cst_36 = arith.constant 3.125000e-02 : f32
    %69 = vector.broadcast %cst_36 : f32 to vector<8x1xf32>
    %70 = arith.mulf %68, %69 : vector<8x1xf32>
    %71 = vector.broadcast %70 : vector<8x1xf32> to vector<8x32xf32>
    %72 = arith.subf %66, %71 : vector<8x32xf32>
    %73 = arith.mulf %72, %72 : vector<8x32xf32>
    %cst_37 = arith.constant dense<0.000000e+00> : vector<8xf32>
    %74 = vector.multi_reduction <add>, %73, %cst_37 [1] : vector<8x32xf32> to vector<8xf32>
    %75 = vector.shape_cast %74 : vector<8xf32> to vector<8x1xf32>
    %cst_38 = arith.constant 3.125000e-02 : f32
    %76 = vector.broadcast %cst_38 : f32 to vector<8x1xf32>
    %77 = arith.mulf %75, %76 : vector<8x1xf32>
    %cst_39 = arith.constant 9.99999974E-6 : f32
    %78 = vector.broadcast %cst_39 : f32 to vector<8x1xf32>
    %79 = arith.addf %77, %78 : vector<8x1xf32>
    %80 = math.rsqrt %79 : vector<8x1xf32>
    %81 = vector.broadcast %80 : vector<8x1xf32> to vector<8x32xf32>
    %82 = arith.mulf %72, %81 : vector<8x32xf32>
    %83 = vector.broadcast %64 : vector<1x32xf32> to vector<8x32xf32>
    %84 = arith.mulf %82, %83 : vector<8x32xf32>
    %85 = vector.broadcast %65 : vector<1x32xf32> to vector<8x32xf32>
    %86 = arith.addf %84, %85 : vector<8x32xf32>
    %c0_40 = arith.constant 0 : index
    %c0_41 = arith.constant 0 : index
    %c0_42 = arith.constant 0 : index
    %87 = vector.load %arg5[%c0_40, %c0_41, %c0_42] : memref<1x8x8xf32, #tpu.memory_space<vmem>>, vector<1x8x8xf32>
    %88 = vector.shape_cast %87 : vector<1x8x8xf32> to vector<8x8xf32>
    %c0_43 = arith.constant 0 : index
    %c0_44 = arith.constant 0 : index
    %89 = vector.load %arg13[%c0_43, %c0_44] : memref<32x32xf32, #tpu.memory_space<vmem>>, vector<32x32xf32>
    %c0_45 = arith.constant 0 : index
    %c0_46 = arith.constant 0 : index
    %90 = vector.load %arg14[%c0_45, %c0_46] : memref<32x32xf32, #tpu.memory_space<vmem>>, vector<32x32xf32>
    %c0_47 = arith.constant 0 : index
    %c0_48 = arith.constant 0 : index
    %91 = vector.load %arg15[%c0_47, %c0_48] : memref<32x32xf32, #tpu.memory_space<vmem>>, vector<32x32xf32>
    %c0_49 = arith.constant 0 : index
    %c0_50 = arith.constant 0 : index
    %c0_51 = arith.constant 0 : index
    %92 = vector.load %arg16[%c0_49, %c0_50, %c0_51] : memref<4x8x32xf32, #tpu.memory_space<vmem>>, vector<4x8x32xf32>
    %c0_52 = arith.constant 0 : index
    %c0_53 = arith.constant 0 : index
    %93 = vector.load %arg17[%c0_52, %c0_53] : memref<1x32xf32, #tpu.memory_space<vmem>>, vector<1x32xf32>
    %cst_54 = arith.constant dense<0.000000e+00> : vector<8x32xf32>
    %94 = tpu.matmul %86, %89, %cst_54 {dimension_numbers = #tpu.dot_dimension_numbers<[1], [1], [0], [0], [0, 0, 1, 0], [], []>} : vector<8x32xf32>, vector<32x32xf32>, vector<8x32xf32> -> vector<8x32xf32>
    %cst_55 = arith.constant dense<0.000000e+00> : vector<8x32xf32>
    %95 = tpu.matmul %5, %90, %cst_55 {dimension_numbers = #tpu.dot_dimension_numbers<[1], [1], [0], [0], [0, 0, 1, 0], [], []>} : vector<8x32xf32>, vector<32x32xf32>, vector<8x32xf32> -> vector<8x32xf32>
    %cst_56 = arith.constant dense<0.000000e+00> : vector<8x32xf32>
    %96 = tpu.matmul %3, %91, %cst_56 {dimension_numbers = #tpu.dot_dimension_numbers<[1], [1], [0], [0], [0, 0, 1, 0], [], []>} : vector<8x32xf32>, vector<32x32xf32>, vector<8x32xf32> -> vector<8x32xf32>
    %97 = vector.extract_strided_slice %94 {offsets = [0, 0], sizes = [8, 8], strides = [1, 1]} : vector<8x32xf32> to vector<8x8xf32>
    %98 = vector.extract_strided_slice %94 {offsets = [0, 8], sizes = [8, 8], strides = [1, 1]} : vector<8x32xf32> to vector<8x8xf32>
    %99 = vector.extract_strided_slice %94 {offsets = [0, 16], sizes = [8, 8], strides = [1, 1]} : vector<8x32xf32> to vector<8x8xf32>
    %100 = vector.extract_strided_slice %94 {offsets = [0, 24], sizes = [8, 8], strides = [1, 1]} : vector<8x32xf32> to vector<8x8xf32>
    %101 = vector.shape_cast %97 : vector<8x8xf32> to vector<1x8x8xf32>
    %102 = vector.shape_cast %98 : vector<8x8xf32> to vector<1x8x8xf32>
    %103 = vector.shape_cast %99 : vector<8x8xf32> to vector<1x8x8xf32>
    %104 = vector.shape_cast %100 : vector<8x8xf32> to vector<1x8x8xf32>
    %105 = tpu.concatenate %101, %102, %103, %104 in 0 : vector<1x8x8xf32>, vector<1x8x8xf32>, vector<1x8x8xf32>, vector<1x8x8xf32> -> vector<4x8x8xf32>
    %106 = vector.extract_strided_slice %95 {offsets = [0, 0], sizes = [8, 8], strides = [1, 1]} : vector<8x32xf32> to vector<8x8xf32>
    %107 = vector.extract_strided_slice %95 {offsets = [0, 8], sizes = [8, 8], strides = [1, 1]} : vector<8x32xf32> to vector<8x8xf32>
    %108 = vector.extract_strided_slice %95 {offsets = [0, 16], sizes = [8, 8], strides = [1, 1]} : vector<8x32xf32> to vector<8x8xf32>
    %109 = vector.extract_strided_slice %95 {offsets = [0, 24], sizes = [8, 8], strides = [1, 1]} : vector<8x32xf32> to vector<8x8xf32>
    %110 = vector.shape_cast %106 : vector<8x8xf32> to vector<1x8x8xf32>
    %111 = vector.shape_cast %107 : vector<8x8xf32> to vector<1x8x8xf32>
    %112 = vector.shape_cast %108 : vector<8x8xf32> to vector<1x8x8xf32>
    %113 = vector.shape_cast %109 : vector<8x8xf32> to vector<1x8x8xf32>
    %114 = tpu.concatenate %110, %111, %112, %113 in 0 : vector<1x8x8xf32>, vector<1x8x8xf32>, vector<1x8x8xf32>, vector<1x8x8xf32> -> vector<4x8x8xf32>
    %115 = vector.extract_strided_slice %96 {offsets = [0, 0], sizes = [8, 8], strides = [1, 1]} : vector<8x32xf32> to vector<8x8xf32>
    %116 = vector.extract_strided_slice %96 {offsets = [0, 8], sizes = [8, 8], strides = [1, 1]} : vector<8x32xf32> to vector<8x8xf32>
    %117 = vector.extract_strided_slice %96 {offsets = [0, 16], sizes = [8, 8], strides = [1, 1]} : vector<8x32xf32> to vector<8x8xf32>
    %118 = vector.extract_strided_slice %96 {offsets = [0, 24], sizes = [8, 8], strides = [1, 1]} : vector<8x32xf32> to vector<8x8xf32>
    %119 = vector.shape_cast %115 : vector<8x8xf32> to vector<1x8x8xf32>
    %120 = vector.shape_cast %116 : vector<8x8xf32> to vector<1x8x8xf32>
    %121 = vector.shape_cast %117 : vector<8x8xf32> to vector<1x8x8xf32>
    %122 = vector.shape_cast %118 : vector<8x8xf32> to vector<1x8x8xf32>
    %123 = tpu.concatenate %119, %120, %121, %122 in 0 : vector<1x8x8xf32>, vector<1x8x8xf32>, vector<1x8x8xf32>, vector<1x8x8xf32> -> vector<4x8x8xf32>
    %cst_57 = arith.constant dense<0.000000e+00> : vector<4x8x8xf32>
    %124 = tpu.matmul %105, %114, %cst_57 {dimension_numbers = #tpu.dot_dimension_numbers<[2], [2], [1], [1], [0, 0, 0, 1, 1, 1], [0], [0]>} : vector<4x8x8xf32>, vector<4x8x8xf32>, vector<4x8x8xf32> -> vector<4x8x8xf32>
    %125 = vector.shape_cast %88 : vector<8x8xf32> to vector<1x8x8xf32>
    %126 = vector.broadcast %125 : vector<1x8x8xf32> to vector<4x8x8xf32>
    %127 = arith.addf %124, %126 : vector<4x8x8xf32>
    %cst_58 = arith.constant 0.176776692 : f32
    %128 = vector.broadcast %cst_58 : f32 to vector<4x8x8xf32>
    %129 = arith.mulf %127, %128 : vector<4x8x8xf32>
    %cst_59 = arith.constant dense<0xFF800000> : vector<4x8xf32>
    %130 = vector.multi_reduction <maximumf>, %129, %cst_59 [2] : vector<4x8x8xf32> to vector<4x8xf32>
    %131 = vector.shape_cast %130 : vector<4x8xf32> to vector<4x8x1xf32>
    %132 = vector.broadcast %131 : vector<4x8x1xf32> to vector<4x8x8xf32>
    %133 = arith.subf %129, %132 : vector<4x8x8xf32>
    %134 = math.exp %133 : vector<4x8x8xf32>
    %cst_60 = arith.constant dense<0.000000e+00> : vector<4x8xf32>
    %135 = vector.multi_reduction <add>, %134, %cst_60 [2] : vector<4x8x8xf32> to vector<4x8xf32>
    %136 = vector.shape_cast %135 : vector<4x8xf32> to vector<4x8x1xf32>
    %137 = tpu.reciprocal %136 {approx = true} : vector<4x8x1xf32> -> vector<4x8x1xf32>
    %138 = vector.broadcast %137 : vector<4x8x1xf32> to vector<4x8x8xf32>
    %139 = arith.mulf %134, %138 : vector<4x8x8xf32>
    %cst_61 = arith.constant dense<0.000000e+00> : vector<4x8x8xf32>
    %140 = tpu.matmul %139, %123, %cst_61 {dimension_numbers = #tpu.dot_dimension_numbers<[2], [1], [1], [2], [0, 0, 0, 1, 1, 2], [0], [0]>} : vector<4x8x8xf32>, vector<4x8x8xf32>, vector<4x8x8xf32> -> vector<4x8x8xf32>
    %cst_62 = arith.constant dense<0.000000e+00> : vector<4x8x32xf32>
    %141 = tpu.matmul %140, %92, %cst_62 {dimension_numbers = #tpu.dot_dimension_numbers<[2], [1], [1], [2], [0, 0, 0, 1, 1, 2], [0], [0]>} : vector<4x8x8xf32>, vector<4x8x32xf32>, vector<4x8x32xf32> -> vector<4x8x32xf32>
    %cst_63 = arith.constant dense<0.000000e+00> : vector<8x32xf32>
    %142 = vector.multi_reduction <add>, %141, %cst_63 [0] : vector<4x8x32xf32> to vector<8x32xf32>
    %143 = vector.broadcast %93 : vector<1x32xf32> to vector<8x32xf32>
    %144 = arith.addf %142, %143 : vector<8x32xf32>
    %c0_64 = arith.constant 0 : index
    %c0_65 = arith.constant 0 : index
    %145 = vector.load %arg18[%c0_64, %c0_65] : memref<1x32xf32, #tpu.memory_space<vmem>>, vector<1x32xf32>
    %c0_66 = arith.constant 0 : index
    %c0_67 = arith.constant 0 : index
    %146 = vector.load %arg19[%c0_66, %c0_67] : memref<1x32xf32, #tpu.memory_space<vmem>>, vector<1x32xf32>
    %147 = arith.addf %144, %86 : vector<8x32xf32>
    %cst_68 = arith.constant dense<0.000000e+00> : vector<8xf32>
    %148 = vector.multi_reduction <add>, %147, %cst_68 [1] : vector<8x32xf32> to vector<8xf32>
    %149 = vector.shape_cast %148 : vector<8xf32> to vector<8x1xf32>
    %cst_69 = arith.constant 3.125000e-02 : f32
    %150 = vector.broadcast %cst_69 : f32 to vector<8x1xf32>
    %151 = arith.mulf %149, %150 : vector<8x1xf32>
    %152 = vector.broadcast %151 : vector<8x1xf32> to vector<8x32xf32>
    %153 = arith.subf %147, %152 : vector<8x32xf32>
    %154 = arith.mulf %153, %153 : vector<8x32xf32>
    %cst_70 = arith.constant dense<0.000000e+00> : vector<8xf32>
    %155 = vector.multi_reduction <add>, %154, %cst_70 [1] : vector<8x32xf32> to vector<8xf32>
    %156 = vector.shape_cast %155 : vector<8xf32> to vector<8x1xf32>
    %cst_71 = arith.constant 3.125000e-02 : f32
    %157 = vector.broadcast %cst_71 : f32 to vector<8x1xf32>
    %158 = arith.mulf %156, %157 : vector<8x1xf32>
    %cst_72 = arith.constant 9.99999974E-6 : f32
    %159 = vector.broadcast %cst_72 : f32 to vector<8x1xf32>
    %160 = arith.addf %158, %159 : vector<8x1xf32>
    %161 = math.rsqrt %160 : vector<8x1xf32>
    %162 = vector.broadcast %161 : vector<8x1xf32> to vector<8x32xf32>
    %163 = arith.mulf %153, %162 : vector<8x32xf32>
    %164 = vector.broadcast %145 : vector<1x32xf32> to vector<8x32xf32>
    %165 = arith.mulf %163, %164 : vector<8x32xf32>
    %166 = vector.broadcast %146 : vector<1x32xf32> to vector<8x32xf32>
    %167 = arith.addf %165, %166 : vector<8x32xf32>
    %c0_73 = arith.constant 0 : index
    %c0_74 = arith.constant 0 : index
    %168 = vector.load %arg20[%c0_73, %c0_74] : memref<128x32xf32, #tpu.memory_space<vmem>>, vector<128x32xf32>
    %cst_75 = arith.constant dense<0.000000e+00> : vector<8x128xf32>
    %169 = tpu.matmul %167, %168, %cst_75 {dimension_numbers = #tpu.dot_dimension_numbers<[1], [1], [0], [0], [0, 0, 1, 0], [], []>} : vector<8x32xf32>, vector<128x32xf32>, vector<8x128xf32> -> vector<8x128xf32>
    %c0_76 = arith.constant 0 : index
    %c0_77 = arith.constant 0 : index
    %170 = vector.load %arg21[%c0_76, %c0_77] : memref<1x128xf32, #tpu.memory_space<vmem>>, vector<1x128xf32>
    %171 = vector.broadcast %170 : vector<1x128xf32> to vector<8x128xf32>
    %172 = arith.addf %169, %171 : vector<8x128xf32>
    %cst_78 = arith.constant 0.000000e+00 : f32
    %173 = vector.broadcast %cst_78 : f32 to vector<8x128xf32>
    %174 = arith.maximumf %172, %173 : vector<8x128xf32>
    %c0_79 = arith.constant 0 : index
    %c0_80 = arith.constant 0 : index
    %175 = vector.load %arg22[%c0_79, %c0_80] : memref<32x128xf32, #tpu.memory_space<vmem>>, vector<32x128xf32>
    %cst_81 = arith.constant dense<0.000000e+00> : vector<8x32xf32>
    %176 = tpu.matmul %174, %175, %cst_81 {dimension_numbers = #tpu.dot_dimension_numbers<[1], [1], [0], [0], [0, 0, 1, 0], [], []>} : vector<8x128xf32>, vector<32x128xf32>, vector<8x32xf32> -> vector<8x32xf32>
    %c0_82 = arith.constant 0 : index
    %c0_83 = arith.constant 0 : index
    %177 = vector.load %arg23[%c0_82, %c0_83] : memref<1x32xf32, #tpu.memory_space<vmem>>, vector<1x32xf32>
    %178 = vector.broadcast %177 : vector<1x32xf32> to vector<8x32xf32>
    %179 = arith.addf %176, %178 : vector<8x32xf32>
    %c0_84 = arith.constant 0 : index
    %c0_85 = arith.constant 0 : index
    %180 = vector.load %arg24[%c0_84, %c0_85] : memref<1x32xf32, #tpu.memory_space<vmem>>, vector<1x32xf32>
    %c0_86 = arith.constant 0 : index
    %c0_87 = arith.constant 0 : index
    %181 = vector.load %arg25[%c0_86, %c0_87] : memref<1x32xf32, #tpu.memory_space<vmem>>, vector<1x32xf32>
    %182 = arith.addf %179, %167 : vector<8x32xf32>
    %cst_88 = arith.constant dense<0.000000e+00> : vector<8xf32>
    %183 = vector.multi_reduction <add>, %182, %cst_88 [1] : vector<8x32xf32> to vector<8xf32>
    %184 = vector.shape_cast %183 : vector<8xf32> to vector<8x1xf32>
    %cst_89 = arith.constant 3.125000e-02 : f32
    %185 = vector.broadcast %cst_89 : f32 to vector<8x1xf32>
    %186 = arith.mulf %184, %185 : vector<8x1xf32>
    %187 = vector.broadcast %186 : vector<8x1xf32> to vector<8x32xf32>
    %188 = arith.subf %182, %187 : vector<8x32xf32>
    %189 = arith.mulf %188, %188 : vector<8x32xf32>
    %cst_90 = arith.constant dense<0.000000e+00> : vector<8xf32>
    %190 = vector.multi_reduction <add>, %189, %cst_90 [1] : vector<8x32xf32> to vector<8xf32>
    %191 = vector.shape_cast %190 : vector<8xf32> to vector<8x1xf32>
    %cst_91 = arith.constant 3.125000e-02 : f32
    %192 = vector.broadcast %cst_91 : f32 to vector<8x1xf32>
    %193 = arith.mulf %191, %192 : vector<8x1xf32>
    %cst_92 = arith.constant 9.99999974E-6 : f32
    %194 = vector.broadcast %cst_92 : f32 to vector<8x1xf32>
    %195 = arith.addf %193, %194 : vector<8x1xf32>
    %196 = math.rsqrt %195 : vector<8x1xf32>
    %197 = vector.broadcast %196 : vector<8x1xf32> to vector<8x32xf32>
    %198 = arith.mulf %188, %197 : vector<8x32xf32>
    %199 = vector.broadcast %180 : vector<1x32xf32> to vector<8x32xf32>
    %200 = arith.mulf %198, %199 : vector<8x32xf32>
    %201 = vector.broadcast %181 : vector<1x32xf32> to vector<8x32xf32>
    %202 = arith.addf %200, %201 : vector<8x32xf32>
    %c0_93 = arith.constant 0 : index
    %c0_94 = arith.constant 0 : index
    %c0_95 = arith.constant 0 : index
    %203 = vector.load %arg26[%c0_93, %c0_94, %c0_95] : memref<1x8x32xf32, #tpu.memory_space<vmem>>, vector<1x8x32xf32>
    %204 = vector.shape_cast %203 : vector<1x8x32xf32> to vector<8x32xf32>
    %205 = vector.shape_cast %202 : vector<8x32xf32> to vector<1x8x32xf32>
    tpu.vector_store %arg26[%c0_93, %c0_94, %c0_95], %205 {strides = array<i32>} : memref<1x8x32xf32, #tpu.memory_space<vmem>>, vector<1x8x32xf32>,
    return
  }
  func.func @transform_0(%arg0: i32) -> (i32, i32, i32) {
    %c0_i32 = arith.constant 0 : i32
    %c0_i32_0 = arith.constant 0 : i32
    %c0_i32_1 = arith.constant 0 : i32
    return %arg0, %c0_i32, %c0_i32_0 : i32, i32, i32
  }
  func.func @transform_1(%arg0: i32) -> (i32, i32, i32) {
    %c0_i32 = arith.constant 0 : i32
    %c0_i32_0 = arith.constant 0 : i32
    %c0_i32_1 = arith.constant 0 : i32
    return %arg0, %c0_i32, %c0_i32_0 : i32, i32, i32
  }
  func.func @transform_2(%arg0: i32) -> (i32, i32, i32) {
    %c0_i32 = arith.constant 0 : i32
    %c0_i32_0 = arith.constant 0 : i32
    %c0_i32_1 = arith.constant 0 : i32
    return %arg0, %c0_i32, %c0_i32_0 : i32, i32, i32
  }
  func.func @transform_3(%arg0: i32) -> (i32, i32, i32) {
    %c0_i32 = arith.constant 0 : i32
    %c0_i32_0 = arith.constant 0 : i32
    %c0_i32_1 = arith.constant 0 : i32
    return %arg0, %c0_i32, %c0_i32_0 : i32, i32, i32
  }
  func.func @transform_4(%arg0: i32) -> (i32, i32, i32) {
    %c0_i32 = arith.constant 0 : i32
    %c0_i32_0 = arith.constant 0 : i32
    %c0_i32_1 = arith.constant 0 : i32
    return %arg0, %c0_i32, %c0_i32_0 : i32, i32, i32
  }
  func.func @transform_5(%arg0: i32) -> (i32, i32) {
    %c0_i32 = arith.constant 0 : i32
    %c0_i32_0 = arith.constant 0 : i32
    %c0_i32_1 = arith.constant 0 : i32
    return %c0_i32, %c0_i32_0 : i32, i32
  }
  func.func @transform_6(%arg0: i32) -> (i32, i32) {
    %c0_i32 = arith.constant 0 : i32
    %c0_i32_0 = arith.constant 0 : i32
    %c0_i32_1 = arith.constant 0 : i32
    return %c0_i32, %c0_i32_0 : i32, i32
  }
  func.func @transform_7(%arg0: i32) -> (i32, i32) {
    %c0_i32 = arith.constant 0 : i32
    %c0_i32_0 = arith.constant 0 : i32
    %c0_i32_1 = arith.constant 0 : i32
    return %c0_i32, %c0_i32_0 : i32, i32
  }
  func.func @transform_8(%arg0: i32) -> (i32, i32, i32) {
    %c0_i32 = arith.constant 0 : i32
    %c0_i32_0 = arith.constant 0 : i32
    %c0_i32_1 = arith.constant 0 : i32
    %c0_i32_2 = arith.constant 0 : i32
    return %c0_i32, %c0_i32_0, %c0_i32_1 : i32, i32, i32
  }
  func.func @transform_9(%arg0: i32) -> (i32, i32) {
    %c0_i32 = arith.constant 0 : i32
    %c0_i32_0 = arith.constant 0 : i32
    %c0_i32_1 = arith.constant 0 : i32
    return %c0_i32, %c0_i32_0 : i32, i32
  }
  func.func @transform_10(%arg0: i32) -> (i32, i32) {
    %c0_i32 = arith.constant 0 : i32
    %c0_i32_0 = arith.constant 0 : i32
    %c0_i32_1 = arith.constant 0 : i32
    return %c0_i32, %c0_i32_0 : i32, i32
  }
  func.func @transform_11(%arg0: i32) -> (i32, i32) {
    %c0_i32 = arith.constant 0 : i32
    %c0_i32_0 = arith.constant 0 : i32
    %c0_i32_1 = arith.constant 0 : i32
    return %c0_i32, %c0_i32_0 : i32, i32
  }
  func.func @transform_12(%arg0: i32) -> (i32, i32) {
    %c0_i32 = arith.constant 0 : i32
    %c0_i32_0 = arith.constant 0 : i32
    %c0_i32_1 = arith.constant 0 : i32
    return %c0_i32, %c0_i32_0 : i32, i32
  }
  func.func @transform_13(%arg0: i32) -> (i32, i32) {
    %c0_i32 = arith.constant 0 : i32
    %c0_i32_0 = arith.constant 0 : i32
    %c0_i32_1 = arith.constant 0 : i32
    return %c0_i32, %c0_i32_0 : i32, i32
  }
  func.func @transform_14(%arg0: i32) -> (i32, i32) {
    %c0_i32 = arith.constant 0 : i32
    %c0_i32_0 = arith.constant 0 : i32
    %c0_i32_1 = arith.constant 0 : i32
    return %c0_i32, %c0_i32_0 : i32, i32
  }
  func.func @transform_15(%arg0: i32) -> (i32, i32, i32) {
    %c0_i32 = arith.constant 0 : i32
    %c0_i32_0 = arith.constant 0 : i32
    %c0_i32_1 = arith.constant 0 : i32
    %c0_i32_2 = arith.constant 0 : i32
    return %c0_i32, %c0_i32_0, %c0_i32_1 : i32, i32, i32
  }
  func.func @transform_16(%arg0: i32) -> (i32, i32) {
    %c0_i32 = arith.constant 0 : i32
    %c0_i32_0 = arith.constant 0 : i32
    %c0_i32_1 = arith.constant 0 : i32
    return %c0_i32, %c0_i32_0 : i32, i32
  }
  func.func @transform_17(%arg0: i32) -> (i32, i32) {
    %c0_i32 = arith.constant 0 : i32
    %c0_i32_0 = arith.constant 0 : i32
    %c0_i32_1 = arith.constant 0 : i32
    return %c0_i32, %c0_i32_0 : i32, i32
  }
  func.func @transform_18(%arg0: i32) -> (i32, i32) {
    %c0_i32 = arith.constant 0 : i32
    %c0_i32_0 = arith.constant 0 : i32
    %c0_i32_1 = arith.constant 0 : i32
    return %c0_i32, %c0_i32_0 : i32, i32
  }
  func.func @transform_19(%arg0: i32) -> (i32, i32) {
    %c0_i32 = arith.constant 0 : i32
    %c0_i32_0 = arith.constant 0 : i32
    %c0_i32_1 = arith.constant 0 : i32
    return %c0_i32, %c0_i32_0 : i32, i32
  }
  func.func @transform_20(%arg0: i32) -> (i32, i32) {
    %c0_i32 = arith.constant 0 : i32
    %c0_i32_0 = arith.constant 0 : i32
    %c0_i32_1 = arith.constant 0 : i32
    return %c0_i32, %c0_i32_0 : i32, i32
  }
  func.func @transform_21(%arg0: i32) -> (i32, i32) {
    %c0_i32 = arith.constant 0 : i32
    %c0_i32_0 = arith.constant 0 : i32
    %c0_i32_1 = arith.constant 0 : i32
    return %c0_i32, %c0_i32_0 : i32, i32
  }
  func.func @transform_22(%arg0: i32) -> (i32, i32) {
    %c0_i32 = arith.constant 0 : i32
    %c0_i32_0 = arith.constant 0 : i32
    %c0_i32_1 = arith.constant 0 : i32
    return %c0_i32, %c0_i32_0 : i32, i32
  }
  func.func @transform_23(%arg0: i32) -> (i32, i32) {
    %c0_i32 = arith.constant 0 : i32
    %c0_i32_0 = arith.constant 0 : i32
    %c0_i32_1 = arith.constant 0 : i32
    return %c0_i32, %c0_i32_0 : i32, i32
  }
  func.func @transform_24(%arg0: i32) -> (i32, i32) {
    %c0_i32 = arith.constant 0 : i32
    %c0_i32_0 = arith.constant 0 : i32
    %c0_i32_1 = arith.constant 0 : i32
    return %c0_i32, %c0_i32_0 : i32, i32
  }
  func.func @transform_25(%arg0: i32) -> (i32, i32, i32) {
    %c0_i32 = arith.constant 0 : i32
    %c0_i32_0 = arith.constant 0 : i32
    %c0_i32_1 = arith.constant 0 : i32
    return %arg0, %c0_i32, %c0_i32_0 : i32, i32, i32
  }
}

</mosaic_0001>

<llo_original>
// kernel: tpu_custom_call.1
$region0: #{tpu_custom_call.1}
  #allocation0 [shape = 'u32[]', space=smem, size = 0x4, offset = 0x4, fixed_abs, tag = 'smem constant byte address 0x4 - core index']
  #allocation1 [shape = 'u32[144,128]{1,0:T(1,128)}', space=vmem, size = 0x12000, scoped, tag = 'internal scratch']
  %s0 = inlined_call_operand.hbm [shape: f32[2,8,32], index: 0, kind: input, shape index: {}]
  %s1 = inlined_call_operand.hbm [shape: f32[2,8,32], index: 1, kind: input, shape index: {}]
  %s2 = inlined_call_operand.hbm [shape: f32[2,8,32], index: 2, kind: input, shape index: {}]
  %s3 = inlined_call_operand.hbm [shape: f32[2,8,8], index: 3, kind: input, shape index: {}]
  %s4 = inlined_call_operand.hbm [shape: f32[2,8,8], index: 4, kind: input, shape index: {}]
  %s5 = inlined_call_operand.vmem [shape: f32[32,32], index: 5, kind: input, shape index: {}]
  %s6 = inlined_call_operand.vmem [shape: f32[32,32], index: 6, kind: input, shape index: {}]
  %s7 = inlined_call_operand.vmem [shape: f32[32,32], index: 7, kind: input, shape index: {}]
  %s8 = inlined_call_operand.vmem [shape: f32[4,8,32], index: 8, kind: input, shape index: {}]
  %s9 = inlined_call_operand.hbm [shape: f32[1,32], index: 9, kind: input, shape index: {}]
  %s10 = inlined_call_operand.hbm [shape: f32[1,32], index: 10, kind: input, shape index: {}]
  %s11 = inlined_call_operand.hbm [shape: f32[1,32], index: 11, kind: input, shape index: {}]
  %s12 = inlined_call_operand.vmem [shape: f32[32,32], index: 12, kind: input, shape index: {}]
  %s13 = inlined_call_operand.vmem [shape: f32[32,32], index: 13, kind: input, shape index: {}]
  %s14 = inlined_call_operand.hbm [shape: f32[32,32], index: 14, kind: input, shape index: {}]
  %s15 = inlined_call_operand.hbm [shape: f32[4,8,32], index: 15, kind: input, shape index: {}]
  %s16 = inlined_call_operand.hbm [shape: f32[1,32], index: 16, kind: input, shape index: {}]
  %s17 = inlined_call_operand.hbm [shape: f32[1,32], index: 17, kind: input, shape index: {}]
  %s18 = inlined_call_operand.vmem [shape: f32[1,32], index: 18, kind: input, shape index: {}]
  %s19 = inlined_call_operand.vmem [shape: f32[128,32], index: 19, kind: input, shape index: {}]
  %s20 = inlined_call_operand.vmem [shape: f32[1,128], index: 20, kind: input, shape index: {}]
  %s21 = inlined_call_operand.hbm [shape: f32[32,128], index: 21, kind: input, shape index: {}]
  %s22 = inlined_call_operand.vmem [shape: f32[1,32], index: 22, kind: input, shape index: {}]
  %s23 = inlined_call_operand.vmem [shape: f32[1,32], index: 23, kind: input, shape index: {}]
  %s24 = inlined_call_operand.vmem [shape: f32[1,32], index: 24, kind: input, shape index: {}]
  %s25 = inlined_call_operand.hbm [shape: f32[2,8,32], index: 25, kind: output, shape index: {}]
  %s26 = sld [smem:[#allocation0]]
  $region185: #{tpu_custom_call.1} parent=0
    _
  %s28 = ssub.s32 1, %s26
  %s29 = scalar_select 0, %s28, %s26
  $region1: #{tpu_custom_call.1} parent=0
    #allocation2 [shape = 'u8[8192]{0}', space=vmem, size = 0x2000, scoped, tag = 'input window, operand 0']
    #allocation3 [shape = 's32[2]{0}', space=sflag, size = 0x8, scoped, tag = 'scoped memory for tpu_custom_call.1']
    #allocation4 [shape = 's32[2]{0}', space=sflag, size = 0x8, scoped, tag = 'scoped memory for tpu_custom_call.1']
    #allocation5 [shape = 'u8[8192]{0}', space=vmem, size = 0x2000, scoped, tag = 'input window, operand 1']
    #allocation6 [shape = 's32[2]{0}', space=sflag, size = 0x8, scoped, tag = 'scoped memory for tpu_custom_call.1']
    #allocation7 [shape = 'u8[8192]{0}', space=vmem, size = 0x2000, scoped, tag = 'input window, operand 2']
    #allocation8 [shape = 'u8[8192]{0}', space=vmem, size = 0x2000, scoped, tag = 'input window, operand 3']
    #allocation9 [shape = 's32[2]{0}', space=sflag, size = 0x8, scoped, tag = 'scoped memory for tpu_custom_call.1']
    #allocation10 [shape = 'u8[8192]{0}', space=vmem, size = 0x2000, scoped, tag = 'input window, operand 4']
    #allocation11 [shape = 'u8[512]{0}', space=vmem, size = 0x400, scoped, tag = 'input window, operand 9, single buffered']
    #allocation12 [shape = 's32[1]{0}', space=sflag, size = 0x4, scoped, tag = 'scoped memory for tpu_custom_call.1']
    #allocation13 [shape = 'u8[512]{0}', space=vmem, size = 0x400, scoped, tag = 'input window, operand 10, single buffered']
    #allocation14 [shape = 'u8[512]{0}', space=vmem, size = 0x400, scoped, tag = 'input window, operand 11, single buffered']
    #allocation15 [shape = 's32[1]{0}', space=sflag, size = 0x4, scoped, tag = 'scoped memory for tpu_custom_call.1']
    #allocation16 [shape = 'u8[16384]{0}', space=vmem, size = 0x4000, scoped, tag = 'input window, operand 14, single buffered']
    #allocation17 [shape = 'u8[16384]{0}', space=vmem, size = 0x4000, scoped, tag = 'input window, operand 15, single buffered']
    #allocation18 [shape = 's32[1]{0}', space=sflag, size = 0x4, scoped, tag = 'scoped memory for tpu_custom_call.1']
    #allocation19 [shape = 'u8[512]{0}', space=vmem, size = 0x400, scoped, tag = 'input window, operand 16, single buffered']
    #allocation20 [shape = 'u8[512]{0}', space=vmem, size = 0x400, scoped, tag = 'input window, operand 17, single buffered']
    #allocation21 [shape = 's32[1]{0}', space=sflag, size = 0x4, scoped, tag = 'scoped memory for tpu_custom_call.1']
    #allocation22 [shape = 'u8[16384]{0}', space=vmem, size = 0x4000, scoped, tag = 'input window, operand 21, single buffered']
    #allocation23 [shape = 'u8[8192]{0}', space=vmem, size = 0x2000, scoped, tag = 'output window, operand 0']
    %30 = vsyncpa [#allocation3], 0
    %s31 = scalar_lea.sflag [#allocation3], 1
    %32 = vsyncpa %s31, 0
    %33 = vsyncpa [#allocation6], 0
    %s34 = scalar_lea.sflag [#allocation6], 1
    %35 = vsyncpa %s34, 0
    %36 = vsyncpa [#allocation9], 0
    %s37 = scalar_lea.sflag [#allocation9], 1
    %38 = vsyncpa %s37, 0
    %39 = vsyncpa [#allocation12], 0
    %40 = vsyncpa [#allocation15], 0
    %41 = vsyncpa [#allocation18], 0
    %42 = vsyncpa [#allocation21], 0
    %43 = vsyncpa [#allocation4], 0
    %s44 = scalar_lea.sflag [#allocation4], 1
    %45 = vsyncpa %s44, 0
    loop: start=0, step=1, limit=4
    $region2: #{tpu_custom_call.1} parent=1 // loop_pre_header
      _
    $region3: #{tpu_custom_call.1} parent=1 // loop_header
      %s47 = sphi 0, %s51
      %p48 = scmp.ge.s32.totalorder %s47, 4
      %s57 = sphi 0, %s59
      %s60 = sphi 0, %s57
      %s61 = sphi 0, %s60
      %s77 = sphi 0, %s61
      %s83 = sphi 0, %s85
      %s86 = sphi 0, %s83
      %s87 = sphi 0, %s86
      %s103 = sphi 0, %s87
      %s109 = sphi 0, %s111
      %s112 = sphi 0, %s109
      %s113 = sphi 0, %s112
      %s129 = sphi 0, %s113
      %s135 = sphi 0, %s137
      %s138 = sphi 0, %s135
      %s139 = sphi 0, %s138
      %s155 = sphi 0, %s139
      %s161 = sphi 0, %s163
      %s164 = sphi 0, %s161
      %s165 = sphi 0, %s164
      %s181 = sphi 0, %s165
      %s185 = sphi 0, %s185
      %s187 = sphi 0, %s185
      %s188 = sphi 0, %s187
      %s202 = sphi 0, %s188
      %s206 = sphi 0, %s206
      %s208 = sphi 0, %s206
      %s209 = sphi 0, %s208
      %s223 = sphi 0, %s209
      %s227 = sphi 0, %s227
      %s229 = sphi 0, %s227
      %s230 = sphi 0, %s229
      %s244 = sphi 0, %s230
      %s248 = sphi 0, %s248
      %s250 = sphi 0, %s248
      %s251 = sphi 0, %s250
      %s265 = sphi 0, %s251
      %s269 = sphi 0, %s269
      %s271 = sphi 0, %s269
      %s272 = sphi 0, %s271
      %s286 = sphi 0, %s272
      %s290 = sphi 0, %s290
      %s292 = sphi 0, %s290
      %s293 = sphi 0, %s292
      %s307 = sphi 0, %s293
      %s311 = sphi 0, %s311
      %s313 = sphi 0, %s311
      %s314 = sphi 0, %s313
      %s328 = sphi 0, %s314
      %s332 = sphi 0, %s332
      %s334 = sphi 0, %s332
      %s335 = sphi 0, %s334
      %s349 = sphi 0, %s335
      %s353 = sphi 0, %s353
      %s355 = sphi 0, %s353
      %s356 = sphi 0, %s355
      %s370 = sphi 0, %s356
      %s374 = sphi 0, %s374
      %s376 = sphi 0, %s374
      %s377 = sphi 0, %s376
      %s391 = sphi 0, %s377
      %s395 = sphi 0, %s395
      %s397 = sphi 0, %s395
      %s398 = sphi 0, %s397
      %s412 = sphi 0, %s398
      %s416 = sphi 0, %s416
      %s418 = sphi 0, %s416
      %s419 = sphi 0, %s418
      %s433 = sphi 0, %s419
      %s437 = sphi 0, %s437
      %s439 = sphi 0, %s437
      %s440 = sphi 0, %s439
      %s454 = sphi 0, %s440
      %s458 = sphi 0, %s458
      %s460 = sphi 0, %s458
      %s461 = sphi 0, %s460
      %s475 = sphi 0, %s461
      %s479 = sphi 0, %s479
      %s481 = sphi 0, %s479
      %s482 = sphi 0, %s481
      %s496 = sphi 0, %s482
      %s500 = sphi 0, %s500
      %s502 = sphi 0, %s500
      %s503 = sphi 0, %s502
      %s517 = sphi 0, %s503
      %s521 = sphi 0, %s521
      %s523 = sphi 0, %s521
      %s524 = sphi 0, %s523
      %s538 = sphi 0, %s524
      %s542 = sphi 0, %s542
      %s544 = sphi 0, %s542
      %s545 = sphi 0, %s544
      %s559 = sphi 0, %s545
      %s563 = sphi 0, %s563
      %s565 = sphi 0, %s563
      %s566 = sphi 0, %s565
      %s580 = sphi 0, %s566
      %s584 = sphi 0, %s584
      %s586 = sphi 0, %s584
      %s587 = sphi 0, %s586
      %s601 = sphi 0, %s587
      %s607 = sphi 0, %s609
      %s610 = sphi 0, %s607
      %s611 = sphi 0, %s610
      %s627 = sphi 0, %s611
    $region4: #{tpu_custom_call.1} parent=1 // loop_header_branch
      %50 = sbr.rel (%p48) target = $region8
    $region5: #{tpu_custom_call.1} parent=1 // loop_body
      %s52 = ssub.s32 %s47, 1
      %s53 = ssub.s32 %s47, 2
      %s54 = sadd.s32 %s47, 1
      %s55 = ssub.s32 %s47, %s54
      %p56 = scmp.eq.s32.totalorder %s55, 0
      %s58 = sadd.s32 %s57, 1
      %s59 = scalar_select %p56, %s57, %s58
      %p62 = pneg %p56
      %p63 = scmp.eq.s32.totalorder %s47, 1
      %p64 = por %p62, %p63
      %p65 = scmp.ne.s32.totalorder %s57, %s60
      %p66 = scmp.eq.s32.totalorder %s47, 0
      %p67 = por %p65, %p66
      %p68 = scmp.ne.s32.totalorder %s57, %s60
      %p69 = scmp.eq.s32.totalorder %s52, 1
      %p70 = por %p68, %p69
      %p71 = scmp.ne.s32.totalorder %s60, %s61
      %p72 = scmp.eq.s32.totalorder %s52, 0
      %p73 = por %p71, %p72
      %p74 = scmp.ne.s32.totalorder %s60, %s61
      %p75 = scmp.eq.s32.totalorder %s53, 1
      %p76 = por %p74, %p75
      %p78 = scmp.ne.s32.totalorder %s61, %s77
      %p79 = scmp.eq.s32.totalorder %s53, 0
      %p80 = por %p78, %p79
      %s81 = ssub.s32 %s47, %s54
      %p82 = scmp.eq.s32.totalorder %s81, 0
      %s84 = sadd.s32 %s83, 1
      %s85 = scalar_select %p82, %s83, %s84
      %p88 = pneg %p82
      %p89 = scmp.eq.s32.totalorder %s47, 1
      %p90 = por %p88, %p89
      %p91 = scmp.ne.s32.totalorder %s83, %s86
      %p92 = scmp.eq.s32.totalorder %s47, 0
      %p93 = por %p91, %p92
      %p94 = scmp.ne.s32.totalorder %s83, %s86
      %p95 = scmp.eq.s32.totalorder %s52, 1
      %p96 = por %p94, %p95
      %p97 = scmp.ne.s32.totalorder %s86, %s87
      %p98 = scmp.eq.s32.totalorder %s52, 0
      %p99 = por %p97, %p98
      %p100 = scmp.ne.s32.totalorder %s86, %s87
      %p101 = scmp.eq.s32.totalorder %s53, 1
      %p102 = por %p100, %p101
      %p104 = scmp.ne.s32.totalorder %s87, %s103
      %p105 = scmp.eq.s32.totalorder %s53, 0
      %p106 = por %p104, %p105
      %s107 = ssub.s32 %s47, %s54
      %p108 = scmp.eq.s32.totalorder %s107, 0
      %s110 = sadd.s32 %s109, 1
      %s111 = scalar_select %p108, %s109, %s110
      %p114 = pneg %p108
      %p115 = scmp.eq.s32.totalorder %s47, 1
      %p116 = por %p114, %p115
      %p117 = scmp.ne.s32.totalorder %s109, %s112
      %p118 = scmp.eq.s32.totalorder %s47, 0
      %p119 = por %p117, %p118
      %p120 = scmp.ne.s32.totalorder %s109, %s112
      %p121 = scmp.eq.s32.totalorder %s52, 1
      %p122 = por %p120, %p121
      %p123 = scmp.ne.s32.totalorder %s112, %s113
      %p124 = scmp.eq.s32.totalorder %s52, 0
      %p125 = por %p123, %p124
      %p126 = scmp.ne.s32.totalorder %s112, %s113
      %p127 = scmp.eq.s32.totalorder %s53, 1
      %p128 = por %p126, %p127
      %p130 = scmp.ne.s32.totalorder %s113, %s129
      %p131 = scmp.eq.s32.totalorder %s53, 0
      %p132 = por %p130, %p131
      %s133 = ssub.s32 %s47, %s54
      %p134 = scmp.eq.s32.totalorder %s133, 0
      %s136 = sadd.s32 %s135, 1
      %s137 = scalar_select %p134, %s135, %s136
      %p140 = pneg %p134
      %p141 = scmp.eq.s32.totalorder %s47, 1
      %p142 = por %p140, %p141
      %p143 = scmp.ne.s32.totalorder %s135, %s138
      %p144 = scmp.eq.s32.totalorder %s47, 0
      %p145 = por %p143, %p144
      %p146 = scmp.ne.s32.totalorder %s135, %s138
      %p147 = scmp.eq.s32.totalorder %s52, 1
      %p148 = por %p146, %p147
      %p149 = scmp.ne.s32.totalorder %s138, %s139
      %p150 = scmp.eq.s32.totalorder %s52, 0
      %p151 = por %p149, %p150
      %p152 = scmp.ne.s32.totalorder %s138, %s139
      %p153 = scmp.eq.s32.totalorder %s53, 1
      %p154 = por %p152, %p153
      %p156 = scmp.ne.s32.totalorder %s139, %s155
      %p157 = scmp.eq.s32.totalorder %s53, 0
      %p158 = por %p156, %p157
      %s159 = ssub.s32 %s47, %s54
      %p160 = scmp.eq.s32.totalorder %s159, 0
      %s162 = sadd.s32 %s161, 1
      %s163 = scalar_select %p160, %s161, %s162
      %p166 = pneg %p160
      %p167 = scmp.eq.s32.totalorder %s47, 1
      %p168 = por %p166, %p167
      %p169 = scmp.ne.s32.totalorder %s161, %s164
      %p170 = scmp.eq.s32.totalorder %s47, 0
      %p171 = por %p169, %p170
      %p172 = scmp.ne.s32.totalorder %s161, %s164
      %p173 = scmp.eq.s32.totalorder %s52, 1
      %p174 = por %p172, %p173
      %p175 = scmp.ne.s32.totalorder %s164, %s165
      %p176 = scmp.eq.s32.totalorder %s52, 0
      %p177 = por %p175, %p176
      %p178 = scmp.ne.s32.totalorder %s164, %s165
      %p179 = scmp.eq.s32.totalorder %s53, 1
      %p180 = por %p178, %p179
      %p182 = scmp.ne.s32.totalorder %s165, %s181
      %p183 = scmp.eq.s32.totalorder %s53, 0
      %p184 = por %p182, %p183
      %s186 = sadd.s32 %s185, 1
      %p189 = scmp.eq.s32.totalorder %s47, 1
      %p190 = scmp.ne.s32.totalorder %s185, %s187
      %p191 = scmp.eq.s32.totalorder %s47, 0
      %p192 = por %p190, %p191
      %p193 = scmp.ne.s32.totalorder %s185, %s187
      %p194 = scmp.eq.s32.totalorder %s52, 1
      %p195 = por %p193, %p194
      %p196 = scmp.ne.s32.totalorder %s187, %s188
      %p197 = scmp.eq.s32.totalorder %s52, 0
      %p198 = por %p196, %p197
      %p199 = scmp.ne.s32.totalorder %s187, %s188
      %p200 = scmp.eq.s32.totalorder %s53, 1
      %p201 = por %p199, %p200
      %p203 = scmp.ne.s32.totalorder %s188, %s202
      %p204 = scmp.eq.s32.totalorder %s53, 0
      %p205 = por %p203, %p204
      %s207 = sadd.s32 %s206, 1
      %p210 = scmp.eq.s32.totalorder %s47, 1
      %p211 = scmp.ne.s32.totalorder %s206, %s208
      %p212 = scmp.eq.s32.totalorder %s47, 0
      %p213 = por %p211, %p212
      %p214 = scmp.ne.s32.totalorder %s206, %s208
      %p215 = scmp.eq.s32.totalorder %s52, 1
      %p216 = por %p214, %p215
      %p217 = scmp.ne.s32.totalorder %s208, %s209
      %p218 = scmp.eq.s32.totalorder %s52, 0
      %p219 = por %p217, %p218
      %p220 = scmp.ne.s32.totalorder %s208, %s209
      %p221 = scmp.eq.s32.totalorder %s53, 1
      %p222 = por %p220, %p221
      %p224 = scmp.ne.s32.totalorder %s209, %s223
      %p225 = scmp.eq.s32.totalorder %s53, 0
      %p226 = por %p224, %p225
      %s228 = sadd.s32 %s227, 1
      %p231 = scmp.eq.s32.totalorder %s47, 1
      %p232 = scmp.ne.s32.totalorder %s227, %s229
      %p233 = scmp.eq.s32.totalorder %s47, 0
      %p234 = por %p232, %p233
      %p235 = scmp.ne.s32.totalorder %s227, %s229
      %p236 = scmp.eq.s32.totalorder %s52, 1
      %p237 = por %p235, %p236
      %p238 = scmp.ne.s32.totalorder %s229, %s230
      %p239 = scmp.eq.s32.totalorder %s52, 0
      %p240 = por %p238, %p239
      %p241 = scmp.ne.s32.totalorder %s229, %s230
      %p242 = scmp.eq.s32.totalorder %s53, 1
      %p243 = por %p241, %p242
      %p245 = scmp.ne.s32.totalorder %s230, %s244
      %p246 = scmp.eq.s32.totalorder %s53, 0
      %p247 = por %p245, %p246
      %s249 = sadd.s32 %s248, 1
      %p252 = scmp.eq.s32.totalorder %s47, 1
      %p253 = scmp.ne.s32.totalorder %s248, %s250
      %p254 = scmp.eq.s32.totalorder %s47, 0
      %p255 = por %p253, %p254
      %p256 = scmp.ne.s32.totalorder %s248, %s250
      %p257 = scmp.eq.s32.totalorder %s52, 1
      %p258 = por %p256, %p257
      %p259 = scmp.ne.s32.totalorder %s250, %s251
      %p260 = scmp.eq.s32.totalorder %s52, 0
      %p261 = por %p259, %p260
      %p262 = scmp.ne.s32.totalorder %s250, %s251
      %p263 = scmp.eq.s32.totalorder %s53, 1
      %p264 = por %p262, %p263
      %p266 = scmp.ne.s32.totalorder %s251, %s265
      %p267 = scmp.eq.s32.totalorder %s53, 0
      %p268 = por %p266, %p267
      %s270 = sadd.s32 %s269, 1
      %p273 = scmp.eq.s32.totalorder %s47, 1
      %p274 = scmp.ne.s32.totalorder %s269, %s271
      %p275 = scmp.eq.s32.totalorder %s47, 0
      %p276 = por %p274, %p275
      %p277 = scmp.ne.s32.totalorder %s269, %s271
      %p278 = scmp.eq.s32.totalorder %s52, 1
      %p279 = por %p277, %p278
      %p280 = scmp.ne.s32.totalorder %s271, %s272
      %p281 = scmp.eq.s32.totalorder %s52, 0
      %p282 = por %p280, %p281
      %p283 = scmp.ne.s32.totalorder %s271, %s272
      %p284 = scmp.eq.s32.totalorder %s53, 1
      %p285 = por %p283, %p284
      %p287 = scmp.ne.s32.totalorder %s272, %s286
      %p288 = scmp.eq.s32.totalorder %s53, 0
      %p289 = por %p287, %p288
      %s291 = sadd.s32 %s290, 1
      %p294 = scmp.eq.s32.totalorder %s47, 1
      %p295 = scmp.ne.s32.totalorder %s290, %s292
      %p296 = scmp.eq.s32.totalorder %s47, 0
      %p297 = por %p295, %p296
      %p298 = scmp.ne.s32.totalorder %s290, %s292
      %p299 = scmp.eq.s32.totalorder %s52, 1
      %p300 = por %p298, %p299
      %p301 = scmp.ne.s32.totalorder %s292, %s293
      %p302 = scmp.eq.s32.totalorder %s52, 0
      %p303 = por %p301, %p302
      %p304 = scmp.ne.s32.totalorder %s292, %s293
      %p305 = scmp.eq.s32.totalorder %s53, 1
      %p306 = por %p304, %p305
      %p308 = scmp.ne.s32.totalorder %s293, %s307
      %p309 = scmp.eq.s32.totalorder %s53, 0
      %p310 = por %p308, %p309
      %s312 = sadd.s32 %s311, 1
      %p315 = scmp.eq.s32.totalorder %s47, 1
      %p316 = scmp.ne.s32.totalorder %s311, %s313
      %p317 = scmp.eq.s32.totalorder %s47, 0
      %p318 = por %p316, %p317
      %p319 = scmp.ne.s32.totalorder %s311, %s313
      %p320 = scmp.eq.s32.totalorder %s52, 1
      %p321 = por %p319, %p320
      %p322 = scmp.ne.s32.totalorder %s313, %s314
      %p323 = scmp.eq.s32.totalorder %s52, 0
      %p324 = por %p322, %p323
      %p325 = scmp.ne.s32.totalorder %s313, %s314
      %p326 = scmp.eq.s32.totalorder %s53, 1
      %p327 = por %p325, %p326
      %p329 = scmp.ne.s32.totalorder %s314, %s328
      %p330 = scmp.eq.s32.totalorder %s53, 0
      %p331 = por %p329, %p330
      %s333 = sadd.s32 %s332, 1
      %p336 = scmp.eq.s32.totalorder %s47, 1
      %p337 = scmp.ne.s32.totalorder %s332, %s334
      %p338 = scmp.eq.s32.totalorder %s47, 0
      %p339 = por %p337, %p338
      %p340 = scmp.ne.s32.totalorder %s332, %s334
      %p341 = scmp.eq.s32.totalorder %s52, 1
      %p342 = por %p340, %p341
      %p343 = scmp.ne.s32.totalorder %s334, %s335
      %p344 = scmp.eq.s32.totalorder %s52, 0
      %p345 = por %p343, %p344
      %p346 = scmp.ne.s32.totalorder %s334, %s335
      %p347 = scmp.eq.s32.totalorder %s53, 1
      %p348 = por %p346, %p347
      %p350 = scmp.ne.s32.totalorder %s335, %s349
      %p351 = scmp.eq.s32.totalorder %s53, 0
      %p352 = por %p350, %p351
      %s354 = sadd.s32 %s353, 1
      %p357 = scmp.eq.s32.totalorder %s47, 1
      %p358 = scmp.ne.s32.totalorder %s353, %s355
      %p359 = scmp.eq.s32.totalorder %s47, 0
      %p360 = por %p358, %p359
      %p361 = scmp.ne.s32.totalorder %s353, %s355
      %p362 = scmp.eq.s32.totalorder %s52, 1
      %p363 = por %p361, %p362
      %p364 = scmp.ne.s32.totalorder %s355, %s356
      %p365 = scmp.eq.s32.totalorder %s52, 0
      %p366 = por %p364, %p365
      %p367 = scmp.ne.s32.totalorder %s355, %s356
      %p368 = scmp.eq.s32.totalorder %s53, 1
      %p369 = por %p367, %p368
      %p371 = scmp.ne.s32.totalorder %s356, %s370
      %p372 = scmp.eq.s32.totalorder %s53, 0
      %p373 = por %p371, %p372
      %s375 = sadd.s32 %s374, 1
      %p378 = scmp.eq.s32.totalorder %s47, 1
      %p379 = scmp.ne.s32.totalorder %s374, %s376
      %p380 = scmp.eq.s32.totalorder %s47, 0
      %p381 = por %p379, %p380
      %p382 = scmp.ne.s32.totalorder %s374, %s376
      %p383 = scmp.eq.s32.totalorder %s52, 1
      %p384 = por %p382, %p383
      %p385 = scmp.ne.s32.totalorder %s376, %s377
      %p386 = scmp.eq.s32.totalorder %s52, 0
      %p387 = por %p385, %p386
      %p388 = scmp.ne.s32.totalorder %s376, %s377
      %p389 = scmp.eq.s32.totalorder %s53, 1
      %p390 = por %p388, %p389
      %p392 = scmp.ne.s32.totalorder %s377, %s391
      %p393 = scmp.eq.s32.totalorder %s53, 0
      %p394 = por %p392, %p393
      %s396 = sadd.s32 %s395, 1
      %p399 = scmp.eq.s32.totalorder %s47, 1
      %p400 = scmp.ne.s32.totalorder %s395, %s397
      %p401 = scmp.eq.s32.totalorder %s47, 0
      %p402 = por %p400, %p401
      %p403 = scmp.ne.s32.totalorder %s395, %s397
      %p404 = scmp.eq.s32.totalorder %s52, 1
      %p405 = por %p403, %p404
      %p406 = scmp.ne.s32.totalorder %s397, %s398
      %p407 = scmp.eq.s32.totalorder %s52, 0
      %p408 = por %p406, %p407
      %p409 = scmp.ne.s32.totalorder %s397, %s398
      %p410 = scmp.eq.s32.totalorder %s53, 1
      %p411 = por %p409, %p410
      %p413 = scmp.ne.s32.totalorder %s398, %s412
      %p414 = scmp.eq.s32.totalorder %s53, 0
      %p415 = por %p413, %p414
      %s417 = sadd.s32 %s416, 1
      %p420 = scmp.eq.s32.totalorder %s47, 1
      %p421 = scmp.ne.s32.totalorder %s416, %s418
      %p422 = scmp.eq.s32.totalorder %s47, 0
      %p423 = por %p421, %p422
      %p424 = scmp.ne.s32.totalorder %s416, %s418
      %p425 = scmp.eq.s32.totalorder %s52, 1
      %p426 = por %p424, %p425
      %p427 = scmp.ne.s32.totalorder %s418, %s419
      %p428 = scmp.eq.s32.totalorder %s52, 0
      %p429 = por %p427, %p428
      %p430 = scmp.ne.s32.totalorder %s418, %s419
      %p431 = scmp.eq.s32.totalorder %s53, 1
      %p432 = por %p430, %p431
      %p434 = scmp.ne.s32.totalorder %s419, %s433
      %p435 = scmp.eq.s32.totalorder %s53, 0
      %p436 = por %p434, %p435
      %s438 = sadd.s32 %s437, 1
      %p441 = scmp.eq.s32.totalorder %s47, 1
      %p442 = scmp.ne.s32.totalorder %s437, %s439
      %p443 = scmp.eq.s32.totalorder %s47, 0
      %p444 = por %p442, %p443
      %p445 = scmp.ne.s32.totalorder %s437, %s439
      %p446 = scmp.eq.s32.totalorder %s52, 1
      %p447 = por %p445, %p446
      %p448 = scmp.ne.s32.totalorder %s439, %s440
      %p449 = scmp.eq.s32.totalorder %s52, 0
      %p450 = por %p448, %p449
      %p451 = scmp.ne.s32.totalorder %s439, %s440
      %p452 = scmp.eq.s32.totalorder %s53, 1
      %p453 = por %p451, %p452
      %p455 = scmp.ne.s32.totalorder %s440, %s454
      %p456 = scmp.eq.s32.totalorder %s53, 0
      %p457 = por %p455, %p456
      %s459 = sadd.s32 %s458, 1
      %p462 = scmp.eq.s32.totalorder %s47, 1
      %p463 = scmp.ne.s32.totalorder %s458, %s460
      %p464 = scmp.eq.s32.totalorder %s47, 0
      %p465 = por %p463, %p464
      %p466 = scmp.ne.s32.totalorder %s458, %s460
      %p467 = scmp.eq.s32.totalorder %s52, 1
      %p468 = por %p466, %p467
      %p469 = scmp.ne.s32.totalorder %s460, %s461
      %p470 = scmp.eq.s32.totalorder %s52, 0
      %p471 = por %p469, %p470
      %p472 = scmp.ne.s32.totalorder %s460, %s461
      %p473 = scmp.eq.s32.totalorder %s53, 1
      %p474 = por %p472, %p473
      %p476 = scmp.ne.s32.totalorder %s461, %s475
      %p477 = scmp.eq.s32.totalorder %s53, 0
      %p478 = por %p476, %p477
      %s480 = sadd.s32 %s479, 1
      %p483 = scmp.eq.s32.totalorder %s47, 1
      %p484 = scmp.ne.s32.totalorder %s479, %s481
      %p485 = scmp.eq.s32.totalorder %s47, 0
      %p486 = por %p484, %p485
      %p487 = scmp.ne.s32.totalorder %s479, %s481
      %p488 = scmp.eq.s32.totalorder %s52, 1
      %p489 = por %p487, %p488
      %p490 = scmp.ne.s32.totalorder %s481, %s482
      %p491 = scmp.eq.s32.totalorder %s52, 0
      %p492 = por %p490, %p491
      %p493 = scmp.ne.s32.totalorder %s481, %s482
      %p494 = scmp.eq.s32.totalorder %s53, 1
      %p495 = por %p493, %p494
      %p497 = scmp.ne.s32.totalorder %s482, %s496
      %p498 = scmp.eq.s32.totalorder %s53, 0
      %p499 = por %p497, %p498
      %s501 = sadd.s32 %s500, 1
      %p504 = scmp.eq.s32.totalorder %s47, 1
      %p505 = scmp.ne.s32.totalorder %s500, %s502
      %p506 = scmp.eq.s32.totalorder %s47, 0
      %p507 = por %p505, %p506
      %p508 = scmp.ne.s32.totalorder %s500, %s502
      %p509 = scmp.eq.s32.totalorder %s52, 1
      %p510 = por %p508, %p509
      %p511 = scmp.ne.s32.totalorder %s502, %s503
      %p512 = scmp.eq.s32.totalorder %s52, 0
      %p513 = por %p511, %p512
      %p514 = scmp.ne.s32.totalorder %s502, %s503
      %p515 = scmp.eq.s32.totalorder %s53, 1
      %p516 = por %p514, %p515
      %p518 = scmp.ne.s32.totalorder %s503, %s517
      %p519 = scmp.eq.s32.totalorder %s53, 0
      %p520 = por %p518, %p519
      %s522 = sadd.s32 %s521, 1
      %p525 = scmp.eq.s32.totalorder %s47, 1
      %p526 = scmp.ne.s32.totalorder %s521, %s523
      %p527 = scmp.eq.s32.totalorder %s47, 0
      %p528 = por %p526, %p527
      %p529 = scmp.ne.s32.totalorder %s521, %s523
      %p530 = scmp.eq.s32.totalorder %s52, 1
      %p531 = por %p529, %p530
      %p532 = scmp.ne.s32.totalorder %s523, %s524
      %p533 = scmp.eq.s32.totalorder %s52, 0
      %p534 = por %p532, %p533
      %p535 = scmp.ne.s32.totalorder %s523, %s524
      %p536 = scmp.eq.s32.totalorder %s53, 1
      %p537 = por %p535, %p536
      %p539 = scmp.ne.s32.totalorder %s524, %s538
      %p540 = scmp.eq.s32.totalorder %s53, 0
      %p541 = por %p539, %p540
      %s543 = sadd.s32 %s542, 1
      %p546 = scmp.eq.s32.totalorder %s47, 1
      %p547 = scmp.ne.s32.totalorder %s542, %s544
      %p548 = scmp.eq.s32.totalorder %s47, 0
      %p549 = por %p547, %p548
      %p550 = scmp.ne.s32.totalorder %s542, %s544
      %p551 = scmp.eq.s32.totalorder %s52, 1
      %p552 = por %p550, %p551
      %p553 = scmp.ne.s32.totalorder %s544, %s545
      %p554 = scmp.eq.s32.totalorder %s52, 0
      %p555 = por %p553, %p554
      %p556 = scmp.ne.s32.totalorder %s544, %s545
      %p557 = scmp.eq.s32.totalorder %s53, 1
      %p558 = por %p556, %p557
      %p560 = scmp.ne.s32.totalorder %s545, %s559
      %p561 = scmp.eq.s32.totalorder %s53, 0
      %p562 = por %p560, %p561
      %s564 = sadd.s32 %s563, 1
      %p567 = scmp.eq.s32.totalorder %s47, 1
      %p568 = scmp.ne.s32.totalorder %s563, %s565
      %p569 = scmp.eq.s32.totalorder %s47, 0
      %p570 = por %p568, %p569
      %p571 = scmp.ne.s32.totalorder %s563, %s565
      %p572 = scmp.eq.s32.totalorder %s52, 1
      %p573 = por %p571, %p572
      %p574 = scmp.ne.s32.totalorder %s565, %s566
      %p575 = scmp.eq.s32.totalorder %s52, 0
      %p576 = por %p574, %p575
      %p577 = scmp.ne.s32.totalorder %s565, %s566
      %p578 = scmp.eq.s32.totalorder %s53, 1
      %p579 = por %p577, %p578
      %p581 = scmp.ne.s32.totalorder %s566, %s580
      %p582 = scmp.eq.s32.totalorder %s53, 0
      %p583 = por %p581, %p582
      %s585 = sadd.s32 %s584, 1
      %p588 = scmp.eq.s32.totalorder %s47, 1
      %p589 = scmp.ne.s32.totalorder %s584, %s586
      %p590 = scmp.eq.s32.totalorder %s47, 0
      %p591 = por %p589, %p590
      %p592 = scmp.ne.s32.totalorder %s584, %s586
      %p593 = scmp.eq.s32.totalorder %s52, 1
      %p594 = por %p592, %p593
      %p595 = scmp.ne.s32.totalorder %s586, %s587
      %p596 = scmp.eq.s32.totalorder %s52, 0
      %p597 = por %p595, %p596
      %p598 = scmp.ne.s32.totalorder %s586, %s587
      %p599 = scmp.eq.s32.totalorder %s53, 1
      %p600 = por %p598, %p599
      %p602 = scmp.ne.s32.totalorder %s587, %s601
      %p603 = scmp.eq.s32.totalorder %s53, 0
      %p604 = por %p602, %p603
      %s605 = ssub.s32 %s47, %s54
      %p606 = scmp.eq.s32.totalorder %s605, 0
      %s608 = sadd.s32 %s607, 1
      %s609 = scalar_select %p606, %s607, %s608
      %p612 = pneg %p606
      %p613 = scmp.eq.s32.totalorder %s47, 1
      %p614 = por %p612, %p613
      %p615 = scmp.ne.s32.totalorder %s607, %s610
      %p616 = scmp.eq.s32.totalorder %s47, 0
      %p617 = por %p615, %p616
      %p618 = scmp.ne.s32.totalorder %s607, %s610
      %p619 = scmp.eq.s32.totalorder %s52, 1
      %p620 = por %p618, %p619
      %p621 = scmp.ne.s32.totalorder %s610, %s611
      %p622 = scmp.eq.s32.totalorder %s52, 0
      %p623 = por %p621, %p622
      %p624 = scmp.ne.s32.totalorder %s610, %s611
      %p625 = scmp.eq.s32.totalorder %s53, 1
      %p626 = por %p624, %p625
      %p628 = scmp.ne.s32.totalorder %s611, %s627
      %p629 = scmp.eq.s32.totalorder %s53, 0
      %p630 = por %p628, %p629
      %p631 = scmp.le.s32.totalorder 1, %s47
      %p632 = scmp.lt.s32.totalorder %s47, 3
      %p633 = pnand %p631, %p632
      %p634 = pneg %p633
      // Predicated region
      $region9: #{tpu_custom_call.1} parent=5 // pred_check
        _
      $region10: #{tpu_custom_call.1} parent=5 // pred_check_branch
        %636 = sbr.rel (%p633) target = $region12
      $region11: #{tpu_custom_call.1} parent=5 // pred_region
        %s637 = ssub.s32 %s47, 1
        // Predicated region
        $region13: #{tpu_custom_call.1} parent=11 // pred_check
          %p638 = pneg %p198
        $region14: #{tpu_custom_call.1} parent=11 // pred_check_branch
          %640 = sbr.rel (%p638) target = $region16
        $region15: #{tpu_custom_call.1} parent=11 // pred_region
          _
        $region16: #{tpu_custom_call.1} parent=11 // pred_fallthru
          _
        // Predicated region
        $region17: #{tpu_custom_call.1} parent=11 // pred_check
          %p641 = pneg %p219
        $region18: #{tpu_custom_call.1} parent=11 // pred_check_branch
          %643 = sbr.rel (%p641) target = $region20
        $region19: #{tpu_custom_call.1} parent=11 // pred_region
          _
        $region20: #{tpu_custom_call.1} parent=11 // pred_fallthru
          _
        // Predicated region
        $region21: #{tpu_custom_call.1} parent=11 // pred_check
          %p644 = pneg %p240
        $region22: #{tpu_custom_call.1} parent=11 // pred_check_branch
          %646 = sbr.rel (%p644) target = $region24
        $region23: #{tpu_custom_call.1} parent=11 // pred_region
          _
        $region24: #{tpu_custom_call.1} parent=11 // pred_fallthru
          _
        // Predicated region
        $region25: #{tpu_custom_call.1} parent=11 // pred_check
          %p647 = pneg %p261
        $region26: #{tpu_custom_call.1} parent=11 // pred_check_branch
          %649 = sbr.rel (%p647) target = $region28
        $region27: #{tpu_custom_call.1} parent=11 // pred_region
          _
        $region28: #{tpu_custom_call.1} parent=11 // pred_fallthru
          _
        // Predicated region
        $region29: #{tpu_custom_call.1} parent=11 // pred_check
          %p650 = pneg %p282
        $region30: #{tpu_custom_call.1} parent=11 // pred_check_branch
          %652 = sbr.rel (%p650) target = $region32
        $region31: #{tpu_custom_call.1} parent=11 // pred_region
          %s654 = ssub.s32 16, 16
          %655 = vsyncadd [#allocation12], %s654
          %s657 = sshll.u32 [#allocation11], 4
          %s658 = int_to_ptr.vmem [resolvable:$true] %s657
          %660 = dma.hbm_to_vmem [thread:$0]  %s9, 16, %s658, [#allocation12]
        $region32: #{tpu_custom_call.1} parent=11 // pred_fallthru
          _
        // Predicated region
        $region33: #{tpu_custom_call.1} parent=11 // pred_check
          %p661 = pneg %p303
        $region34: #{tpu_custom_call.1} parent=11 // pred_check_branch
          %663 = sbr.rel (%p661) target = $region36
        $region35: #{tpu_custom_call.1} parent=11 // pred_region
          %s665 = ssub.s32 16, 16
          %666 = vsyncadd [#allocation12], %s665
          %s668 = sshll.u32 [#allocation13], 4
          %s669 = int_to_ptr.vmem [resolvable:$true] %s668
          %671 = dma.hbm_to_vmem [thread:$0]  %s10, 16, %s669, [#allocation12]
        $region36: #{tpu_custom_call.1} parent=11 // pred_fallthru
          _
        // Predicated region
        $region37: #{tpu_custom_call.1} parent=11 // pred_check
          %p672 = pneg %p324
        $region38: #{tpu_custom_call.1} parent=11 // pred_check_branch
          %674 = sbr.rel (%p672) target = $region40
        $region39: #{tpu_custom_call.1} parent=11 // pred_region
          %s676 = ssub.s32 16, 16
          %677 = vsyncadd [#allocation15], %s676
          %s679 = sshll.u32 [#allocation14], 4
          %s680 = int_to_ptr.vmem [resolvable:$true] %s679
          %682 = dma.hbm_to_vmem [thread:$0]  %s11, 16, %s680, [#allocation15]
        $region40: #{tpu_custom_call.1} parent=11 // pred_fallthru
          _
        // Predicated region
        $region41: #{tpu_custom_call.1} parent=11 // pred_check
          %p683 = pneg %p345
        $region42: #{tpu_custom_call.1} parent=11 // pred_check_branch
          %685 = sbr.rel (%p683) target = $region44
        $region43: #{tpu_custom_call.1} parent=11 // pred_region
          _
        $region44: #{tpu_custom_call.1} parent=11 // pred_fallthru
          _
        // Predicated region
        $region45: #{tpu_custom_call.1} parent=11 // pred_check
          %p686 = pneg %p366
        $region46: #{tpu_custom_call.1} parent=11 // pred_check_branch
          %688 = sbr.rel (%p686) target = $region48
        $region47: #{tpu_custom_call.1} parent=11 // pred_region
          _
        $region48: #{tpu_custom_call.1} parent=11 // pred_fallthru
          _
        // Predicated region
        $region49: #{tpu_custom_call.1} parent=11 // pred_check
          %p689 = pneg %p387
        $region50: #{tpu_custom_call.1} parent=11 // pred_check_branch
          %691 = sbr.rel (%p689) target = $region52
        $region51: #{tpu_custom_call.1} parent=11 // pred_region
          %s693 = ssub.s32 512, 512
          %694 = vsyncadd [#allocation15], %s693
          %s695 = sshll.u32 [#allocation16], 4
          %s696 = int_to_ptr.vmem [resolvable:$true] %s695
          %701 = dma.hbm_to_vmem [thread:$0]  %s14, 512, %s696, [#allocation15], 128, 128, 8
        $region52: #{tpu_custom_call.1} parent=11 // pred_fallthru
          _
        // Predicated region
        $region53: #{tpu_custom_call.1} parent=11 // pred_check
          %p702 = pneg %p408
        $region54: #{tpu_custom_call.1} parent=11 // pred_check_branch
          %704 = sbr.rel (%p702) target = $region56
        $region55: #{tpu_custom_call.1} parent=11 // pred_region
          %s706 = ssub.s32 512, 512
          %707 = vsyncadd [#allocation18], %s706
          %s708 = sshll.u32 [#allocation17], 4
          %s709 = int_to_ptr.vmem [resolvable:$true] %s708
          %714 = dma.hbm_to_vmem [thread:$0]  %s15, 512, %s709, [#allocation18], 128, 128, 8
        $region56: #{tpu_custom_call.1} parent=11 // pred_fallthru
          _
        // Predicated region
        $region57: #{tpu_custom_call.1} parent=11 // pred_check
          %p715 = pneg %p429
        $region58: #{tpu_custom_call.1} parent=11 // pred_check_branch
          %717 = sbr.rel (%p715) target = $region60
        $region59: #{tpu_custom_call.1} parent=11 // pred_region
          %s719 = ssub.s32 16, 16
          %720 = vsyncadd [#allocation18], %s719
          %s722 = sshll.u32 [#allocation19], 4
          %s723 = int_to_ptr.vmem [resolvable:$true] %s722
          %725 = dma.hbm_to_vmem [thread:$0]  %s16, 16, %s723, [#allocation18]
        $region60: #{tpu_custom_call.1} parent=11 // pred_fallthru
          _
        // Predicated region
        $region61: #{tpu_custom_call.1} parent=11 // pred_check
          %p726 = pneg %p450
        $region62: #{tpu_custom_call.1} parent=11 // pred_check_branch
          %728 = sbr.rel (%p726) target = $region64
        $region63: #{tpu_custom_call.1} parent=11 // pred_region
          %s730 = ssub.s32 16, 16
          %731 = vsyncadd [#allocation21], %s730
          %s733 = sshll.u32 [#allocation20], 4
          %s734 = int_to_ptr.vmem [resolvable:$true] %s733
          %736 = dma.hbm_to_vmem [thread:$0]  %s17, 16, %s734, [#allocation21]
        $region64: #{tpu_custom_call.1} parent=11 // pred_fallthru
          _
        // Predicated region
        $region65: #{tpu_custom_call.1} parent=11 // pred_check
          %p737 = pneg %p471
        $region66: #{tpu_custom_call.1} parent=11 // pred_check_branch
          %739 = sbr.rel (%p737) target = $region68
        $region67: #{tpu_custom_call.1} parent=11 // pred_region
          _
        $region68: #{tpu_custom_call.1} parent=11 // pred_fallthru
          _
        // Predicated region
        $region69: #{tpu_custom_call.1} parent=11 // pred_check
          %p740 = pneg %p492
        $region70: #{tpu_custom_call.1} parent=11 // pred_check_branch
          %742 = sbr.rel (%p740) target = $region72
        $region71: #{tpu_custom_call.1} parent=11 // pred_region
          _
        $region72: #{tpu_custom_call.1} parent=11 // pred_fallthru
          _
        // Predicated region
        $region73: #{tpu_custom_call.1} parent=11 // pred_check
          %p743 = pneg %p513
        $region74: #{tpu_custom_call.1} parent=11 // pred_check_branch
          %745 = sbr.rel (%p743) target = $region76
        $region75: #{tpu_custom_call.1} parent=11 // pred_region
          _
        $region76: #{tpu_custom_call.1} parent=11 // pred_fallthru
          _
        // Predicated region
        $region77: #{tpu_custom_call.1} parent=11 // pred_check
          %p746 = pneg %p534
        $region78: #{tpu_custom_call.1} parent=11 // pred_check_branch
          %748 = sbr.rel (%p746) target = $region80
        $region79: #{tpu_custom_call.1} parent=11 // pred_region
          %s750 = ssub.s32 512, 512
          %751 = vsyncadd [#allocation21], %s750
          %s752 = sshll.u32 [#allocation22], 4
          %s753 = int_to_ptr.vmem [resolvable:$true] %s752
          %758 = dma.hbm_to_vmem [thread:$0]  %s21, 512, %s753, [#allocation21], 128, 128, 8
        $region80: #{tpu_custom_call.1} parent=11 // pred_fallthru
          _
        // Predicated region
        $region81: #{tpu_custom_call.1} parent=11 // pred_check
          %p759 = pneg %p555
        $region82: #{tpu_custom_call.1} parent=11 // pred_check_branch
          %761 = sbr.rel (%p759) target = $region84
        $region83: #{tpu_custom_call.1} parent=11 // pred_region
          _
        $region84: #{tpu_custom_call.1} parent=11 // pred_fallthru
          _
        // Predicated region
        $region85: #{tpu_custom_call.1} parent=11 // pred_check
          %p762 = pneg %p576
        $region86: #{tpu_custom_call.1} parent=11 // pred_check_branch
          %764 = sbr.rel (%p762) target = $region88
        $region87: #{tpu_custom_call.1} parent=11 // pred_region
          _
        $region88: #{tpu_custom_call.1} parent=11 // pred_fallthru
          _
        // Predicated region
        $region89: #{tpu_custom_call.1} parent=11 // pred_check
          %p765 = pneg %p597
        $region90: #{tpu_custom_call.1} parent=11 // pred_check_branch
          %767 = sbr.rel (%p765) target = $region92
        $region91: #{tpu_custom_call.1} parent=11 // pred_region
          _
        $region92: #{tpu_custom_call.1} parent=11 // pred_fallthru
          _
      $region12: #{tpu_custom_call.1} parent=5 // pred_fallthru
        _
      %p768 = scmp.lt.s32.totalorder %s47, 2
      // Predicated region
      $region93: #{tpu_custom_call.1} parent=5 // pred_check
        %p769 = pneg %p768
      $region94: #{tpu_custom_call.1} parent=5 // pred_check_branch
        %771 = sbr.rel (%p769) target = $region96
      $region95: #{tpu_custom_call.1} parent=5 // pred_region
        // Predicated region
        $region97: #{tpu_custom_call.1} parent=95 // pred_check
          %p772 = pneg %p67
        $region98: #{tpu_custom_call.1} parent=95 // pred_check_branch
          %774 = sbr.rel (%p772) target = $region100
        $region99: #{tpu_custom_call.1} parent=95 // pred_region
          %s775 = sand.u32 %s57, 1
          %s776 = scalar_lea.sflag [#allocation3], %s775
          %s777 = sand.u32 %s57, 1
          %s778 = smul.addr %s777, 8
          %s779 = scalar_lea.vmem [#allocation2], %s778
          %s781 = ssub.s32 128, 128
          %782 = vsyncadd %s776, %s781
          %s783 = smul.addr %s47, 128
          %s784 = scalar_lea.hbm %s0, %s783
          %s786 = sshll.u32 %s779, 4
          %s787 = int_to_ptr.vmem [resolvable:$true] %s786
          %789 = dma.hbm_to_vmem [thread:$0]  %s784, 128, %s787, %s776
        $region100: #{tpu_custom_call.1} parent=95 // pred_fallthru
          _
        // Predicated region
        $region101: #{tpu_custom_call.1} parent=95 // pred_check
          %p790 = pneg %p93
        $region102: #{tpu_custom_call.1} parent=95 // pred_check_branch
          %792 = sbr.rel (%p790) target = $region104
        $region103: #{tpu_custom_call.1} parent=95 // pred_region
          %s793 = sand.u32 %s47, 1
          %s794 = scalar_lea.sflag [#allocation6], %s793
          %s795 = sand.u32 %s83, 1
          %s796 = smul.addr %s795, 8
          %s797 = scalar_lea.vmem [#allocation5], %s796
          %s799 = ssub.s32 128, 128
          %800 = vsyncadd %s794, %s799
          %s801 = smul.addr %s47, 128
          %s802 = scalar_lea.hbm %s1, %s801
          %s804 = sshll.u32 %s797, 4
          %s805 = int_to_ptr.vmem [resolvable:$true] %s804
          %807 = dma.hbm_to_vmem [thread:$0]  %s802, 128, %s805, %s794
        $region104: #{tpu_custom_call.1} parent=95 // pred_fallthru
          _
        // Predicated region
        $region105: #{tpu_custom_call.1} parent=95 // pred_check
          %p808 = pneg %p119
        $region106: #{tpu_custom_call.1} parent=95 // pred_check_branch
          %810 = sbr.rel (%p808) target = $region108
        $region107: #{tpu_custom_call.1} parent=95 // pred_region
          %s811 = sand.u32 %s47, 1
          %s812 = scalar_lea.sflag [#allocation6], %s811
          %s813 = sand.u32 %s109, 1
          %s814 = smul.addr %s813, 8
          %s815 = scalar_lea.vmem [#allocation7], %s814
          %s817 = ssub.s32 128, 128
          %818 = vsyncadd %s812, %s817
          %s819 = smul.addr %s47, 128
          %s820 = scalar_lea.hbm %s2, %s819
          %s822 = sshll.u32 %s815, 4
          %s823 = int_to_ptr.vmem [resolvable:$true] %s822
          %825 = dma.hbm_to_vmem [thread:$0]  %s820, 128, %s823, %s812
        $region108: #{tpu_custom_call.1} parent=95 // pred_fallthru
          _
        // Predicated region
        $region109: #{tpu_custom_call.1} parent=95 // pred_check
          %p826 = pneg %p145
        $region110: #{tpu_custom_call.1} parent=95 // pred_check_branch
          %828 = sbr.rel (%p826) target = $region112
        $region111: #{tpu_custom_call.1} parent=95 // pred_region
          %s829 = sand.u32 %s47, 1
          %s830 = scalar_lea.sflag [#allocation9], %s829
          %s831 = sand.u32 %s135, 1
          %s832 = smul.addr %s831, 8
          %s833 = scalar_lea.vmem [#allocation8], %s832
          %s835 = ssub.s32 128, 128
          %836 = vsyncadd %s830, %s835
          %s837 = smul.addr %s47, 128
          %s838 = scalar_lea.hbm %s3, %s837
          %s840 = sshll.u32 %s833, 4
          %s841 = int_to_ptr.vmem [resolvable:$true] %s840
          %843 = dma.hbm_to_vmem [thread:$0]  %s838, 128, %s841, %s830
        $region112: #{tpu_custom_call.1} parent=95 // pred_fallthru
          _
        // Predicated region
        $region113: #{tpu_custom_call.1} parent=95 // pred_check
          %p844 = pneg %p171
        $region114: #{tpu_custom_call.1} parent=95 // pred_check_branch
          %846 = sbr.rel (%p844) target = $region116
        $region115: #{tpu_custom_call.1} parent=95 // pred_region
          %s847 = sand.u32 %s47, 1
          %s848 = scalar_lea.sflag [#allocation9], %s847
          %s849 = sand.u32 %s161, 1
          %s850 = smul.addr %s849, 8
          %s851 = scalar_lea.vmem [#allocation10], %s850
          %s853 = ssub.s32 128, 128
          %854 = vsyncadd %s848, %s853
          %s855 = smul.addr %s47, 128
          %s856 = scalar_lea.hbm %s4, %s855
          %s858 = sshll.u32 %s851, 4
          %s859 = int_to_ptr.vmem [resolvable:$true] %s858
          %861 = dma.hbm_to_vmem [thread:$0]  %s856, 128, %s859, %s848
        $region116: #{tpu_custom_call.1} parent=95 // pred_fallthru
          _
      $region96: #{tpu_custom_call.1} parent=5 // pred_fallthru
        _
      %p862 = scmp.le.s32.totalorder 1, %s47
      %p863 = scmp.lt.s32.totalorder %s47, 3
      %p864 = pnand %p862, %p863
      %p865 = pneg %p864
      // Predicated region
      $region117: #{tpu_custom_call.1} parent=5 // pred_check
        _
      $region118: #{tpu_custom_call.1} parent=5 // pred_check_branch
        %867 = sbr.rel (%p864) target = $region120
      $region119: #{tpu_custom_call.1} parent=5 // pred_region
        %s868 = ssub.s32 %s47, 1
        %s869 = sand.u32 %s60, 1
        %s870 = scalar_lea.sflag [#allocation3], %s869
        %s871 = sand.u32 %s60, 1
        %s872 = smul.addr %s871, 8
        %s873 = scalar_lea.vmem [#allocation2], %s872
        // Predicated region
        $region121: #{tpu_custom_call.1} parent=119 // pred_check
          %p874 = pneg %p73
        $region122: #{tpu_custom_call.1} parent=119 // pred_check_branch
          %876 = sbr.rel (%p874) target = $region124
        $region123: #{tpu_custom_call.1} parent=119 // pred_region
          %877 = dma.done %s870, 128
        $region124: #{tpu_custom_call.1} parent=119 // pred_fallthru
          _
        %s878 = sand.u32 %s52, 1
        %s879 = scalar_lea.sflag [#allocation6], %s878
        %s880 = sand.u32 %s86, 1
        %s881 = smul.addr %s880, 8
        %s882 = scalar_lea.vmem [#allocation5], %s881
        // Predicated region
        $region125: #{tpu_custom_call.1} parent=119 // pred_check
          %p883 = pneg %p99
        $region126: #{tpu_custom_call.1} parent=119 // pred_check_branch
          %885 = sbr.rel (%p883) target = $region128
        $region127: #{tpu_custom_call.1} parent=119 // pred_region
          %886 = dma.done %s879, 128
        $region128: #{tpu_custom_call.1} parent=119 // pred_fallthru
          _
        %s887 = sand.u32 %s52, 1
        %s888 = scalar_lea.sflag [#allocation6], %s887
        %s889 = sand.u32 %s112, 1
        %s890 = smul.addr %s889, 8
        %s891 = scalar_lea.vmem [#allocation7], %s890
        // Predicated region
        $region129: #{tpu_custom_call.1} parent=119 // pred_check
          %p892 = pneg %p125
        $region130: #{tpu_custom_call.1} parent=119 // pred_check_branch
          %894 = sbr.rel (%p892) target = $region132
        $region131: #{tpu_custom_call.1} parent=119 // pred_region
          %895 = dma.done %s888, 128
        $region132: #{tpu_custom_call.1} parent=119 // pred_fallthru
          _
        %s896 = sand.u32 %s52, 1
        %s897 = scalar_lea.sflag [#allocation9], %s896
        %s898 = sand.u32 %s138, 1
        %s899 = smul.addr %s898, 8
        %s900 = scalar_lea.vmem [#allocation8], %s899
        // Predicated region
        $region133: #{tpu_custom_call.1} parent=119 // pred_check
          %p901 = pneg %p151
        $region134: #{tpu_custom_call.1} parent=119 // pred_check_branch
          %903 = sbr.rel (%p901) target = $region136
        $region135: #{tpu_custom_call.1} parent=119 // pred_region
          %904 = dma.done %s897, 128
        $region136: #{tpu_custom_call.1} parent=119 // pred_fallthru
          _
        %s905 = sand.u32 %s52, 1
        %s906 = scalar_lea.sflag [#allocation9], %s905
        %s907 = sand.u32 %s164, 1
        %s908 = smul.addr %s907, 8
        %s909 = scalar_lea.vmem [#allocation10], %s908
        // Predicated region
        $region137: #{tpu_custom_call.1} parent=119 // pred_check
          %p910 = pneg %p177
        $region138: #{tpu_custom_call.1} parent=119 // pred_check_branch
          %912 = sbr.rel (%p910) target = $region140
        $region139: #{tpu_custom_call.1} parent=119 // pred_region
          %913 = dma.done %s906, 128
        $region140: #{tpu_custom_call.1} parent=119 // pred_fallthru
          _
        // Predicated region
        $region141: #{tpu_custom_call.1} parent=119 // pred_check
          %p914 = pneg %p282
        $region142: #{tpu_custom_call.1} parent=119 // pred_check_branch
          %916 = sbr.rel (%p914) target = $region144
        $region143: #{tpu_custom_call.1} parent=119 // pred_region
          %917 = dma.done [#allocation12], 16
        $region144: #{tpu_custom_call.1} parent=119 // pred_fallthru
          _
        // Predicated region
        $region145: #{tpu_custom_call.1} parent=119 // pred_check
          %p918 = pneg %p303
        $region146: #{tpu_custom_call.1} parent=119 // pred_check_branch
          %920 = sbr.rel (%p918) target = $region148
        $region147: #{tpu_custom_call.1} parent=119 // pred_region
          %921 = dma.done [#allocation12], 16
        $region148: #{tpu_custom_call.1} parent=119 // pred_fallthru
          _
        // Predicated region
        $region149: #{tpu_custom_call.1} parent=119 // pred_check
          %p922 = pneg %p324
        $region150: #{tpu_custom_call.1} parent=119 // pred_check_branch
          %924 = sbr.rel (%p922) target = $region152
        $region151: #{tpu_custom_call.1} parent=119 // pred_region
          %925 = dma.done [#allocation15], 16
        $region152: #{tpu_custom_call.1} parent=119 // pred_fallthru
          _
        // Predicated region
        $region153: #{tpu_custom_call.1} parent=119 // pred_check
          %p926 = pneg %p387
        $region154: #{tpu_custom_call.1} parent=119 // pred_check_branch
          %928 = sbr.rel (%p926) target = $region156
        $region155: #{tpu_custom_call.1} parent=119 // pred_region
          %929 = dma.done [#allocation15], 512
        $region156: #{tpu_custom_call.1} parent=119 // pred_fallthru
          _
        // Predicated region
        $region157: #{tpu_custom_call.1} parent=119 // pred_check
          %p930 = pneg %p408
        $region158: #{tpu_custom_call.1} parent=119 // pred_check_branch
          %932 = sbr.rel (%p930) target = $region160
        $region159: #{tpu_custom_call.1} parent=119 // pred_region
          %933 = dma.done [#allocation18], 512
        $region160: #{tpu_custom_call.1} parent=119 // pred_fallthru
          _
        // Predicated region
        $region161: #{tpu_custom_call.1} parent=119 // pred_check
          %p934 = pneg %p429
        $region162: #{tpu_custom_call.1} parent=119 // pred_check_branch
          %936 = sbr.rel (%p934) target = $region164
        $region163: #{tpu_custom_call.1} parent=119 // pred_region
          %937 = dma.done [#allocation18], 16
        $region164: #{tpu_custom_call.1} parent=119 // pred_fallthru
          _
        // Predicated region
        $region165: #{tpu_custom_call.1} parent=119 // pred_check
          %p938 = pneg %p450
        $region166: #{tpu_custom_call.1} parent=119 // pred_check_branch
          %940 = sbr.rel (%p938) target = $region168
        $region167: #{tpu_custom_call.1} parent=119 // pred_region
          %941 = dma.done [#allocation21], 16
        $region168: #{tpu_custom_call.1} parent=119 // pred_fallthru
          _
        // Predicated region
        $region169: #{tpu_custom_call.1} parent=119 // pred_check
          %p942 = pneg %p534
        $region170: #{tpu_custom_call.1} parent=119 // pred_check_branch
          %944 = sbr.rel (%p942) target = $region172
        $region171: #{tpu_custom_call.1} parent=119 // pred_region
          %945 = dma.done [#allocation21], 512
        $region172: #{tpu_custom_call.1} parent=119 // pred_fallthru
          _
        %s946 = sand.u32 %s60, 1
        %s947 = scalar_lea.sflag [#allocation3], %s946
        %s948 = sand.u32 %s60, 1
        %s949 = smul.addr %s948, 8
        %s950 = scalar_lea.vmem [#allocation2], %s949
        %p951 = pneg %p73
        %p952 = pneg %p70
        %s953 = sand.u32 %s52, 1
        %s954 = scalar_lea.sflag [#allocation6], %s953
        %s955 = sand.u32 %s86, 1
        %s956 = smul.addr %s955, 8
        %s957 = scalar_lea.vmem [#allocation5], %s956
        %p958 = pneg %p99
        %p959 = pneg %p96
        %s960 = sand.u32 %s52, 1
        %s961 = scalar_lea.sflag [#allocation6], %s960
        %s962 = sand.u32 %s112, 1
        %s963 = smul.addr %s962, 8
        %s964 = scalar_lea.vmem [#allocation7], %s963
        %p965 = pneg %p125
        %p966 = pneg %p122
        %s967 = sand.u32 %s52, 1
        %s968 = scalar_lea.sflag [#allocation9], %s967
        %s969 = sand.u32 %s138, 1
        %s970 = smul.addr %s969, 8
        %s971 = scalar_lea.vmem [#allocation8], %s970
        %p972 = pneg %p151
        %p973 = pneg %p148
        %s974 = sand.u32 %s52, 1
        %s975 = scalar_lea.sflag [#allocation9], %s974
        %s976 = sand.u32 %s164, 1
        %s977 = smul.addr %s976, 8
        %s978 = scalar_lea.vmem [#allocation10], %s977
        %p979 = pneg %p177
        %p980 = pneg %p174
        %p981 = pneg %p198
        %p982 = pneg %p195
        %p983 = pneg %p219
        %p984 = pneg %p216
        %p985 = pneg %p240
        %p986 = pneg %p237
        %p987 = pneg %p261
        %p988 = pneg %p258
        %p989 = pneg %p282
        %p990 = pneg %p279
        %p991 = pneg %p303
        %p992 = pneg %p300
        %p993 = pneg %p324
        %p994 = pneg %p321
        %p995 = pneg %p345
        %p996 = pneg %p342
        %p997 = pneg %p366
        %p998 = pneg %p363
        %p999 = pneg %p387
        %p1000 = pneg %p384
        %p1001 = pneg %p408
        %p1002 = pneg %p405
        %p1003 = pneg %p429
        %p1004 = pneg %p426
        %p1005 = pneg %p450
        %p1006 = pneg %p447
        %p1007 = pneg %p471
        %p1008 = pneg %p468
        %p1009 = pneg %p492
        %p1010 = pneg %p489
        %p1011 = pneg %p513
        %p1012 = pneg %p510
        %p1013 = pneg %p534
        %p1014 = pneg %p531
        %p1015 = pneg %p555
        %p1016 = pneg %p552
        %p1017 = pneg %p576
        %p1018 = pneg %p573
        %p1019 = pneg %p597
        %p1020 = pneg %p594
        %p1021 = pneg %p623
        %p1022 = pneg %p620
        %s1023 = sand.u32 %s610, 1
        %s1024 = scalar_lea.sflag [#allocation4], %s1023
        %s1025 = sand.u32 %s610, 1
        %s1026 = smul.addr %s1025, 8
        %s1027 = scalar_lea.vmem [#allocation23], %s1026
        %v1028 = vld [vmem:[%s873] sm:$0xff]
        %v1029 = vld [vmem:[%s882] sm:$0xff]
        %v1030 = vld [vmem:[%s891] sm:$0xff]
        %v1031 = vld [vmem:[%s900] sm:$0xff]
        %v1032 = vld [vmem:[%s5] sm:$0xff]
        %v1033 = vld [vmem:[%s5 + $0x8] sm:$0xff]
        %v1034 = vld [vmem:[%s5 + $0x10] sm:$0xff]
        %v1035 = vld [vmem:[%s5 + $0x18] sm:$0xff]
        %v1036 = vld [vmem:[%s6] sm:$0xff]
        %v1037 = vld [vmem:[%s6 + $0x8] sm:$0xff]
        %v1038 = vld [vmem:[%s6 + $0x10] sm:$0xff]
        %v1039 = vld [vmem:[%s6 + $0x18] sm:$0xff]
        %v1040 = vld [vmem:[%s7] sm:$0xff]
        %v1041 = vld [vmem:[%s7 + $0x8] sm:$0xff]
        %v1042 = vld [vmem:[%s7 + $0x10] sm:$0xff]
        %v1043 = vld [vmem:[%s7 + $0x18] sm:$0xff]
        %v1044 = vld [vmem:[%s8] sm:$0xff]
        %v1045 = vld [vmem:[%s8 + $0x8] sm:$0xff]
        %v1046 = vld [vmem:[%s8 + $0x10] sm:$0xff]
        %v1047 = vld [vmem:[%s8 + $0x18] sm:$0xff]
        %v1048 = vld [vmem:[#allocation11] sm:$0x1]
        %vm1049 = vcmask 261120
        %v1051 = vsel %vm1049, %v1028, 0
        %v1054 = vsel %vm1049, %v1032, 0
        %v1057 = vsel %vm1049, %v1033, 0
        %v1060 = vsel %vm1049, %v1034, 0
        %v1063 = vsel %vm1049, %v1035, 0
        %1065 = vmatprep.subr.mxu0 0.0
        %1066 = vmatpush1.xpose.msra.mxu0 %v1054
        %1067 = vmatprep.subr.mxu0 0.0
        %1068 = vmatpush1.xpose.msra.mxu0 %v1057
        %1069 = vmatprep.subr.mxu0 0.0
        %1070 = vmatpush1.xpose.msra.mxu0 %v1060
        %1071 = vmatprep.subr.mxu0 0.0
        %1072 = vmatpush1.xpose.msra.mxu0 %v1063
        %1073 = vmatprep.subr.mxu0 0.0
        %1074 = vmatpush1.xpose.msra.mxu0 0.0
        %1075 = vmatprep.subr.mxu0 0.0
        %1076 = vmatpush1.xpose.msra.mxu0 0.0
        %1077 = vmatprep.subr.mxu0 0.0
        %1078 = vmatpush1.xpose.msra.mxu0 0.0
        %1079 = vmatprep.subr.mxu0 0.0
        %1080 = vmatpush1.xpose.msra.mxu0 0.0
        %1081 = vmatprep.subr.mxu0 0.0
        %1082 = vmatpush1.xpose.msra.mxu0 0.0
        %1083 = vmatprep.subr.mxu0 0.0
        %1084 = vmatpush1.xpose.msra.mxu0 0.0
        %1085 = vmatprep.subr.mxu0 0.0
        %1086 = vmatpush1.xpose.msra.mxu0 0.0
        %1087 = vmatprep.subr.mxu0 0.0
        %1088 = vmatpush1.xpose.msra.mxu0 0.0
        %1089 = vmatprep.subr.mxu0 0.0
        %1090 = vmatpush1.xpose.msra.mxu0 0.0
        %1091 = vmatprep.subr.mxu0 0.0
        %1092 = vmatpush1.xpose.msra.mxu0 0.0
        %1093 = vmatprep.subr.mxu0 0.0
        %1094 = vmatpush1.xpose.msra.mxu0 0.0
        %1095 = vmatprep.subr.mxu0 0.0
        %1096 = vmatpush1.xpose.msra.mxu0 0.0
        %1097 = vmatprep.subr.mxu0 0.0
        %1098 = vmatpush1.xpose.msra.mxu0 0.0
        %1099 = vmatprep.subr.mxu0 0.0
        %1100 = vmatpush1.xpose.msra.mxu0 0.0
        %1101 = vmatprep.subr.mxu0 0.0
        %1102 = vmatpush1.xpose.msra.mxu0 0.0
        %1103 = vmatprep.subr.mxu0 0.0
        %1104 = vmatpush1.xpose.msra.mxu0 0.0
        %1105 = vmatprep.subr.mxu0 0.0
        %1106 = vmatpush1.xpose.msra.mxu0 0.0
        %1107 = vmatprep.subr.mxu0 0.0
        %1108 = vmatpush1.xpose.msra.mxu0 0.0
        %1109 = vmatprep.subr.mxu0 0.0
        %1110 = vmatpush1.xpose.msra.mxu0 0.0
        %1111 = vmatprep.subr.mxu0 0.0
        %1112 = vmatpush1.xpose.msra.mxu0 0.0
        %1113 = vmatprep.subr.mxu0 0.0
        %1114 = vmatpush1.xpose.msra.mxu0 0.0
        %1115 = vmatprep.subr.mxu0 0.0
        %1116 = vmatpush1.xpose.msra.mxu0 0.0
        %1117 = vmatprep.subr.mxu0 0.0
        %1118 = vmatpush1.xpose.msra.mxu0 0.0
        %1119 = vmatprep.subr.mxu0 0.0
        %1120 = vmatpush1.xpose.msra.mxu0 0.0
        %1121 = vmatprep.subr.mxu0 0.0
        %1122 = vmatpush1.xpose.msra.mxu0 0.0
        %1123 = vmatprep.subr.mxu0 0.0
        %1124 = vmatpush1.xpose.msra.mxu0 0.0
        %1125 = vmatprep.subr.mxu0 0.0
        %1126 = vmatpush1.xpose.msra.mxu0 0.0
        %1127 = vmatprep.subr.mxu0 0.0
        %1128 = vmatpush1.xpose.msra.mxu0 0.0
        %1129 = vmatprep.mubr.f32.mxu0 0.0
        %1130 = vmatmul.mubr.f32.gmra.mrb[0].mxu0 %v1051
        %v1131 = vpop.f32.mrb[0].mxu0
        %v1132 = vadd.f32 0.0, %v1131
        %v1133 = vpop.f32.mrb[0].mxu0
        %1134 = vdwg.mxu0
        %v1136 = vsel %vm1049, %v1036, 0
        %v1139 = vsel %vm1049, %v1037, 0
        %v1142 = vsel %vm1049, %v1038, 0
        %v1145 = vsel %vm1049, %v1039, 0
        %1147 = vmatprep.subr.mxu0 0.0
        %1148 = vmatpush1.xpose.msra.mxu0 %v1136
        %1149 = vmatprep.subr.mxu0 0.0
        %1150 = vmatpush1.xpose.msra.mxu0 %v1139
        %1151 = vmatprep.subr.mxu0 0.0
        %1152 = vmatpush1.xpose.msra.mxu0 %v1142
        %1153 = vmatprep.subr.mxu0 0.0
        %1154 = vmatpush1.xpose.msra.mxu0 %v1145
        %1155 = vmatprep.subr.mxu0 0.0
        %1156 = vmatpush1.xpose.msra.mxu0 0.0
        %1157 = vmatprep.subr.mxu0 0.0
        %1158 = vmatpush1.xpose.msra.mxu0 0.0
        %1159 = vmatprep.subr.mxu0 0.0
        %1160 = vmatpush1.xpose.msra.mxu0 0.0
        %1161 = vmatprep.subr.mxu0 0.0
        %1162 = vmatpush1.xpose.msra.mxu0 0.0
        %1163 = vmatprep.subr.mxu0 0.0
        %1164 = vmatpush1.xpose.msra.mxu0 0.0
        %1165 = vmatprep.subr.mxu0 0.0
        %1166 = vmatpush1.xpose.msra.mxu0 0.0
        %1167 = vmatprep.subr.mxu0 0.0
        %1168 = vmatpush1.xpose.msra.mxu0 0.0
        %1169 = vmatprep.subr.mxu0 0.0
        %1170 = vmatpush1.xpose.msra.mxu0 0.0
        %1171 = vmatprep.subr.mxu0 0.0
        %1172 = vmatpush1.xpose.msra.mxu0 0.0
        %1173 = vmatprep.subr.mxu0 0.0
        %1174 = vmatpush1.xpose.msra.mxu0 0.0
        %1175 = vmatprep.subr.mxu0 0.0
        %1176 = vmatpush1.xpose.msra.mxu0 0.0
        %1177 = vmatprep.subr.mxu0 0.0
        %1178 = vmatpush1.xpose.msra.mxu0 0.0
        %1179 = vmatprep.subr.mxu0 0.0
        %1180 = vmatpush1.xpose.msra.mxu0 0.0
        %1181 = vmatprep.subr.mxu0 0.0
        %1182 = vmatpush1.xpose.msra.mxu0 0.0
        %1183 = vmatprep.subr.mxu0 0.0
        %1184 = vmatpush1.xpose.msra.mxu0 0.0
        %1185 = vmatprep.subr.mxu0 0.0
        %1186 = vmatpush1.xpose.msra.mxu0 0.0
        %1187 = vmatprep.subr.mxu0 0.0
        %1188 = vmatpush1.xpose.msra.mxu0 0.0
        %1189 = vmatprep.subr.mxu0 0.0
        %1190 = vmatpush1.xpose.msra.mxu0 0.0
        %1191 = vmatprep.subr.mxu0 0.0
        %1192 = vmatpush1.xpose.msra.mxu0 0.0
        %1193 = vmatprep.subr.mxu0 0.0
        %1194 = vmatpush1.xpose.msra.mxu0 0.0
        %1195 = vmatprep.subr.mxu0 0.0
        %1196 = vmatpush1.xpose.msra.mxu0 0.0
        %1197 = vmatprep.subr.mxu0 0.0
        %1198 = vmatpush1.xpose.msra.mxu0 0.0
        %1199 = vmatprep.subr.mxu0 0.0
        %1200 = vmatpush1.xpose.msra.mxu0 0.0
        %1201 = vmatprep.subr.mxu0 0.0
        %1202 = vmatpush1.xpose.msra.mxu0 0.0
        %1203 = vmatprep.subr.mxu0 0.0
        %1204 = vmatpush1.xpose.msra.mxu0 0.0
        %1205 = vmatprep.subr.mxu0 0.0
        %1206 = vmatpush1.xpose.msra.mxu0 0.0
        %1207 = vmatprep.subr.mxu0 0.0
        %1208 = vmatpush1.xpose.msra.mxu0 0.0
        %1209 = vmatprep.subr.mxu0 0.0
        %1210 = vmatpush1.xpose.msra.mxu0 0.0
        %1211 = vmatprep.mubr.f32.mxu0 0.0
        %1212 = vmatmul.mubr.f32.gmra.mrb[0].mxu0 %v1051
        %v1213 = vpop.f32.mrb[0].mxu0
        %v1214 = vadd.f32 0.0, %v1213
        %v1215 = vpop.f32.mrb[0].mxu0
        %1216 = vdwg.mxu0
        %v1218 = vsel %vm1049, %v1040, 0
        %v1221 = vsel %vm1049, %v1041, 0
        %v1224 = vsel %vm1049, %v1042, 0
        %v1227 = vsel %vm1049, %v1043, 0
        %1229 = vmatprep.subr.mxu0 0.0
        %1230 = vmatpush1.xpose.msra.mxu0 %v1218
        %1231 = vmatprep.subr.mxu0 0.0
        %1232 = vmatpush1.xpose.msra.mxu0 %v1221
        %1233 = vmatprep.subr.mxu0 0.0
        %1234 = vmatpush1.xpose.msra.mxu0 %v1224
        %1235 = vmatprep.subr.mxu0 0.0
        %1236 = vmatpush1.xpose.msra.mxu0 %v1227
        %1237 = vmatprep.subr.mxu0 0.0
        %1238 = vmatpush1.xpose.msra.mxu0 0.0
        %1239 = vmatprep.subr.mxu0 0.0
        %1240 = vmatpush1.xpose.msra.mxu0 0.0
        %1241 = vmatprep.subr.mxu0 0.0
        %1242 = vmatpush1.xpose.msra.mxu0 0.0
        %1243 = vmatprep.subr.mxu0 0.0
        %1244 = vmatpush1.xpose.msra.mxu0 0.0
        %1245 = vmatprep.subr.mxu0 0.0
        %1246 = vmatpush1.xpose.msra.mxu0 0.0
        %1247 = vmatprep.subr.mxu0 0.0
        %1248 = vmatpush1.xpose.msra.mxu0 0.0
        %1249 = vmatprep.subr.mxu0 0.0
        %1250 = vmatpush1.xpose.msra.mxu0 0.0
        %1251 = vmatprep.subr.mxu0 0.0
        %1252 = vmatpush1.xpose.msra.mxu0 0.0
        %1253 = vmatprep.subr.mxu0 0.0
        %1254 = vmatpush1.xpose.msra.mxu0 0.0
        %1255 = vmatprep.subr.mxu0 0.0
        %1256 = vmatpush1.xpose.msra.mxu0 0.0
        %1257 = vmatprep.subr.mxu0 0.0
        %1258 = vmatpush1.xpose.msra.mxu0 0.0
        %1259 = vmatprep.subr.mxu0 0.0
        %1260 = vmatpush1.xpose.msra.mxu0 0.0
        %1261 = vmatprep.subr.mxu0 0.0
        %1262 = vmatpush1.xpose.msra.mxu0 0.0
        %1263 = vmatprep.subr.mxu0 0.0
        %1264 = vmatpush1.xpose.msra.mxu0 0.0
        %1265 = vmatprep.subr.mxu0 0.0
        %1266 = vmatpush1.xpose.msra.mxu0 0.0
        %1267 = vmatprep.subr.mxu0 0.0
        %1268 = vmatpush1.xpose.msra.mxu0 0.0
        %1269 = vmatprep.subr.mxu0 0.0
        %1270 = vmatpush1.xpose.msra.mxu0 0.0
        %1271 = vmatprep.subr.mxu0 0.0
        %1272 = vmatpush1.xpose.msra.mxu0 0.0
        %1273 = vmatprep.subr.mxu0 0.0
        %1274 = vmatpush1.xpose.msra.mxu0 0.0
        %1275 = vmatprep.subr.mxu0 0.0
        %1276 = vmatpush1.xpose.msra.mxu0 0.0
        %1277 = vmatprep.subr.mxu0 0.0
        %1278 = vmatpush1.xpose.msra.mxu0 0.0
        %1279 = vmatprep.subr.mxu0 0.0
        %1280 = vmatpush1.xpose.msra.mxu0 0.0
        %1281 = vmatprep.subr.mxu0 0.0
        %1282 = vmatpush1.xpose.msra.mxu0 0.0
        %1283 = vmatprep.subr.mxu0 0.0
        %1284 = vmatpush1.xpose.msra.mxu0 0.0
        %1285 = vmatprep.subr.mxu0 0.0
        %1286 = vmatpush1.xpose.msra.mxu0 0.0
        %1287 = vmatprep.subr.mxu0 0.0
        %1288 = vmatpush1.xpose.msra.mxu0 0.0
        %1289 = vmatprep.subr.mxu0 0.0
        %1290 = vmatpush1.xpose.msra.mxu0 0.0
        %1291 = vmatprep.subr.mxu0 0.0
        %1292 = vmatpush1.xpose.msra.mxu0 0.0
        %1293 = vmatprep.mubr.f32.mxu0 0.0
        %1294 = vmatmul.mubr.f32.gmra.mrb[0].mxu0 %v1051
        %v1295 = vpop.f32.mrb[0].mxu0
        %v1296 = vadd.f32 0.0, %v1295
        %v1297 = vpop.f32.mrb[0].mxu0
        %1298 = vdwg.mxu0
        %1300 = vrot.lane.b32.xlu0 %v1132, 120
        %v1301 = vpop.permute.xlu0 %1300
        %1302 = vrot.lane.b32.xlu0 %v1132, 112
        %v1303 = vpop.permute.xlu0 %1302
        %1304 = vrot.lane.b32.xlu0 %v1132, 104
        %v1305 = vpop.permute.xlu0 %1304
        %1307 = vrot.lane.b32.xlu0 %v1214, 120
        %v1308 = vpop.permute.xlu0 %1307
        %1309 = vrot.lane.b32.xlu0 %v1214, 112
        %v1310 = vpop.permute.xlu0 %1309
        %1311 = vrot.lane.b32.xlu0 %v1214, 104
        %v1312 = vpop.permute.xlu0 %1311
        %1314 = vrot.lane.b32.xlu0 %v1296, 120
        %v1315 = vpop.permute.xlu0 %1314
        %1317 = vrot.lane.b32.xlu0 %v1296, 112
        %v1318 = vpop.permute.xlu0 %1317
        %1320 = vrot.lane.b32.xlu0 %v1296, 104
        %v1321 = vpop.permute.xlu0 %1320
        %vm1323 = vcmask 64512
        %v1324 = vsel %vm1323, %v1132, 0
        %v1326 = vsel %vm1323, %v1214, 0
        %1328 = vmatprep.subr.mxu0 0.0
        %1329 = vmatpush1.xpose.msra.mxu0 %v1326
        %1330 = vmatprep.subr.mxu0 0.0
        %1331 = vmatpush1.xpose.msra.mxu0 0.0
        %1332 = vmatprep.subr.mxu0 0.0
        %1333 = vmatpush1.xpose.msra.mxu0 0.0
        %1334 = vmatprep.subr.mxu0 0.0
        %1335 = vmatpush1.xpose.msra.mxu0 0.0
        %1336 = vmatprep.subr.mxu0 0.0
        %1337 = vmatpush1.xpose.msra.mxu0 0.0
        %1338 = vmatprep.subr.mxu0 0.0
        %1339 = vmatpush1.xpose.msra.mxu0 0.0
        %1340 = vmatprep.subr.mxu0 0.0
        %1341 = vmatpush1.xpose.msra.mxu0 0.0
        %1342 = vmatprep.subr.mxu0 0.0
        %1343 = vmatpush1.xpose.msra.mxu0 0.0
        %1344 = vmatprep.subr.mxu0 0.0
        %1345 = vmatpush1.xpose.msra.mxu0 0.0
        %1346 = vmatprep.subr.mxu0 0.0
        %1347 = vmatpush1.xpose.msra.mxu0 0.0
        %1348 = vmatprep.subr.mxu0 0.0
        %1349 = vmatpush1.xpose.msra.mxu0 0.0
        %1350 = vmatprep.subr.mxu0 0.0
        %1351 = vmatpush1.xpose.msra.mxu0 0.0
        %1352 = vmatprep.subr.mxu0 0.0
        %1353 = vmatpush1.xpose.msra.mxu0 0.0
        %1354 = vmatprep.subr.mxu0 0.0
        %1355 = vmatpush1.xpose.msra.mxu0 0.0
        %1356 = vmatprep.subr.mxu0 0.0
        %1357 = vmatpush1.xpose.msra.mxu0 0.0
        %1358 = vmatprep.subr.mxu0 0.0
        %1359 = vmatpush1.xpose.msra.mxu0 0.0
        %1360 = vmatprep.subr.mxu0 0.0
        %1361 = vmatpush1.xpose.msra.mxu0 0.0
        %1362 = vmatprep.subr.mxu0 0.0
        %1363 = vmatpush1.xpose.msra.mxu0 0.0
        %1364 = vmatprep.subr.mxu0 0.0
        %1365 = vmatpush1.xpose.msra.mxu0 0.0
        %1366 = vmatprep.subr.mxu0 0.0
        %1367 = vmatpush1.xpose.msra.mxu0 0.0
        %1368 = vmatprep.subr.mxu0 0.0
        %1369 = vmatpush1.xpose.msra.mxu0 0.0
        %1370 = vmatprep.subr.mxu0 0.0
        %1371 = vmatpush1.xpose.msra.mxu0 0.0
        %1372 = vmatprep.subr.mxu0 0.0
        %1373 = vmatpush1.xpose.msra.mxu0 0.0
        %1374 = vmatprep.subr.mxu0 0.0
        %1375 = vmatpush1.xpose.msra.mxu0 0.0
        %1376 = vmatprep.subr.mxu0 0.0
        %1377 = vmatpush1.xpose.msra.mxu0 0.0
        %1378 = vmatprep.subr.mxu0 0.0
        %1379 = vmatpush1.xpose.msra.mxu0 0.0
        %1380 = vmatprep.subr.mxu0 0.0
        %1381 = vmatpush1.xpose.msra.mxu0 0.0
        %1382 = vmatprep.subr.mxu0 0.0
        %1383 = vmatpush1.xpose.msra.mxu0 0.0
        %1384 = vmatprep.subr.mxu0 0.0
        %1385 = vmatpush1.xpose.msra.mxu0 0.0
        %1386 = vmatprep.subr.mxu0 0.0
        %1387 = vmatpush1.xpose.msra.mxu0 0.0
        %1388 = vmatprep.subr.mxu0 0.0
        %1389 = vmatpush1.xpose.msra.mxu0 0.0
        %1390 = vmatprep.subr.mxu0 0.0
        %1391 = vmatpush1.xpose.msra.mxu0 0.0
        %1392 = vmatprep.mubr.f32.mxu0 0.0
        %1393 = vmatmul.mubr.f32.gmra.mrb[0].mxu0 %v1324
        %v1394 = vpop.f32.mrb[0].mxu0
        %v1395 = vadd.f32 %v1031, %v1394
        %v1396 = vpop.f32.mrb[0].mxu0
        %1397 = vdwg.mxu0
        %v1398 = vsel %vm1323, %v1301, 0
        %v1400 = vsel %vm1323, %v1308, 0
        %1402 = vmatprep.subr.mxu0 0.0
        %1403 = vmatpush1.xpose.msra.mxu0 %v1400
        %1404 = vmatprep.subr.mxu0 0.0
        %1405 = vmatpush1.xpose.msra.mxu0 0.0
        %1406 = vmatprep.subr.mxu0 0.0
        %1407 = vmatpush1.xpose.msra.mxu0 0.0
        %1408 = vmatprep.subr.mxu0 0.0
        %1409 = vmatpush1.xpose.msra.mxu0 0.0
        %1410 = vmatprep.subr.mxu0 0.0
        %1411 = vmatpush1.xpose.msra.mxu0 0.0
        %1412 = vmatprep.subr.mxu0 0.0
        %1413 = vmatpush1.xpose.msra.mxu0 0.0
        %1414 = vmatprep.subr.mxu0 0.0
        %1415 = vmatpush1.xpose.msra.mxu0 0.0
        %1416 = vmatprep.subr.mxu0 0.0
        %1417 = vmatpush1.xpose.msra.mxu0 0.0
        %1418 = vmatprep.subr.mxu0 0.0
        %1419 = vmatpush1.xpose.msra.mxu0 0.0
        %1420 = vmatprep.subr.mxu0 0.0
        %1421 = vmatpush1.xpose.msra.mxu0 0.0
        %1422 = vmatprep.subr.mxu0 0.0
        %1423 = vmatpush1.xpose.msra.mxu0 0.0
        %1424 = vmatprep.subr.mxu0 0.0
        %1425 = vmatpush1.xpose.msra.mxu0 0.0
        %1426 = vmatprep.subr.mxu0 0.0
        %1427 = vmatpush1.xpose.msra.mxu0 0.0
        %1428 = vmatprep.subr.mxu0 0.0
        %1429 = vmatpush1.xpose.msra.mxu0 0.0
        %1430 = vmatprep.subr.mxu0 0.0
        %1431 = vmatpush1.xpose.msra.mxu0 0.0
        %1432 = vmatprep.subr.mxu0 0.0
        %1433 = vmatpush1.xpose.msra.mxu0 0.0
        %1434 = vmatprep.subr.mxu0 0.0
        %1435 = vmatpush1.xpose.msra.mxu0 0.0
        %1436 = vmatprep.subr.mxu0 0.0
        %1437 = vmatpush1.xpose.msra.mxu0 0.0
        %1438 = vmatprep.subr.mxu0 0.0
        %1439 = vmatpush1.xpose.msra.mxu0 0.0
        %1440 = vmatprep.subr.mxu0 0.0
        %1441 = vmatpush1.xpose.msra.mxu0 0.0
        %1442 = vmatprep.subr.mxu0 0.0
        %1443 = vmatpush1.xpose.msra.mxu0 0.0
        %1444 = vmatprep.subr.mxu0 0.0
        %1445 = vmatpush1.xpose.msra.mxu0 0.0
        %1446 = vmatprep.subr.mxu0 0.0
        %1447 = vmatpush1.xpose.msra.mxu0 0.0
        %1448 = vmatprep.subr.mxu0 0.0
        %1449 = vmatpush1.xpose.msra.mxu0 0.0
        %1450 = vmatprep.subr.mxu0 0.0
        %1451 = vmatpush1.xpose.msra.mxu0 0.0
        %1452 = vmatprep.subr.mxu0 0.0
        %1453 = vmatpush1.xpose.msra.mxu0 0.0
        %1454 = vmatprep.subr.mxu0 0.0
        %1455 = vmatpush1.xpose.msra.mxu0 0.0
        %1456 = vmatprep.subr.mxu0 0.0
        %1457 = vmatpush1.xpose.msra.mxu0 0.0
        %1458 = vmatprep.subr.mxu0 0.0
        %1459 = vmatpush1.xpose.msra.mxu0 0.0
        %1460 = vmatprep.subr.mxu0 0.0
        %1461 = vmatpush1.xpose.msra.mxu0 0.0
        %1462 = vmatprep.subr.mxu0 0.0
        %1463 = vmatpush1.xpose.msra.mxu0 0.0
        %1464 = vmatprep.subr.mxu0 0.0
        %1465 = vmatpush1.xpose.msra.mxu0 0.0
        %1466 = vmatprep.mubr.f32.mxu0 0.0
        %1467 = vmatmul.mubr.f32.gmra.mrb[0].mxu0 %v1398
        %v1468 = vpop.f32.mrb[0].mxu0
        %v1469 = vadd.f32 %v1031, %v1468
        %v1470 = vpop.f32.mrb[0].mxu0
        %1471 = vdwg.mxu0
        %v1472 = vsel %vm1323, %v1303, 0
        %v1474 = vsel %vm1323, %v1310, 0
        %1476 = vmatprep.subr.mxu0 0.0
        %1477 = vmatpush1.xpose.msra.mxu0 %v1474
        %1478 = vmatprep.subr.mxu0 0.0
        %1479 = vmatpush1.xpose.msra.mxu0 0.0
        %1480 = vmatprep.subr.mxu0 0.0
        %1481 = vmatpush1.xpose.msra.mxu0 0.0
        %1482 = vmatprep.subr.mxu0 0.0
        %1483 = vmatpush1.xpose.msra.mxu0 0.0
        %1484 = vmatprep.subr.mxu0 0.0
        %1485 = vmatpush1.xpose.msra.mxu0 0.0
        %1486 = vmatprep.subr.mxu0 0.0
        %1487 = vmatpush1.xpose.msra.mxu0 0.0
        %1488 = vmatprep.subr.mxu0 0.0
        %1489 = vmatpush1.xpose.msra.mxu0 0.0
        %1490 = vmatprep.subr.mxu0 0.0
        %1491 = vmatpush1.xpose.msra.mxu0 0.0
        %1492 = vmatprep.subr.mxu0 0.0
        %1493 = vmatpush1.xpose.msra.mxu0 0.0
        %1494 = vmatprep.subr.mxu0 0.0
        %1495 = vmatpush1.xpose.msra.mxu0 0.0
        %1496 = vmatprep.subr.mxu0 0.0
        %1497 = vmatpush1.xpose.msra.mxu0 0.0
        %1498 = vmatprep.subr.mxu0 0.0
        %1499 = vmatpush1.xpose.msra.mxu0 0.0
        %1500 = vmatprep.subr.mxu0 0.0
        %1501 = vmatpush1.xpose.msra.mxu0 0.0
        %1502 = vmatprep.subr.mxu0 0.0
        %1503 = vmatpush1.xpose.msra.mxu0 0.0
        %1504 = vmatprep.subr.mxu0 0.0
        %1505 = vmatpush1.xpose.msra.mxu0 0.0
        %1506 = vmatprep.subr.mxu0 0.0
        %1507 = vmatpush1.xpose.msra.mxu0 0.0
        %1508 = vmatprep.subr.mxu0 0.0
        %1509 = vmatpush1.xpose.msra.mxu0 0.0
        %1510 = vmatprep.subr.mxu0 0.0
        %1511 = vmatpush1.xpose.msra.mxu0 0.0
        %1512 = vmatprep.subr.mxu0 0.0
        %1513 = vmatpush1.xpose.msra.mxu0 0.0
        %1514 = vmatprep.subr.mxu0 0.0
        %1515 = vmatpush1.xpose.msra.mxu0 0.0
        %1516 = vmatprep.subr.mxu0 0.0
        %1517 = vmatpush1.xpose.msra.mxu0 0.0
        %1518 = vmatprep.subr.mxu0 0.0
        %1519 = vmatpush1.xpose.msra.mxu0 0.0
        %1520 = vmatprep.subr.mxu0 0.0
        %1521 = vmatpush1.xpose.msra.mxu0 0.0
        %1522 = vmatprep.subr.mxu0 0.0
        %1523 = vmatpush1.xpose.msra.mxu0 0.0
        %1524 = vmatprep.subr.mxu0 0.0
        %1525 = vmatpush1.xpose.msra.mxu0 0.0
        %1526 = vmatprep.subr.mxu0 0.0
        %1527 = vmatpush1.xpose.msra.mxu0 0.0
        %1528 = vmatprep.subr.mxu0 0.0
        %1529 = vmatpush1.xpose.msra.mxu0 0.0
        %1530 = vmatprep.subr.mxu0 0.0
        %1531 = vmatpush1.xpose.msra.mxu0 0.0
        %1532 = vmatprep.subr.mxu0 0.0
        %1533 = vmatpush1.xpose.msra.mxu0 0.0
        %1534 = vmatprep.subr.mxu0 0.0
        %1535 = vmatpush1.xpose.msra.mxu0 0.0
        %1536 = vmatprep.subr.mxu0 0.0
        %1537 = vmatpush1.xpose.msra.mxu0 0.0
        %1538 = vmatprep.subr.mxu0 0.0
        %1539 = vmatpush1.xpose.msra.mxu0 0.0
        %1540 = vmatprep.mubr.f32.mxu0 0.0
        %1541 = vmatmul.mubr.f32.gmra.mrb[0].mxu0 %v1472
        %v1542 = vpop.f32.mrb[0].mxu0
        %v1543 = vadd.f32 %v1031, %v1542
        %v1544 = vpop.f32.mrb[0].mxu0
        %1545 = vdwg.mxu0
        %v1546 = vsel %vm1323, %v1305, 0
        %v1548 = vsel %vm1323, %v1312, 0
        %1550 = vmatprep.subr.mxu0 0.0
        %1551 = vmatpush1.xpose.msra.mxu0 %v1548
        %1552 = vmatprep.subr.mxu0 0.0
        %1553 = vmatpush1.xpose.msra.mxu0 0.0
        %1554 = vmatprep.subr.mxu0 0.0
        %1555 = vmatpush1.xpose.msra.mxu0 0.0
        %1556 = vmatprep.subr.mxu0 0.0
        %1557 = vmatpush1.xpose.msra.mxu0 0.0
        %1558 = vmatprep.subr.mxu0 0.0
        %1559 = vmatpush1.xpose.msra.mxu0 0.0
        %1560 = vmatprep.subr.mxu0 0.0
        %1561 = vmatpush1.xpose.msra.mxu0 0.0
        %1562 = vmatprep.subr.mxu0 0.0
        %1563 = vmatpush1.xpose.msra.mxu0 0.0
        %1564 = vmatprep.subr.mxu0 0.0
        %1565 = vmatpush1.xpose.msra.mxu0 0.0
        %1566 = vmatprep.subr.mxu0 0.0
        %1567 = vmatpush1.xpose.msra.mxu0 0.0
        %1568 = vmatprep.subr.mxu0 0.0
        %1569 = vmatpush1.xpose.msra.mxu0 0.0
        %1570 = vmatprep.subr.mxu0 0.0
        %1571 = vmatpush1.xpose.msra.mxu0 0.0
        %1572 = vmatprep.subr.mxu0 0.0
        %1573 = vmatpush1.xpose.msra.mxu0 0.0
        %1574 = vmatprep.subr.mxu0 0.0
        %1575 = vmatpush1.xpose.msra.mxu0 0.0
        %1576 = vmatprep.subr.mxu0 0.0
        %1577 = vmatpush1.xpose.msra.mxu0 0.0
        %1578 = vmatprep.subr.mxu0 0.0
        %1579 = vmatpush1.xpose.msra.mxu0 0.0
        %1580 = vmatprep.subr.mxu0 0.0
        %1581 = vmatpush1.xpose.msra.mxu0 0.0
        %1582 = vmatprep.subr.mxu0 0.0
        %1583 = vmatpush1.xpose.msra.mxu0 0.0
        %1584 = vmatprep.subr.mxu0 0.0
        %1585 = vmatpush1.xpose.msra.mxu0 0.0
        %1586 = vmatprep.subr.mxu0 0.0
        %1587 = vmatpush1.xpose.msra.mxu0 0.0
        %1588 = vmatprep.subr.mxu0 0.0
        %1589 = vmatpush1.xpose.msra.mxu0 0.0
        %1590 = vmatprep.subr.mxu0 0.0
        %1591 = vmatpush1.xpose.msra.mxu0 0.0
        %1592 = vmatprep.subr.mxu0 0.0
        %1593 = vmatpush1.xpose.msra.mxu0 0.0
        %1594 = vmatprep.subr.mxu0 0.0
        %1595 = vmatpush1.xpose.msra.mxu0 0.0
        %1596 = vmatprep.subr.mxu0 0.0
        %1597 = vmatpush1.xpose.msra.mxu0 0.0
        %1598 = vmatprep.subr.mxu0 0.0
        %1599 = vmatpush1.xpose.msra.mxu0 0.0
        %1600 = vmatprep.subr.mxu0 0.0
        %1601 = vmatpush1.xpose.msra.mxu0 0.0
        %1602 = vmatprep.subr.mxu0 0.0
        %1603 = vmatpush1.xpose.msra.mxu0 0.0
        %1604 = vmatprep.subr.mxu0 0.0
        %1605 = vmatpush1.xpose.msra.mxu0 0.0
        %1606 = vmatprep.subr.mxu0 0.0
        %1607 = vmatpush1.xpose.msra.mxu0 0.0
        %1608 = vmatprep.subr.mxu0 0.0
        %1609 = vmatpush1.xpose.msra.mxu0 0.0
        %1610 = vmatprep.subr.mxu0 0.0
        %1611 = vmatpush1.xpose.msra.mxu0 0.0
        %1612 = vmatprep.subr.mxu0 0.0
        %1613 = vmatpush1.xpose.msra.mxu0 0.0
        %1614 = vmatprep.mubr.f32.mxu0 0.0
        %1615 = vmatmul.mubr.f32.gmra.mrb[0].mxu0 %v1546
        %v1616 = vpop.f32.mrb[0].mxu0
        %v1617 = vadd.f32 %v1031, %v1616
        %v1618 = vpop.f32.mrb[0].mxu0
        %1619 = vdwg.mxu0
        %v1620 = vmul.f32 %v1395, 0.17677669
        %v1621 = vmul.f32 %v1469, 0.17677669
        %v1622 = vmul.f32 %v1543, 0.17677669
        %v1623 = vmul.f32 %v1617, 0.17677669
        %v1624 = vsel %vm1323, %v1620, -inf
        %1625 = vmax.xlane.f32.xlu0 %v1624
        %v1626 = vpop.xlane.xlu0 %1625
        %v1627 = vsel %vm1323, %v1621, -inf
        %1628 = vmax.xlane.f32.xlu0 %v1627
        %v1629 = vpop.xlane.xlu0 %1628
        %v1630 = vsel %vm1323, %v1622, -inf
        %1631 = vmax.xlane.f32.xlu0 %v1630
        %v1632 = vpop.xlane.xlu0 %1631
        %v1633 = vsel %vm1323, %v1623, -inf
        %1634 = vmax.xlane.f32.xlu0 %v1633
        %v1635 = vpop.xlane.xlu0 %1634
        %v1636 = vsub.f32 %v1620, %v1626
        %v1637 = vsub.f32 %v1621, %v1629
        %v1638 = vsub.f32 %v1622, %v1632
        %v1639 = vsub.f32 %v1623, %v1635
        %v1640 = vmul.f32 %v1636, 1.442695
        %v1641 = vpow.pop %v1640
        %v1642 = vmul.f32 %v1637, 1.442695
        %v1643 = vpow.pop %v1642
        %v1644 = vmul.f32 %v1638, 1.442695
        %v1645 = vpow.pop %v1644
        %v1646 = vmul.f32 %v1639, 1.442695
        %v1647 = vpow.pop %v1646
        %v1648 = vsel %vm1323, %v1641, 0.0
        %1649 = vadd.xlane.f32.xlu0 %v1648
        %v1650 = vpop.xlane.xlu0 %1649
        %v1651 = vsel %vm1323, %v1643, 0.0
        %1652 = vadd.xlane.f32.xlu0 %v1651
        %v1653 = vpop.xlane.xlu0 %1652
        %v1654 = vsel %vm1323, %v1645, 0.0
        %1655 = vadd.xlane.f32.xlu0 %v1654
        %v1656 = vpop.xlane.xlu0 %1655
        %v1657 = vsel %vm1323, %v1647, 0.0
        %1658 = vadd.xlane.f32.xlu0 %v1657
        %v1659 = vpop.xlane.xlu0 %1658
        %v1660 = vrcp.pop %v1650
        %v1661 = vrcp.pop %v1653
        %v1662 = vrcp.pop %v1656
        %v1663 = vrcp.pop %v1659
        %v1664 = vmul.f32 %v1641, %v1660
        %v1665 = vmul.f32 %v1643, %v1661
        %v1666 = vmul.f32 %v1645, %v1662
        %v1667 = vmul.f32 %v1647, %v1663
        %v1669 = vsel %vm1323, %v1664, 0
        %1671 = vmatprep.subr.mxu0 0.0
        %1672 = vmatpush1.msra.mxu0 %v1296
        %1673 = vmatprep.subr.mxu0 0.0
        %1674 = vmatpush1.msra.mxu0 0.0
        %1675 = vmatprep.subr.mxu0 0.0
        %1676 = vmatpush1.msra.mxu0 0.0
        %1677 = vmatprep.subr.mxu0 0.0
        %1678 = vmatpush1.msra.mxu0 0.0
        %1679 = vmatprep.subr.mxu0 0.0
        %1680 = vmatpush1.msra.mxu0 0.0
        %1681 = vmatprep.subr.mxu0 0.0
        %1682 = vmatpush1.msra.mxu0 0.0
        %1683 = vmatprep.subr.mxu0 0.0
        %1684 = vmatpush1.msra.mxu0 0.0
        %1685 = vmatprep.subr.mxu0 0.0
        %1686 = vmatpush1.msra.mxu0 0.0
        %1687 = vmatprep.subr.mxu0 0.0
        %1688 = vmatpush1.msra.mxu0 0.0
        %1689 = vmatprep.subr.mxu0 0.0
        %1690 = vmatpush1.msra.mxu0 0.0
        %1691 = vmatprep.subr.mxu0 0.0
        %1692 = vmatpush1.msra.mxu0 0.0
        %1693 = vmatprep.subr.mxu0 0.0
        %1694 = vmatpush1.msra.mxu0 0.0
        %1695 = vmatprep.subr.mxu0 0.0
        %1696 = vmatpush1.msra.mxu0 0.0
        %1697 = vmatprep.subr.mxu0 0.0
        %1698 = vmatpush1.msra.mxu0 0.0
        %1699 = vmatprep.subr.mxu0 0.0
        %1700 = vmatpush1.msra.mxu0 0.0
        %1701 = vmatprep.subr.mxu0 0.0
        %1702 = vmatpush1.msra.mxu0 0.0
        %1703 = vmatprep.subr.mxu0 0.0
        %1704 = vmatpush1.msra.mxu0 0.0
        %1705 = vmatprep.subr.mxu0 0.0
        %1706 = vmatpush1.msra.mxu0 0.0
        %1707 = vmatprep.subr.mxu0 0.0
        %1708 = vmatpush1.msra.mxu0 0.0
        %1709 = vmatprep.subr.mxu0 0.0
        %1710 = vmatpush1.msra.mxu0 0.0
        %1711 = vmatprep.subr.mxu0 0.0
        %1712 = vmatpush1.msra.mxu0 0.0
        %1713 = vmatprep.subr.mxu0 0.0
        %1714 = vmatpush1.msra.mxu0 0.0
        %1715 = vmatprep.subr.mxu0 0.0
        %1716 = vmatpush1.msra.mxu0 0.0
        %1717 = vmatprep.subr.mxu0 0.0
        %1718 = vmatpush1.msra.mxu0 0.0
        %1719 = vmatprep.subr.mxu0 0.0
        %1720 = vmatpush1.msra.mxu0 0.0
        %1721 = vmatprep.subr.mxu0 0.0
        %1722 = vmatpush1.msra.mxu0 0.0
        %1723 = vmatprep.subr.mxu0 0.0
        %1724 = vmatpush1.msra.mxu0 0.0
        %1725 = vmatprep.subr.mxu0 0.0
        %1726 = vmatpush1.msra.mxu0 0.0
        %1727 = vmatprep.subr.mxu0 0.0
        %1728 = vmatpush1.msra.mxu0 0.0
        %1729 = vmatprep.subr.mxu0 0.0
        %1730 = vmatpush1.msra.mxu0 0.0
        %1731 = vmatprep.subr.mxu0 0.0
        %1732 = vmatpush1.msra.mxu0 0.0
        %1733 = vmatprep.subr.mxu0 0.0
        %1734 = vmatpush1.msra.mxu0 0.0
        %1735 = vmatprep.mubr.f32.mxu0 0.0
        %1736 = vmatmul.mubr.f32.gmra.mrb[0].mxu0 %v1669
        %v1737 = vpop.f32.mrb[0].mxu0
        %v1738 = vadd.f32 0.0, %v1737
        %v1739 = vpop.f32.mrb[0].mxu0
        %1740 = vdwg.mxu0
        %v1742 = vsel %vm1323, %v1665, 0
        %1744 = vmatprep.subr.mxu0 0.0
        %1745 = vmatpush1.msra.mxu0 %v1315
        %1746 = vmatprep.subr.mxu0 0.0
        %1747 = vmatpush1.msra.mxu0 0.0
        %1748 = vmatprep.subr.mxu0 0.0
        %1749 = vmatpush1.msra.mxu0 0.0
        %1750 = vmatprep.subr.mxu0 0.0
        %1751 = vmatpush1.msra.mxu0 0.0
        %1752 = vmatprep.subr.mxu0 0.0
        %1753 = vmatpush1.msra.mxu0 0.0
        %1754 = vmatprep.subr.mxu0 0.0
        %1755 = vmatpush1.msra.mxu0 0.0
        %1756 = vmatprep.subr.mxu0 0.0
        %1757 = vmatpush1.msra.mxu0 0.0
        %1758 = vmatprep.subr.mxu0 0.0
        %1759 = vmatpush1.msra.mxu0 0.0
        %1760 = vmatprep.subr.mxu0 0.0
        %1761 = vmatpush1.msra.mxu0 0.0
        %1762 = vmatprep.subr.mxu0 0.0
        %1763 = vmatpush1.msra.mxu0 0.0
        %1764 = vmatprep.subr.mxu0 0.0
        %1765 = vmatpush1.msra.mxu0 0.0
        %1766 = vmatprep.subr.mxu0 0.0
        %1767 = vmatpush1.msra.mxu0 0.0
        %1768 = vmatprep.subr.mxu0 0.0
        %1769 = vmatpush1.msra.mxu0 0.0
        %1770 = vmatprep.subr.mxu0 0.0
        %1771 = vmatpush1.msra.mxu0 0.0
        %1772 = vmatprep.subr.mxu0 0.0
        %1773 = vmatpush1.msra.mxu0 0.0
        %1774 = vmatprep.subr.mxu0 0.0
        %1775 = vmatpush1.msra.mxu0 0.0
        %1776 = vmatprep.subr.mxu0 0.0
        %1777 = vmatpush1.msra.mxu0 0.0
        %1778 = vmatprep.subr.mxu0 0.0
        %1779 = vmatpush1.msra.mxu0 0.0
        %1780 = vmatprep.subr.mxu0 0.0
        %1781 = vmatpush1.msra.mxu0 0.0
        %1782 = vmatprep.subr.mxu0 0.0
        %1783 = vmatpush1.msra.mxu0 0.0
        %1784 = vmatprep.subr.mxu0 0.0
        %1785 = vmatpush1.msra.mxu0 0.0
        %1786 = vmatprep.subr.mxu0 0.0
        %1787 = vmatpush1.msra.mxu0 0.0
        %1788 = vmatprep.subr.mxu0 0.0
        %1789 = vmatpush1.msra.mxu0 0.0
        %1790 = vmatprep.subr.mxu0 0.0
        %1791 = vmatpush1.msra.mxu0 0.0
        %1792 = vmatprep.subr.mxu0 0.0
        %1793 = vmatpush1.msra.mxu0 0.0
        %1794 = vmatprep.subr.mxu0 0.0
        %1795 = vmatpush1.msra.mxu0 0.0
        %1796 = vmatprep.subr.mxu0 0.0
        %1797 = vmatpush1.msra.mxu0 0.0
        %1798 = vmatprep.subr.mxu0 0.0
        %1799 = vmatpush1.msra.mxu0 0.0
        %1800 = vmatprep.subr.mxu0 0.0
        %1801 = vmatpush1.msra.mxu0 0.0
        %1802 = vmatprep.subr.mxu0 0.0
        %1803 = vmatpush1.msra.mxu0 0.0
        %1804 = vmatprep.subr.mxu0 0.0
        %1805 = vmatpush1.msra.mxu0 0.0
        %1806 = vmatprep.subr.mxu0 0.0
        %1807 = vmatpush1.msra.mxu0 0.0
        %1808 = vmatprep.mubr.f32.mxu0 0.0
        %1809 = vmatmul.mubr.f32.gmra.mrb[0].mxu0 %v1742
        %v1810 = vpop.f32.mrb[0].mxu0
        %v1811 = vadd.f32 0.0, %v1810
        %v1812 = vpop.f32.mrb[0].mxu0
        %1813 = vdwg.mxu0
        %v1815 = vsel %vm1323, %v1666, 0
        %1817 = vmatprep.subr.mxu0 0.0
        %1818 = vmatpush1.msra.mxu0 %v1318
        %1819 = vmatprep.subr.mxu0 0.0
        %1820 = vmatpush1.msra.mxu0 0.0
        %1821 = vmatprep.subr.mxu0 0.0
        %1822 = vmatpush1.msra.mxu0 0.0
        %1823 = vmatprep.subr.mxu0 0.0
        %1824 = vmatpush1.msra.mxu0 0.0
        %1825 = vmatprep.subr.mxu0 0.0
        %1826 = vmatpush1.msra.mxu0 0.0
        %1827 = vmatprep.subr.mxu0 0.0
        %1828 = vmatpush1.msra.mxu0 0.0
        %1829 = vmatprep.subr.mxu0 0.0
        %1830 = vmatpush1.msra.mxu0 0.0
        %1831 = vmatprep.subr.mxu0 0.0
        %1832 = vmatpush1.msra.mxu0 0.0
        %1833 = vmatprep.subr.mxu0 0.0
        %1834 = vmatpush1.msra.mxu0 0.0
        %1835 = vmatprep.subr.mxu0 0.0
        %1836 = vmatpush1.msra.mxu0 0.0
        %1837 = vmatprep.subr.mxu0 0.0
        %1838 = vmatpush1.msra.mxu0 0.0
        %1839 = vmatprep.subr.mxu0 0.0
        %1840 = vmatpush1.msra.mxu0 0.0
        %1841 = vmatprep.subr.mxu0 0.0
        %1842 = vmatpush1.msra.mxu0 0.0
        %1843 = vmatprep.subr.mxu0 0.0
        %1844 = vmatpush1.msra.mxu0 0.0
        %1845 = vmatprep.subr.mxu0 0.0
        %1846 = vmatpush1.msra.mxu0 0.0
        %1847 = vmatprep.subr.mxu0 0.0
        %1848 = vmatpush1.msra.mxu0 0.0
        %1849 = vmatprep.subr.mxu0 0.0
        %1850 = vmatpush1.msra.mxu0 0.0
        %1851 = vmatprep.subr.mxu0 0.0
        %1852 = vmatpush1.msra.mxu0 0.0
        %1853 = vmatprep.subr.mxu0 0.0
        %1854 = vmatpush1.msra.mxu0 0.0
        %1855 = vmatprep.subr.mxu0 0.0
        %1856 = vmatpush1.msra.mxu0 0.0
        %1857 = vmatprep.subr.mxu0 0.0
        %1858 = vmatpush1.msra.mxu0 0.0
        %1859 = vmatprep.subr.mxu0 0.0
        %1860 = vmatpush1.msra.mxu0 0.0
        %1861 = vmatprep.subr.mxu0 0.0
        %1862 = vmatpush1.msra.mxu0 0.0
        %1863 = vmatprep.subr.mxu0 0.0
        %1864 = vmatpush1.msra.mxu0 0.0
        %1865 = vmatprep.subr.mxu0 0.0
        %1866 = vmatpush1.msra.mxu0 0.0
        %1867 = vmatprep.subr.mxu0 0.0
        %1868 = vmatpush1.msra.mxu0 0.0
        %1869 = vmatprep.subr.mxu0 0.0
        %1870 = vmatpush1.msra.mxu0 0.0
        %1871 = vmatprep.subr.mxu0 0.0
        %1872 = vmatpush1.msra.mxu0 0.0
        %1873 = vmatprep.subr.mxu0 0.0
        %1874 = vmatpush1.msra.mxu0 0.0
        %1875 = vmatprep.subr.mxu0 0.0
        %1876 = vmatpush1.msra.mxu0 0.0
        %1877 = vmatprep.subr.mxu0 0.0
        %1878 = vmatpush1.msra.mxu0 0.0
        %1879 = vmatprep.subr.mxu0 0.0
        %1880 = vmatpush1.msra.mxu0 0.0
        %1881 = vmatprep.mubr.f32.mxu0 0.0
        %1882 = vmatmul.mubr.f32.gmra.mrb[0].mxu0 %v1815
        %v1883 = vpop.f32.mrb[0].mxu0
        %v1884 = vadd.f32 0.0, %v1883
        %v1885 = vpop.f32.mrb[0].mxu0
        %1886 = vdwg.mxu0
        %v1888 = vsel %vm1323, %v1667, 0
        %1890 = vmatprep.subr.mxu0 0.0
        %1891 = vmatpush1.msra.mxu0 %v1321
        %1892 = vmatprep.subr.mxu0 0.0
        %1893 = vmatpush1.msra.mxu0 0.0
        %1894 = vmatprep.subr.mxu0 0.0
        %1895 = vmatpush1.msra.mxu0 0.0
        %1896 = vmatprep.subr.mxu0 0.0
        %1897 = vmatpush1.msra.mxu0 0.0
        %1898 = vmatprep.subr.mxu0 0.0
        %1899 = vmatpush1.msra.mxu0 0.0
        %1900 = vmatprep.subr.mxu0 0.0
        %1901 = vmatpush1.msra.mxu0 0.0
        %1902 = vmatprep.subr.mxu0 0.0
        %1903 = vmatpush1.msra.mxu0 0.0
        %1904 = vmatprep.subr.mxu0 0.0
        %1905 = vmatpush1.msra.mxu0 0.0
        %1906 = vmatprep.subr.mxu0 0.0
        %1907 = vmatpush1.msra.mxu0 0.0
        %1908 = vmatprep.subr.mxu0 0.0
        %1909 = vmatpush1.msra.mxu0 0.0
        %1910 = vmatprep.subr.mxu0 0.0
        %1911 = vmatpush1.msra.mxu0 0.0
        %1912 = vmatprep.subr.mxu0 0.0
        %1913 = vmatpush1.msra.mxu0 0.0
        %1914 = vmatprep.subr.mxu0 0.0
        %1915 = vmatpush1.msra.mxu0 0.0
        %1916 = vmatprep.subr.mxu0 0.0
        %1917 = vmatpush1.msra.mxu0 0.0
        %1918 = vmatprep.subr.mxu0 0.0
        %1919 = vmatpush1.msra.mxu0 0.0
        %1920 = vmatprep.subr.mxu0 0.0
        %1921 = vmatpush1.msra.mxu0 0.0
        %1922 = vmatprep.subr.mxu0 0.0
        %1923 = vmatpush1.msra.mxu0 0.0
        %1924 = vmatprep.subr.mxu0 0.0
        %1925 = vmatpush1.msra.mxu0 0.0
        %1926 = vmatprep.subr.mxu0 0.0
        %1927 = vmatpush1.msra.mxu0 0.0
        %1928 = vmatprep.subr.mxu0 0.0
        %1929 = vmatpush1.msra.mxu0 0.0
        %1930 = vmatprep.subr.mxu0 0.0
        %1931 = vmatpush1.msra.mxu0 0.0
        %1932 = vmatprep.subr.mxu0 0.0
        %1933 = vmatpush1.msra.mxu0 0.0
        %1934 = vmatprep.subr.mxu0 0.0
        %1935 = vmatpush1.msra.mxu0 0.0
        %1936 = vmatprep.subr.mxu0 0.0
        %1937 = vmatpush1.msra.mxu0 0.0
        %1938 = vmatprep.subr.mxu0 0.0
        %1939 = vmatpush1.msra.mxu0 0.0
        %1940 = vmatprep.subr.mxu0 0.0
        %1941 = vmatpush1.msra.mxu0 0.0
        %1942 = vmatprep.subr.mxu0 0.0
        %1943 = vmatpush1.msra.mxu0 0.0
        %1944 = vmatprep.subr.mxu0 0.0
        %1945 = vmatpush1.msra.mxu0 0.0
        %1946 = vmatprep.subr.mxu0 0.0
        %1947 = vmatpush1.msra.mxu0 0.0
        %1948 = vmatprep.subr.mxu0 0.0
        %1949 = vmatpush1.msra.mxu0 0.0
        %1950 = vmatprep.subr.mxu0 0.0
        %1951 = vmatpush1.msra.mxu0 0.0
        %1952 = vmatprep.subr.mxu0 0.0
        %1953 = vmatpush1.msra.mxu0 0.0
        %1954 = vmatprep.mubr.f32.mxu0 0.0
        %1955 = vmatmul.mubr.f32.gmra.mrb[0].mxu0 %v1888
        %v1956 = vpop.f32.mrb[0].mxu0
        %v1957 = vadd.f32 0.0, %v1956
        %v1958 = vpop.f32.mrb[0].mxu0
        %1959 = vdwg.mxu0
        %v1961 = vsel %vm1323, %v1738, 0
        %1963 = vmatprep.subr.mxu0 0.0
        %1964 = vmatpush1.msra.mxu0 %v1044
        %1965 = vmatprep.subr.mxu0 0.0
        %1966 = vmatpush1.msra.mxu0 0.0
        %1967 = vmatprep.subr.mxu0 0.0
        %1968 = vmatpush1.msra.mxu0 0.0
        %1969 = vmatprep.subr.mxu0 0.0
        %1970 = vmatpush1.msra.mxu0 0.0
        %1971 = vmatprep.subr.mxu0 0.0
        %1972 = vmatpush1.msra.mxu0 0.0
        %1973 = vmatprep.subr.mxu0 0.0
        %1974 = vmatpush1.msra.mxu0 0.0
        %1975 = vmatprep.subr.mxu0 0.0
        %1976 = vmatpush1.msra.mxu0 0.0
        %1977 = vmatprep.subr.mxu0 0.0
        %1978 = vmatpush1.msra.mxu0 0.0
        %1979 = vmatprep.subr.mxu0 0.0
        %1980 = vmatpush1.msra.mxu0 0.0
        %1981 = vmatprep.subr.mxu0 0.0
        %1982 = vmatpush1.msra.mxu0 0.0
        %1983 = vmatprep.subr.mxu0 0.0
        %1984 = vmatpush1.msra.mxu0 0.0
        %1985 = vmatprep.subr.mxu0 0.0
        %1986 = vmatpush1.msra.mxu0 0.0
        %1987 = vmatprep.subr.mxu0 0.0
        %1988 = vmatpush1.msra.mxu0 0.0
        %1989 = vmatprep.subr.mxu0 0.0
        %1990 = vmatpush1.msra.mxu0 0.0
        %1991 = vmatprep.subr.mxu0 0.0
        %1992 = vmatpush1.msra.mxu0 0.0
        %1993 = vmatprep.subr.mxu0 0.0
        %1994 = vmatpush1.msra.mxu0 0.0
        %1995 = vmatprep.subr.mxu0 0.0
        %1996 = vmatpush1.msra.mxu0 0.0
        %1997 = vmatprep.subr.mxu0 0.0
        %1998 = vmatpush1.msra.mxu0 0.0
        %1999 = vmatprep.subr.mxu0 0.0
        %2000 = vmatpush1.msra.mxu0 0.0
        %2001 = vmatprep.subr.mxu0 0.0
        %2002 = vmatpush1.msra.mxu0 0.0
        %2003 = vmatprep.subr.mxu0 0.0
        %2004 = vmatpush1.msra.mxu0 0.0
        %2005 = vmatprep.subr.mxu0 0.0
        %2006 = vmatpush1.msra.mxu0 0.0
        %2007 = vmatprep.subr.mxu0 0.0
        %2008 = vmatpush1.msra.mxu0 0.0
        %2009 = vmatprep.subr.mxu0 0.0
        %2010 = vmatpush1.msra.mxu0 0.0
        %2011 = vmatprep.subr.mxu0 0.0
        %2012 = vmatpush1.msra.mxu0 0.0
        %2013 = vmatprep.subr.mxu0 0.0
        %2014 = vmatpush1.msra.mxu0 0.0
        %2015 = vmatprep.subr.mxu0 0.0
        %2016 = vmatpush1.msra.mxu0 0.0
        %2017 = vmatprep.subr.mxu0 0.0
        %2018 = vmatpush1.msra.mxu0 0.0
        %2019 = vmatprep.subr.mxu0 0.0
        %2020 = vmatpush1.msra.mxu0 0.0
        %2021 = vmatprep.subr.mxu0 0.0
        %2022 = vmatpush1.msra.mxu0 0.0
        %2023 = vmatprep.subr.mxu0 0.0
        %2024 = vmatpush1.msra.mxu0 0.0
        %2025 = vmatprep.subr.mxu0 0.0
        %2026 = vmatpush1.msra.mxu0 0.0
        %2027 = vmatprep.mubr.f32.mxu0 0.0
        %2028 = vmatmul.mubr.f32.gmra.mrb[0].mxu0 %v1961
        %v2029 = vpop.f32.mrb[0].mxu0
        %v2030 = vadd.f32 0.0, %v2029
        %v2031 = vpop.f32.mrb[0].mxu0
        %2032 = vdwg.mxu0
        %v2034 = vsel %vm1323, %v1811, 0
        %2036 = vmatprep.subr.mxu0 0.0
        %2037 = vmatpush1.msra.mxu0 %v1045
        %2038 = vmatprep.subr.mxu0 0.0
        %2039 = vmatpush1.msra.mxu0 0.0
        %2040 = vmatprep.subr.mxu0 0.0
        %2041 = vmatpush1.msra.mxu0 0.0
        %2042 = vmatprep.subr.mxu0 0.0
        %2043 = vmatpush1.msra.mxu0 0.0
        %2044 = vmatprep.subr.mxu0 0.0
        %2045 = vmatpush1.msra.mxu0 0.0
        %2046 = vmatprep.subr.mxu0 0.0
        %2047 = vmatpush1.msra.mxu0 0.0
        %2048 = vmatprep.subr.mxu0 0.0
        %2049 = vmatpush1.msra.mxu0 0.0
        %2050 = vmatprep.subr.mxu0 0.0
        %2051 = vmatpush1.msra.mxu0 0.0
        %2052 = vmatprep.subr.mxu0 0.0
        %2053 = vmatpush1.msra.mxu0 0.0
        %2054 = vmatprep.subr.mxu0 0.0
        %2055 = vmatpush1.msra.mxu0 0.0
        %2056 = vmatprep.subr.mxu0 0.0
        %2057 = vmatpush1.msra.mxu0 0.0
        %2058 = vmatprep.subr.mxu0 0.0
        %2059 = vmatpush1.msra.mxu0 0.0
        %2060 = vmatprep.subr.mxu0 0.0
        %2061 = vmatpush1.msra.mxu0 0.0
        %2062 = vmatprep.subr.mxu0 0.0
        %2063 = vmatpush1.msra.mxu0 0.0
        %2064 = vmatprep.subr.mxu0 0.0
        %2065 = vmatpush1.msra.mxu0 0.0
        %2066 = vmatprep.subr.mxu0 0.0
        %2067 = vmatpush1.msra.mxu0 0.0
        %2068 = vmatprep.subr.mxu0 0.0
        %2069 = vmatpush1.msra.mxu0 0.0
        %2070 = vmatprep.subr.mxu0 0.0
        %2071 = vmatpush1.msra.mxu0 0.0
        %2072 = vmatprep.subr.mxu0 0.0
        %2073 = vmatpush1.msra.mxu0 0.0
        %2074 = vmatprep.subr.mxu0 0.0
        %2075 = vmatpush1.msra.mxu0 0.0
        %2076 = vmatprep.subr.mxu0 0.0
        %2077 = vmatpush1.msra.mxu0 0.0
        %2078 = vmatprep.subr.mxu0 0.0
        %2079 = vmatpush1.msra.mxu0 0.0
        %2080 = vmatprep.subr.mxu0 0.0
        %2081 = vmatpush1.msra.mxu0 0.0
        %2082 = vmatprep.subr.mxu0 0.0
        %2083 = vmatpush1.msra.mxu0 0.0
        %2084 = vmatprep.subr.mxu0 0.0
        %2085 = vmatpush1.msra.mxu0 0.0
        %2086 = vmatprep.subr.mxu0 0.0
        %2087 = vmatpush1.msra.mxu0 0.0
        %2088 = vmatprep.subr.mxu0 0.0
        %2089 = vmatpush1.msra.mxu0 0.0
        %2090 = vmatprep.subr.mxu0 0.0
        %2091 = vmatpush1.msra.mxu0 0.0
        %2092 = vmatprep.subr.mxu0 0.0
        %2093 = vmatpush1.msra.mxu0 0.0
        %2094 = vmatprep.subr.mxu0 0.0
        %2095 = vmatpush1.msra.mxu0 0.0
        %2096 = vmatprep.subr.mxu0 0.0
        %2097 = vmatpush1.msra.mxu0 0.0
        %2098 = vmatprep.subr.mxu0 0.0
        %2099 = vmatpush1.msra.mxu0 0.0
        %2100 = vmatprep.mubr.f32.mxu0 0.0
        %2101 = vmatmul.mubr.f32.gmra.mrb[0].mxu0 %v2034
        %v2102 = vpop.f32.mrb[0].mxu0
        %v2103 = vadd.f32 0.0, %v2102
        %v2104 = vpop.f32.mrb[0].mxu0
        %2105 = vdwg.mxu0
        %v2107 = vsel %vm1323, %v1884, 0
        %2109 = vmatprep.subr.mxu0 0.0
        %2110 = vmatpush1.msra.mxu0 %v1046
        %2111 = vmatprep.subr.mxu0 0.0
        %2112 = vmatpush1.msra.mxu0 0.0
        %2113 = vmatprep.subr.mxu0 0.0
        %2114 = vmatpush1.msra.mxu0 0.0
        %2115 = vmatprep.subr.mxu0 0.0
        %2116 = vmatpush1.msra.mxu0 0.0
        %2117 = vmatprep.subr.mxu0 0.0
        %2118 = vmatpush1.msra.mxu0 0.0
        %2119 = vmatprep.subr.mxu0 0.0
        %2120 = vmatpush1.msra.mxu0 0.0
        %2121 = vmatprep.subr.mxu0 0.0
        %2122 = vmatpush1.msra.mxu0 0.0
        %2123 = vmatprep.subr.mxu0 0.0
        %2124 = vmatpush1.msra.mxu0 0.0
        %2125 = vmatprep.subr.mxu0 0.0
        %2126 = vmatpush1.msra.mxu0 0.0
        %2127 = vmatprep.subr.mxu0 0.0
        %2128 = vmatpush1.msra.mxu0 0.0
        %2129 = vmatprep.subr.mxu0 0.0
        %2130 = vmatpush1.msra.mxu0 0.0
        %2131 = vmatprep.subr.mxu0 0.0
        %2132 = vmatpush1.msra.mxu0 0.0
        %2133 = vmatprep.subr.mxu0 0.0
        %2134 = vmatpush1.msra.mxu0 0.0
        %2135 = vmatprep.subr.mxu0 0.0
        %2136 = vmatpush1.msra.mxu0 0.0
        %2137 = vmatprep.subr.mxu0 0.0
        %2138 = vmatpush1.msra.mxu0 0.0
        %2139 = vmatprep.subr.mxu0 0.0
        %2140 = vmatpush1.msra.mxu0 0.0
        %2141 = vmatprep.subr.mxu0 0.0
        %2142 = vmatpush1.msra.mxu0 0.0
        %2143 = vmatprep.subr.mxu0 0.0
        %2144 = vmatpush1.msra.mxu0 0.0
        %2145 = vmatprep.subr.mxu0 0.0
        %2146 = vmatpush1.msra.mxu0 0.0
        %2147 = vmatprep.subr.mxu0 0.0
        %2148 = vmatpush1.msra.mxu0 0.0
        %2149 = vmatprep.subr.mxu0 0.0
        %2150 = vmatpush1.msra.mxu0 0.0
        %2151 = vmatprep.subr.mxu0 0.0
        %2152 = vmatpush1.msra.mxu0 0.0
        %2153 = vmatprep.subr.mxu0 0.0
        %2154 = vmatpush1.msra.mxu0 0.0
        %2155 = vmatprep.subr.mxu0 0.0
        %2156 = vmatpush1.msra.mxu0 0.0
        %2157 = vmatprep.subr.mxu0 0.0
        %2158 = vmatpush1.msra.mxu0 0.0
        %2159 = vmatprep.subr.mxu0 0.0
        %2160 = vmatpush1.msra.mxu0 0.0
        %2161 = vmatprep.subr.mxu0 0.0
        %2162 = vmatpush1.msra.mxu0 0.0
        %2163 = vmatprep.subr.mxu0 0.0
        %2164 = vmatpush1.msra.mxu0 0.0
        %2165 = vmatprep.subr.mxu0 0.0
        %2166 = vmatpush1.msra.mxu0 0.0
        %2167 = vmatprep.subr.mxu0 0.0
        %2168 = vmatpush1.msra.mxu0 0.0
        %2169 = vmatprep.subr.mxu0 0.0
        %2170 = vmatpush1.msra.mxu0 0.0
        %2171 = vmatprep.subr.mxu0 0.0
        %2172 = vmatpush1.msra.mxu0 0.0
        %2173 = vmatprep.mubr.f32.mxu0 0.0
        %2174 = vmatmul.mubr.f32.gmra.mrb[0].mxu0 %v2107
        %v2175 = vpop.f32.mrb[0].mxu0
        %v2176 = vadd.f32 0.0, %v2175
        %v2177 = vpop.f32.mrb[0].mxu0
        %2178 = vdwg.mxu0
        %v2180 = vsel %vm1323, %v1957, 0
        %2182 = vmatprep.subr.mxu0 0.0
        %2183 = vmatpush1.msra.mxu0 %v1047
        %2184 = vmatprep.subr.mxu0 0.0
        %2185 = vmatpush1.msra.mxu0 0.0
        %2186 = vmatprep.subr.mxu0 0.0
        %2187 = vmatpush1.msra.mxu0 0.0
        %2188 = vmatprep.subr.mxu0 0.0
        %2189 = vmatpush1.msra.mxu0 0.0
        %2190 = vmatprep.subr.mxu0 0.0
        %2191 = vmatpush1.msra.mxu0 0.0
        %2192 = vmatprep.subr.mxu0 0.0
        %2193 = vmatpush1.msra.mxu0 0.0
        %2194 = vmatprep.subr.mxu0 0.0
        %2195 = vmatpush1.msra.mxu0 0.0
        %2196 = vmatprep.subr.mxu0 0.0
        %2197 = vmatpush1.msra.mxu0 0.0
        %2198 = vmatprep.subr.mxu0 0.0
        %2199 = vmatpush1.msra.mxu0 0.0
        %2200 = vmatprep.subr.mxu0 0.0
        %2201 = vmatpush1.msra.mxu0 0.0
        %2202 = vmatprep.subr.mxu0 0.0
        %2203 = vmatpush1.msra.mxu0 0.0
        %2204 = vmatprep.subr.mxu0 0.0
        %2205 = vmatpush1.msra.mxu0 0.0
        %2206 = vmatprep.subr.mxu0 0.0
        %2207 = vmatpush1.msra.mxu0 0.0
        %2208 = vmatprep.subr.mxu0 0.0
        %2209 = vmatpush1.msra.mxu0 0.0
        %2210 = vmatprep.subr.mxu0 0.0
        %2211 = vmatpush1.msra.mxu0 0.0
        %2212 = vmatprep.subr.mxu0 0.0
        %2213 = vmatpush1.msra.mxu0 0.0
        %2214 = vmatprep.subr.mxu0 0.0
        %2215 = vmatpush1.msra.mxu0 0.0
        %2216 = vmatprep.subr.mxu0 0.0
        %2217 = vmatpush1.msra.mxu0 0.0
        %2218 = vmatprep.subr.mxu0 0.0
        %2219 = vmatpush1.msra.mxu0 0.0
        %2220 = vmatprep.subr.mxu0 0.0
        %2221 = vmatpush1.msra.mxu0 0.0
        %2222 = vmatprep.subr.mxu0 0.0
        %2223 = vmatpush1.msra.mxu0 0.0
        %2224 = vmatprep.subr.mxu0 0.0
        %2225 = vmatpush1.msra.mxu0 0.0
        %2226 = vmatprep.subr.mxu0 0.0
        %2227 = vmatpush1.msra.mxu0 0.0
        %2228 = vmatprep.subr.mxu0 0.0
        %2229 = vmatpush1.msra.mxu0 0.0
        %2230 = vmatprep.subr.mxu0 0.0
        %2231 = vmatpush1.msra.mxu0 0.0
        %2232 = vmatprep.subr.mxu0 0.0
        %2233 = vmatpush1.msra.mxu0 0.0
        %2234 = vmatprep.subr.mxu0 0.0
        %2235 = vmatpush1.msra.mxu0 0.0
        %2236 = vmatprep.subr.mxu0 0.0
        %2237 = vmatpush1.msra.mxu0 0.0
        %2238 = vmatprep.subr.mxu0 0.0
        %2239 = vmatpush1.msra.mxu0 0.0
        %2240 = vmatprep.subr.mxu0 0.0
        %2241 = vmatpush1.msra.mxu0 0.0
        %2242 = vmatprep.subr.mxu0 0.0
        %2243 = vmatpush1.msra.mxu0 0.0
        %2244 = vmatprep.subr.mxu0 0.0
        %2245 = vmatpush1.msra.mxu0 0.0
        %2246 = vmatprep.mubr.f32.mxu0 0.0
        %2247 = vmatmul.mubr.f32.gmra.mrb[0].mxu0 %v2180
        %v2248 = vpop.f32.mrb[0].mxu0
        %v2249 = vadd.f32 0.0, %v2248
        %v2250 = vpop.f32.mrb[0].mxu0
        %2251 = vdwg.mxu0
        %v2252 = vsel %vm1049, %v2030, 0.0
        %v2253 = vsel %vm1049, %v2103, 0.0
        %v2254 = vadd.f32 %v2252, %v2253
        %v2255 = vsel %vm1049, %v2176, 0.0
        %v2256 = vadd.f32 %v2254, %v2255
        %v2257 = vsel %vm1049, %v2249, 0.0
        %v2258 = vadd.f32 %v2256, %v2257
        %v2260 = vlaneseq
        %v2261 = vshrl.u32 %v2260, 7
        %v2262 = vsub.s32 0, %v2261
        %v2263 = vrot.slane %v1048, %v2262
        %v2265 = vadd.f32 %v2258, %v2263
        %v2266 = vld [vmem:[#allocation13] sm:$0x1]
        %v2267 = vld [vmem:[#allocation14] sm:$0x1]
        %v2268 = vadd.f32 %v2265, %v1028
        %v2269 = vsel %vm1049, %v2268, 0.0
        %2270 = vadd.xlane.f32.xlu0 %v2269
        %v2271 = vpop.xlane.xlu0 %2270
        %v2272 = vmul.f32 %v2271, 0.03125
        %v2273 = vsub.f32 %v2268, %v2272
        %v2274 = vmul.f32 %v2273, %v2273
        %v2275 = vsel %vm1049, %v2274, 0.0
        %2276 = vadd.xlane.f32.xlu0 %v2275
        %v2277 = vpop.xlane.xlu0 %2276
        %v2278 = vmul.f32 %v2277, 0.03125
        %v2279 = vadd.f32 %v2278, 1e-05
        %v2280 = vrsqrt.pop %v2279
        %v2281 = vmul.f32 %v2273, %v2280
        %v2283 = vlaneseq
        %v2284 = vshrl.u32 %v2283, 7
        %v2285 = vsub.s32 0, %v2284
        %v2286 = vrot.slane %v2266, %v2285
        %v2288 = vmul.f32 %v2281, %v2286
        %v2290 = vlaneseq
        %v2291 = vshrl.u32 %v2290, 7
        %v2292 = vsub.s32 0, %v2291
        %v2293 = vrot.slane %v2267, %v2292
        %v2295 = vadd.f32 %v2288, %v2293
        %v2296 = vld [vmem:[%s909] sm:$0xff]
        %v2297 = vld [vmem:[%s12] sm:$0xff]
        %v2298 = vld [vmem:[%s12 + $0x8] sm:$0xff]
        %v2299 = vld [vmem:[%s12 + $0x10] sm:$0xff]
        %v2300 = vld [vmem:[%s12 + $0x18] sm:$0xff]
        %v2301 = vld [vmem:[%s13] sm:$0xff]
        %v2302 = vld [vmem:[%s13 + $0x8] sm:$0xff]
        %v2303 = vld [vmem:[%s13 + $0x10] sm:$0xff]
        %v2304 = vld [vmem:[%s13 + $0x18] sm:$0xff]
        %v2305 = vld [vmem:[#allocation16] sm:$0xff]
        %v2306 = vld [vmem:[#allocation16 + $0x8] sm:$0xff]
        %v2307 = vld [vmem:[#allocation16 + $0x10] sm:$0xff]
        %v2308 = vld [vmem:[#allocation16 + $0x18] sm:$0xff]
        %v2309 = vld [vmem:[#allocation17] sm:$0xff]
        %v2310 = vld [vmem:[#allocation17 + $0x8] sm:$0xff]
        %v2311 = vld [vmem:[#allocation17 + $0x10] sm:$0xff]
        %v2312 = vld [vmem:[#allocation17 + $0x18] sm:$0xff]
        %v2313 = vld [vmem:[#allocation19] sm:$0x1]
        %v2315 = vsel %vm1049, %v2295, 0
        %v2318 = vsel %vm1049, %v2297, 0
        %v2321 = vsel %vm1049, %v2298, 0
        %v2324 = vsel %vm1049, %v2299, 0
        %v2327 = vsel %vm1049, %v2300, 0
        %2329 = vmatprep.subr.mxu0 0.0
        %2330 = vmatpush1.xpose.msra.mxu0 %v2318
        %2331 = vmatprep.subr.mxu0 0.0
        %2332 = vmatpush1.xpose.msra.mxu0 %v2321
        %2333 = vmatprep.subr.mxu0 0.0
        %2334 = vmatpush1.xpose.msra.mxu0 %v2324
        %2335 = vmatprep.subr.mxu0 0.0
        %2336 = vmatpush1.xpose.msra.mxu0 %v2327
        %2337 = vmatprep.subr.mxu0 0.0
        %2338 = vmatpush1.xpose.msra.mxu0 0.0
        %2339 = vmatprep.subr.mxu0 0.0
        %2340 = vmatpush1.xpose.msra.mxu0 0.0
        %2341 = vmatprep.subr.mxu0 0.0
        %2342 = vmatpush1.xpose.msra.mxu0 0.0
        %2343 = vmatprep.subr.mxu0 0.0
        %2344 = vmatpush1.xpose.msra.mxu0 0.0
        %2345 = vmatprep.subr.mxu0 0.0
        %2346 = vmatpush1.xpose.msra.mxu0 0.0
        %2347 = vmatprep.subr.mxu0 0.0
        %2348 = vmatpush1.xpose.msra.mxu0 0.0
        %2349 = vmatprep.subr.mxu0 0.0
        %2350 = vmatpush1.xpose.msra.mxu0 0.0
        %2351 = vmatprep.subr.mxu0 0.0
        %2352 = vmatpush1.xpose.msra.mxu0 0.0
        %2353 = vmatprep.subr.mxu0 0.0
        %2354 = vmatpush1.xpose.msra.mxu0 0.0
        %2355 = vmatprep.subr.mxu0 0.0
        %2356 = vmatpush1.xpose.msra.mxu0 0.0
        %2357 = vmatprep.subr.mxu0 0.0
        %2358 = vmatpush1.xpose.msra.mxu0 0.0
        %2359 = vmatprep.subr.mxu0 0.0
        %2360 = vmatpush1.xpose.msra.mxu0 0.0
        %2361 = vmatprep.subr.mxu0 0.0
        %2362 = vmatpush1.xpose.msra.mxu0 0.0
        %2363 = vmatprep.subr.mxu0 0.0
        %2364 = vmatpush1.xpose.msra.mxu0 0.0
        %2365 = vmatprep.subr.mxu0 0.0
        %2366 = vmatpush1.xpose.msra.mxu0 0.0
        %2367 = vmatprep.subr.mxu0 0.0
        %2368 = vmatpush1.xpose.msra.mxu0 0.0
        %2369 = vmatprep.subr.mxu0 0.0
        %2370 = vmatpush1.xpose.msra.mxu0 0.0
        %2371 = vmatprep.subr.mxu0 0.0
        %2372 = vmatpush1.xpose.msra.mxu0 0.0
        %2373 = vmatprep.subr.mxu0 0.0
        %2374 = vmatpush1.xpose.msra.mxu0 0.0
        %2375 = vmatprep.subr.mxu0 0.0
        %2376 = vmatpush1.xpose.msra.mxu0 0.0
        %2377 = vmatprep.subr.mxu0 0.0
        %2378 = vmatpush1.xpose.msra.mxu0 0.0
        %2379 = vmatprep.subr.mxu0 0.0
        %2380 = vmatpush1.xpose.msra.mxu0 0.0
        %2381 = vmatprep.subr.mxu0 0.0
        %2382 = vmatpush1.xpose.msra.mxu0 0.0
        %2383 = vmatprep.subr.mxu0 0.0
        %2384 = vmatpush1.xpose.msra.mxu0 0.0
        %2385 = vmatprep.subr.mxu0 0.0
        %2386 = vmatpush1.xpose.msra.mxu0 0.0
        %2387 = vmatprep.subr.mxu0 0.0
        %2388 = vmatpush1.xpose.msra.mxu0 0.0
        %2389 = vmatprep.subr.mxu0 0.0
        %2390 = vmatpush1.xpose.msra.mxu0 0.0
        %2391 = vmatprep.subr.mxu0 0.0
        %2392 = vmatpush1.xpose.msra.mxu0 0.0
        %2393 = vmatprep.mubr.f32.mxu0 0.0
        %2394 = vmatmul.mubr.f32.gmra.mrb[0].mxu0 %v2315
        %v2395 = vpop.f32.mrb[0].mxu0
        %v2396 = vadd.f32 0.0, %v2395
        %v2397 = vpop.f32.mrb[0].mxu0
        %2398 = vdwg.mxu0
        %v2400 = vsel %vm1049, %v1030, 0
        %v2403 = vsel %vm1049, %v2301, 0
        %v2406 = vsel %vm1049, %v2302, 0
        %v2409 = vsel %vm1049, %v2303, 0
        %v2412 = vsel %vm1049, %v2304, 0
        %2414 = vmatprep.subr.mxu0 0.0
        %2415 = vmatpush1.xpose.msra.mxu0 %v2403
        %2416 = vmatprep.subr.mxu0 0.0
        %2417 = vmatpush1.xpose.msra.mxu0 %v2406
        %2418 = vmatprep.subr.mxu0 0.0
        %2419 = vmatpush1.xpose.msra.mxu0 %v2409
        %2420 = vmatprep.subr.mxu0 0.0
        %2421 = vmatpush1.xpose.msra.mxu0 %v2412
        %2422 = vmatprep.subr.mxu0 0.0
        %2423 = vmatpush1.xpose.msra.mxu0 0.0
        %2424 = vmatprep.subr.mxu0 0.0
        %2425 = vmatpush1.xpose.msra.mxu0 0.0
        %2426 = vmatprep.subr.mxu0 0.0
        %2427 = vmatpush1.xpose.msra.mxu0 0.0
        %2428 = vmatprep.subr.mxu0 0.0
        %2429 = vmatpush1.xpose.msra.mxu0 0.0
        %2430 = vmatprep.subr.mxu0 0.0
        %2431 = vmatpush1.xpose.msra.mxu0 0.0
        %2432 = vmatprep.subr.mxu0 0.0
        %2433 = vmatpush1.xpose.msra.mxu0 0.0
        %2434 = vmatprep.subr.mxu0 0.0
        %2435 = vmatpush1.xpose.msra.mxu0 0.0
        %2436 = vmatprep.subr.mxu0 0.0
        %2437 = vmatpush1.xpose.msra.mxu0 0.0
        %2438 = vmatprep.subr.mxu0 0.0
        %2439 = vmatpush1.xpose.msra.mxu0 0.0
        %2440 = vmatprep.subr.mxu0 0.0
        %2441 = vmatpush1.xpose.msra.mxu0 0.0
        %2442 = vmatprep.subr.mxu0 0.0
        %2443 = vmatpush1.xpose.msra.mxu0 0.0
        %2444 = vmatprep.subr.mxu0 0.0
        %2445 = vmatpush1.xpose.msra.mxu0 0.0
        %2446 = vmatprep.subr.mxu0 0.0
        %2447 = vmatpush1.xpose.msra.mxu0 0.0
        %2448 = vmatprep.subr.mxu0 0.0
        %2449 = vmatpush1.xpose.msra.mxu0 0.0
        %2450 = vmatprep.subr.mxu0 0.0
        %2451 = vmatpush1.xpose.msra.mxu0 0.0
        %2452 = vmatprep.subr.mxu0 0.0
        %2453 = vmatpush1.xpose.msra.mxu0 0.0
        %2454 = vmatprep.subr.mxu0 0.0
        %2455 = vmatpush1.xpose.msra.mxu0 0.0
        %2456 = vmatprep.subr.mxu0 0.0
        %2457 = vmatpush1.xpose.msra.mxu0 0.0
        %2458 = vmatprep.subr.mxu0 0.0
        %2459 = vmatpush1.xpose.msra.mxu0 0.0
        %2460 = vmatprep.subr.mxu0 0.0
        %2461 = vmatpush1.xpose.msra.mxu0 0.0
        %2462 = vmatprep.subr.mxu0 0.0
        %2463 = vmatpush1.xpose.msra.mxu0 0.0
        %2464 = vmatprep.subr.mxu0 0.0
        %2465 = vmatpush1.xpose.msra.mxu0 0.0
        %2466 = vmatprep.subr.mxu0 0.0
        %2467 = vmatpush1.xpose.msra.mxu0 0.0
        %2468 = vmatprep.subr.mxu0 0.0
        %2469 = vmatpush1.xpose.msra.mxu0 0.0
        %2470 = vmatprep.subr.mxu0 0.0
        %2471 = vmatpush1.xpose.msra.mxu0 0.0
        %2472 = vmatprep.subr.mxu0 0.0
        %2473 = vmatpush1.xpose.msra.mxu0 0.0
        %2474 = vmatprep.subr.mxu0 0.0
        %2475 = vmatpush1.xpose.msra.mxu0 0.0
        %2476 = vmatprep.subr.mxu0 0.0
        %2477 = vmatpush1.xpose.msra.mxu0 0.0
        %2478 = vmatprep.mubr.f32.mxu0 0.0
        %2479 = vmatmul.mubr.f32.gmra.mrb[0].mxu0 %v2400
        %v2480 = vpop.f32.mrb[0].mxu0
        %v2481 = vadd.f32 0.0, %v2480
        %v2482 = vpop.f32.mrb[0].mxu0
        %2483 = vdwg.mxu0
        %v2485 = vsel %vm1049, %v1029, 0
        %v2488 = vsel %vm1049, %v2305, 0
        %v2491 = vsel %vm1049, %v2306, 0
        %v2494 = vsel %vm1049, %v2307, 0
        %v2497 = vsel %vm1049, %v2308, 0
        %2499 = vmatprep.subr.mxu0 0.0
        %2500 = vmatpush1.xpose.msra.mxu0 %v2488
        %2501 = vmatprep.subr.mxu0 0.0
        %2502 = vmatpush1.xpose.msra.mxu0 %v2491
        %2503 = vmatprep.subr.mxu0 0.0
        %2504 = vmatpush1.xpose.msra.mxu0 %v2494
        %2505 = vmatprep.subr.mxu0 0.0
        %2506 = vmatpush1.xpose.msra.mxu0 %v2497
        %2507 = vmatprep.subr.mxu0 0.0
        %2508 = vmatpush1.xpose.msra.mxu0 0.0
        %2509 = vmatprep.subr.mxu0 0.0
        %2510 = vmatpush1.xpose.msra.mxu0 0.0
        %2511 = vmatprep.subr.mxu0 0.0
        %2512 = vmatpush1.xpose.msra.mxu0 0.0
        %2513 = vmatprep.subr.mxu0 0.0
        %2514 = vmatpush1.xpose.msra.mxu0 0.0
        %2515 = vmatprep.subr.mxu0 0.0
        %2516 = vmatpush1.xpose.msra.mxu0 0.0
        %2517 = vmatprep.subr.mxu0 0.0
        %2518 = vmatpush1.xpose.msra.mxu0 0.0
        %2519 = vmatprep.subr.mxu0 0.0
        %2520 = vmatpush1.xpose.msra.mxu0 0.0
        %2521 = vmatprep.subr.mxu0 0.0
        %2522 = vmatpush1.xpose.msra.mxu0 0.0
        %2523 = vmatprep.subr.mxu0 0.0
        %2524 = vmatpush1.xpose.msra.mxu0 0.0
        %2525 = vmatprep.subr.mxu0 0.0
        %2526 = vmatpush1.xpose.msra.mxu0 0.0
        %2527 = vmatprep.subr.mxu0 0.0
        %2528 = vmatpush1.xpose.msra.mxu0 0.0
        %2529 = vmatprep.subr.mxu0 0.0
        %2530 = vmatpush1.xpose.msra.mxu0 0.0
        %2531 = vmatprep.subr.mxu0 0.0
        %2532 = vmatpush1.xpose.msra.mxu0 0.0
        %2533 = vmatprep.subr.mxu0 0.0
        %2534 = vmatpush1.xpose.msra.mxu0 0.0
        %2535 = vmatprep.subr.mxu0 0.0
        %2536 = vmatpush1.xpose.msra.mxu0 0.0
        %2537 = vmatprep.subr.mxu0 0.0
        %2538 = vmatpush1.xpose.msra.mxu0 0.0
        %2539 = vmatprep.subr.mxu0 0.0
        %2540 = vmatpush1.xpose.msra.mxu0 0.0
        %2541 = vmatprep.subr.mxu0 0.0
        %2542 = vmatpush1.xpose.msra.mxu0 0.0
        %2543 = vmatprep.subr.mxu0 0.0
        %2544 = vmatpush1.xpose.msra.mxu0 0.0
        %2545 = vmatprep.subr.mxu0 0.0
        %2546 = vmatpush1.xpose.msra.mxu0 0.0
        %2547 = vmatprep.subr.mxu0 0.0
        %2548 = vmatpush1.xpose.msra.mxu0 0.0
        %2549 = vmatprep.subr.mxu0 0.0
        %2550 = vmatpush1.xpose.msra.mxu0 0.0
        %2551 = vmatprep.subr.mxu0 0.0
        %2552 = vmatpush1.xpose.msra.mxu0 0.0
        %2553 = vmatprep.subr.mxu0 0.0
        %2554 = vmatpush1.xpose.msra.mxu0 0.0
        %2555 = vmatprep.subr.mxu0 0.0
        %2556 = vmatpush1.xpose.msra.mxu0 0.0
        %2557 = vmatprep.subr.mxu0 0.0
        %2558 = vmatpush1.xpose.msra.mxu0 0.0
        %2559 = vmatprep.subr.mxu0 0.0
        %2560 = vmatpush1.xpose.msra.mxu0 0.0
        %2561 = vmatprep.subr.mxu0 0.0
        %2562 = vmatpush1.xpose.msra.mxu0 0.0
        %2563 = vmatprep.mubr.f32.mxu0 0.0
        %2564 = vmatmul.mubr.f32.gmra.mrb[0].mxu0 %v2485
        %v2565 = vpop.f32.mrb[0].mxu0
        %v2566 = vadd.f32 0.0, %v2565
        %v2567 = vpop.f32.mrb[0].mxu0
        %2568 = vdwg.mxu0
        %2570 = vrot.lane.b32.xlu0 %v2396, 120
        %v2571 = vpop.permute.xlu0 %2570
        %2572 = vrot.lane.b32.xlu0 %v2396, 112
        %v2573 = vpop.permute.xlu0 %2572
        %2574 = vrot.lane.b32.xlu0 %v2396, 104
        %v2575 = vpop.permute.xlu0 %2574
        %2577 = vrot.lane.b32.xlu0 %v2481, 120
        %v2578 = vpop.permute.xlu0 %2577
        %2579 = vrot.lane.b32.xlu0 %v2481, 112
        %v2580 = vpop.permute.xlu0 %2579
        %2581 = vrot.lane.b32.xlu0 %v2481, 104
        %v2582 = vpop.permute.xlu0 %2581
        %2584 = vrot.lane.b32.xlu0 %v2566, 120
        %v2585 = vpop.permute.xlu0 %2584
        %2587 = vrot.lane.b32.xlu0 %v2566, 112
        %v2588 = vpop.permute.xlu0 %2587
        %2590 = vrot.lane.b32.xlu0 %v2566, 104
        %v2591 = vpop.permute.xlu0 %2590
        %v2593 = vsel %vm1323, %v2396, 0
        %v2595 = vsel %vm1323, %v2481, 0
        %2597 = vmatprep.subr.mxu0 0.0
        %2598 = vmatpush1.xpose.msra.mxu0 %v2595
        %2599 = vmatprep.subr.mxu0 0.0
        %2600 = vmatpush1.xpose.msra.mxu0 0.0
        %2601 = vmatprep.subr.mxu0 0.0
        %2602 = vmatpush1.xpose.msra.mxu0 0.0
        %2603 = vmatprep.subr.mxu0 0.0
        %2604 = vmatpush1.xpose.msra.mxu0 0.0
        %2605 = vmatprep.subr.mxu0 0.0
        %2606 = vmatpush1.xpose.msra.mxu0 0.0
        %2607 = vmatprep.subr.mxu0 0.0
        %2608 = vmatpush1.xpose.msra.mxu0 0.0
        %2609 = vmatprep.subr.mxu0 0.0
        %2610 = vmatpush1.xpose.msra.mxu0 0.0
        %2611 = vmatprep.subr.mxu0 0.0
        %2612 = vmatpush1.xpose.msra.mxu0 0.0
        %2613 = vmatprep.subr.mxu0 0.0
        %2614 = vmatpush1.xpose.msra.mxu0 0.0
        %2615 = vmatprep.subr.mxu0 0.0
        %2616 = vmatpush1.xpose.msra.mxu0 0.0
        %2617 = vmatprep.subr.mxu0 0.0
        %2618 = vmatpush1.xpose.msra.mxu0 0.0
        %2619 = vmatprep.subr.mxu0 0.0
        %2620 = vmatpush1.xpose.msra.mxu0 0.0
        %2621 = vmatprep.subr.mxu0 0.0
        %2622 = vmatpush1.xpose.msra.mxu0 0.0
        %2623 = vmatprep.subr.mxu0 0.0
        %2624 = vmatpush1.xpose.msra.mxu0 0.0
        %2625 = vmatprep.subr.mxu0 0.0
        %2626 = vmatpush1.xpose.msra.mxu0 0.0
        %2627 = vmatprep.subr.mxu0 0.0
        %2628 = vmatpush1.xpose.msra.mxu0 0.0
        %2629 = vmatprep.subr.mxu0 0.0
        %2630 = vmatpush1.xpose.msra.mxu0 0.0
        %2631 = vmatprep.subr.mxu0 0.0
        %2632 = vmatpush1.xpose.msra.mxu0 0.0
        %2633 = vmatprep.subr.mxu0 0.0
        %2634 = vmatpush1.xpose.msra.mxu0 0.0
        %2635 = vmatprep.subr.mxu0 0.0
        %2636 = vmatpush1.xpose.msra.mxu0 0.0
        %2637 = vmatprep.subr.mxu0 0.0
        %2638 = vmatpush1.xpose.msra.mxu0 0.0
        %2639 = vmatprep.subr.mxu0 0.0
        %2640 = vmatpush1.xpose.msra.mxu0 0.0
        %2641 = vmatprep.subr.mxu0 0.0
        %2642 = vmatpush1.xpose.msra.mxu0 0.0
        %2643 = vmatprep.subr.mxu0 0.0
        %2644 = vmatpush1.xpose.msra.mxu0 0.0
        %2645 = vmatprep.subr.mxu0 0.0
        %2646 = vmatpush1.xpose.msra.mxu0 0.0
        %2647 = vmatprep.subr.mxu0 0.0
        %2648 = vmatpush1.xpose.msra.mxu0 0.0
        %2649 = vmatprep.subr.mxu0 0.0
        %2650 = vmatpush1.xpose.msra.mxu0 0.0
        %2651 = vmatprep.subr.mxu0 0.0
        %2652 = vmatpush1.xpose.msra.mxu0 0.0
        %2653 = vmatprep.subr.mxu0 0.0
        %2654 = vmatpush1.xpose.msra.mxu0 0.0
        %2655 = vmatprep.subr.mxu0 0.0
        %2656 = vmatpush1.xpose.msra.mxu0 0.0
        %2657 = vmatprep.subr.mxu0 0.0
        %2658 = vmatpush1.xpose.msra.mxu0 0.0
        %2659 = vmatprep.subr.mxu0 0.0
        %2660 = vmatpush1.xpose.msra.mxu0 0.0
        %2661 = vmatprep.mubr.f32.mxu0 0.0
        %2662 = vmatmul.mubr.f32.gmra.mrb[0].mxu0 %v2593
        %v2663 = vpop.f32.mrb[0].mxu0
        %v2664 = vadd.f32 %v2296, %v2663
        %v2665 = vpop.f32.mrb[0].mxu0
        %2666 = vdwg.mxu0
        %v2667 = vsel %vm1323, %v2571, 0
        %v2669 = vsel %vm1323, %v2578, 0
        %2671 = vmatprep.subr.mxu0 0.0
        %2672 = vmatpush1.xpose.msra.mxu0 %v2669
        %2673 = vmatprep.subr.mxu0 0.0
        %2674 = vmatpush1.xpose.msra.mxu0 0.0
        %2675 = vmatprep.subr.mxu0 0.0
        %2676 = vmatpush1.xpose.msra.mxu0 0.0
        %2677 = vmatprep.subr.mxu0 0.0
        %2678 = vmatpush1.xpose.msra.mxu0 0.0
        %2679 = vmatprep.subr.mxu0 0.0
        %2680 = vmatpush1.xpose.msra.mxu0 0.0
        %2681 = vmatprep.subr.mxu0 0.0
        %2682 = vmatpush1.xpose.msra.mxu0 0.0
        %2683 = vmatprep.subr.mxu0 0.0
        %2684 = vmatpush1.xpose.msra.mxu0 0.0
        %2685 = vmatprep.subr.mxu0 0.0
        %2686 = vmatpush1.xpose.msra.mxu0 0.0
        %2687 = vmatprep.subr.mxu0 0.0
        %2688 = vmatpush1.xpose.msra.mxu0 0.0
        %2689 = vmatprep.subr.mxu0 0.0
        %2690 = vmatpush1.xpose.msra.mxu0 0.0
        %2691 = vmatprep.subr.mxu0 0.0
        %2692 = vmatpush1.xpose.msra.mxu0 0.0
        %2693 = vmatprep.subr.mxu0 0.0
        %2694 = vmatpush1.xpose.msra.mxu0 0.0
        %2695 = vmatprep.subr.mxu0 0.0
        %2696 = vmatpush1.xpose.msra.mxu0 0.0
        %2697 = vmatprep.subr.mxu0 0.0
        %2698 = vmatpush1.xpose.msra.mxu0 0.0
        %2699 = vmatprep.subr.mxu0 0.0
        %2700 = vmatpush1.xpose.msra.mxu0 0.0
        %2701 = vmatprep.subr.mxu0 0.0
        %2702 = vmatpush1.xpose.msra.mxu0 0.0
        %2703 = vmatprep.subr.mxu0 0.0
        %2704 = vmatpush1.xpose.msra.mxu0 0.0
        %2705 = vmatprep.subr.mxu0 0.0
        %2706 = vmatpush1.xpose.msra.mxu0 0.0
        %2707 = vmatprep.subr.mxu0 0.0
        %2708 = vmatpush1.xpose.msra.mxu0 0.0
        %2709 = vmatprep.subr.mxu0 0.0
        %2710 = vmatpush1.xpose.msra.mxu0 0.0
        %2711 = vmatprep.subr.mxu0 0.0
        %2712 = vmatpush1.xpose.msra.mxu0 0.0
        %2713 = vmatprep.subr.mxu0 0.0
        %2714 = vmatpush1.xpose.msra.mxu0 0.0
        %2715 = vmatprep.subr.mxu0 0.0
        %2716 = vmatpush1.xpose.msra.mxu0 0.0
        %2717 = vmatprep.subr.mxu0 0.0
        %2718 = vmatpush1.xpose.msra.mxu0 0.0
        %2719 = vmatprep.subr.mxu0 0.0
        %2720 = vmatpush1.xpose.msra.mxu0 0.0
        %2721 = vmatprep.subr.mxu0 0.0
        %2722 = vmatpush1.xpose.msra.mxu0 0.0
        %2723 = vmatprep.subr.mxu0 0.0
        %2724 = vmatpush1.xpose.msra.mxu0 0.0
        %2725 = vmatprep.subr.mxu0 0.0
        %2726 = vmatpush1.xpose.msra.mxu0 0.0
        %2727 = vmatprep.subr.mxu0 0.0
        %2728 = vmatpush1.xpose.msra.mxu0 0.0
        %2729 = vmatprep.subr.mxu0 0.0
        %2730 = vmatpush1.xpose.msra.mxu0 0.0
        %2731 = vmatprep.subr.mxu0 0.0
        %2732 = vmatpush1.xpose.msra.mxu0 0.0
        %2733 = vmatprep.subr.mxu0 0.0
        %2734 = vmatpush1.xpose.msra.mxu0 0.0
        %2735 = vmatprep.mubr.f32.mxu0 0.0
        %2736 = vmatmul.mubr.f32.gmra.mrb[0].mxu0 %v2667
        %v2737 = vpop.f32.mrb[0].mxu0
        %v2738 = vadd.f32 %v2296, %v2737
        %v2739 = vpop.f32.mrb[0].mxu0
        %2740 = vdwg.mxu0
        %v2741 = vsel %vm1323, %v2573, 0
        %v2743 = vsel %vm1323, %v2580, 0
        %2745 = vmatprep.subr.mxu0 0.0
        %2746 = vmatpush1.xpose.msra.mxu0 %v2743
        %2747 = vmatprep.subr.mxu0 0.0
        %2748 = vmatpush1.xpose.msra.mxu0 0.0
        %2749 = vmatprep.subr.mxu0 0.0
        %2750 = vmatpush1.xpose.msra.mxu0 0.0
        %2751 = vmatprep.subr.mxu0 0.0
        %2752 = vmatpush1.xpose.msra.mxu0 0.0
        %2753 = vmatprep.subr.mxu0 0.0
        %2754 = vmatpush1.xpose.msra.mxu0 0.0
        %2755 = vmatprep.subr.mxu0 0.0
        %2756 = vmatpush1.xpose.msra.mxu0 0.0
        %2757 = vmatprep.subr.mxu0 0.0
        %2758 = vmatpush1.xpose.msra.mxu0 0.0
        %2759 = vmatprep.subr.mxu0 0.0
        %2760 = vmatpush1.xpose.msra.mxu0 0.0
        %2761 = vmatprep.subr.mxu0 0.0
        %2762 = vmatpush1.xpose.msra.mxu0 0.0
        %2763 = vmatprep.subr.mxu0 0.0
        %2764 = vmatpush1.xpose.msra.mxu0 0.0
        %2765 = vmatprep.subr.mxu0 0.0
        %2766 = vmatpush1.xpose.msra.mxu0 0.0
        %2767 = vmatprep.subr.mxu0 0.0
        %2768 = vmatpush1.xpose.msra.mxu0 0.0
        %2769 = vmatprep.subr.mxu0 0.0
        %2770 = vmatpush1.xpose.msra.mxu0 0.0
        %2771 = vmatprep.subr.mxu0 0.0
        %2772 = vmatpush1.xpose.msra.mxu0 0.0
        %2773 = vmatprep.subr.mxu0 0.0
        %2774 = vmatpush1.xpose.msra.mxu0 0.0
        %2775 = vmatprep.subr.mxu0 0.0
        %2776 = vmatpush1.xpose.msra.mxu0 0.0
        %2777 = vmatprep.subr.mxu0 0.0
        %2778 = vmatpush1.xpose.msra.mxu0 0.0
        %2779 = vmatprep.subr.mxu0 0.0
        %2780 = vmatpush1.xpose.msra.mxu0 0.0
        %2781 = vmatprep.subr.mxu0 0.0
        %2782 = vmatpush1.xpose.msra.mxu0 0.0
        %2783 = vmatprep.subr.mxu0 0.0
        %2784 = vmatpush1.xpose.msra.mxu0 0.0
        %2785 = vmatprep.subr.mxu0 0.0
        %2786 = vmatpush1.xpose.msra.mxu0 0.0
        %2787 = vmatprep.subr.mxu0 0.0
        %2788 = vmatpush1.xpose.msra.mxu0 0.0
        %2789 = vmatprep.subr.mxu0 0.0
        %2790 = vmatpush1.xpose.msra.mxu0 0.0
        %2791 = vmatprep.subr.mxu0 0.0
        %2792 = vmatpush1.xpose.msra.mxu0 0.0
        %2793 = vmatprep.subr.mxu0 0.0
        %2794 = vmatpush1.xpose.msra.mxu0 0.0
        %2795 = vmatprep.subr.mxu0 0.0
        %2796 = vmatpush1.xpose.msra.mxu0 0.0
        %2797 = vmatprep.subr.mxu0 0.0
        %2798 = vmatpush1.xpose.msra.mxu0 0.0
        %2799 = vmatprep.subr.mxu0 0.0
        %2800 = vmatpush1.xpose.msra.mxu0 0.0
        %2801 = vmatprep.subr.mxu0 0.0
        %2802 = vmatpush1.xpose.msra.mxu0 0.0
        %2803 = vmatprep.subr.mxu0 0.0
        %2804 = vmatpush1.xpose.msra.mxu0 0.0
        %2805 = vmatprep.subr.mxu0 0.0
        %2806 = vmatpush1.xpose.msra.mxu0 0.0
        %2807 = vmatprep.subr.mxu0 0.0
        %2808 = vmatpush1.xpose.msra.mxu0 0.0
        %2809 = vmatprep.mubr.f32.mxu0 0.0
        %2810 = vmatmul.mubr.f32.gmra.mrb[0].mxu0 %v2741
        %v2811 = vpop.f32.mrb[0].mxu0
        %v2812 = vadd.f32 %v2296, %v2811
        %v2813 = vpop.f32.mrb[0].mxu0
        %2814 = vdwg.mxu0
        %v2815 = vsel %vm1323, %v2575, 0
        %v2817 = vsel %vm1323, %v2582, 0
        %2819 = vmatprep.subr.mxu0 0.0
        %2820 = vmatpush1.xpose.msra.mxu0 %v2817
        %2821 = vmatprep.subr.mxu0 0.0
        %2822 = vmatpush1.xpose.msra.mxu0 0.0
        %2823 = vmatprep.subr.mxu0 0.0
        %2824 = vmatpush1.xpose.msra.mxu0 0.0
        %2825 = vmatprep.subr.mxu0 0.0
        %2826 = vmatpush1.xpose.msra.mxu0 0.0
        %2827 = vmatprep.subr.mxu0 0.0
        %2828 = vmatpush1.xpose.msra.mxu0 0.0
        %2829 = vmatprep.subr.mxu0 0.0
        %2830 = vmatpush1.xpose.msra.mxu0 0.0
        %2831 = vmatprep.subr.mxu0 0.0
        %2832 = vmatpush1.xpose.msra.mxu0 0.0
        %2833 = vmatprep.subr.mxu0 0.0
        %2834 = vmatpush1.xpose.msra.mxu0 0.0
        %2835 = vmatprep.subr.mxu0 0.0
        %2836 = vmatpush1.xpose.msra.mxu0 0.0
        %2837 = vmatprep.subr.mxu0 0.0
        %2838 = vmatpush1.xpose.msra.mxu0 0.0
        %2839 = vmatprep.subr.mxu0 0.0
        %2840 = vmatpush1.xpose.msra.mxu0 0.0
        %2841 = vmatprep.subr.mxu0 0.0
        %2842 = vmatpush1.xpose.msra.mxu0 0.0
        %2843 = vmatprep.subr.mxu0 0.0
        %2844 = vmatpush1.xpose.msra.mxu0 0.0
        %2845 = vmatprep.subr.mxu0 0.0
        %2846 = vmatpush1.xpose.msra.mxu0 0.0
        %2847 = vmatprep.subr.mxu0 0.0
        %2848 = vmatpush1.xpose.msra.mxu0 0.0
        %2849 = vmatprep.subr.mxu0 0.0
        %2850 = vmatpush1.xpose.msra.mxu0 0.0
        %2851 = vmatprep.subr.mxu0 0.0
        %2852 = vmatpush1.xpose.msra.mxu0 0.0
        %2853 = vmatprep.subr.mxu0 0.0
        %2854 = vmatpush1.xpose.msra.mxu0 0.0
        %2855 = vmatprep.subr.mxu0 0.0
        %2856 = vmatpush1.xpose.msra.mxu0 0.0
        %2857 = vmatprep.subr.mxu0 0.0
        %2858 = vmatpush1.xpose.msra.mxu0 0.0
        %2859 = vmatprep.subr.mxu0 0.0
        %2860 = vmatpush1.xpose.msra.mxu0 0.0
        %2861 = vmatprep.subr.mxu0 0.0
        %2862 = vmatpush1.xpose.msra.mxu0 0.0
        %2863 = vmatprep.subr.mxu0 0.0
        %2864 = vmatpush1.xpose.msra.mxu0 0.0
        %2865 = vmatprep.subr.mxu0 0.0
        %2866 = vmatpush1.xpose.msra.mxu0 0.0
        %2867 = vmatprep.subr.mxu0 0.0
        %2868 = vmatpush1.xpose.msra.mxu0 0.0
        %2869 = vmatprep.subr.mxu0 0.0
        %2870 = vmatpush1.xpose.msra.mxu0 0.0
        %2871 = vmatprep.subr.mxu0 0.0
        %2872 = vmatpush1.xpose.msra.mxu0 0.0
        %2873 = vmatprep.subr.mxu0 0.0
        %2874 = vmatpush1.xpose.msra.mxu0 0.0
        %2875 = vmatprep.subr.mxu0 0.0
        %2876 = vmatpush1.xpose.msra.mxu0 0.0
        %2877 = vmatprep.subr.mxu0 0.0
        %2878 = vmatpush1.xpose.msra.mxu0 0.0
        %2879 = vmatprep.subr.mxu0 0.0
        %2880 = vmatpush1.xpose.msra.mxu0 0.0
        %2881 = vmatprep.subr.mxu0 0.0
        %2882 = vmatpush1.xpose.msra.mxu0 0.0
        %2883 = vmatprep.mubr.f32.mxu0 0.0
        %2884 = vmatmul.mubr.f32.gmra.mrb[0].mxu0 %v2815
        %v2885 = vpop.f32.mrb[0].mxu0
        %v2886 = vadd.f32 %v2296, %v2885
        %v2887 = vpop.f32.mrb[0].mxu0
        %2888 = vdwg.mxu0
        %v2889 = vmul.f32 %v2664, 0.17677669
        %v2890 = vmul.f32 %v2738, 0.17677669
        %v2891 = vmul.f32 %v2812, 0.17677669
        %v2892 = vmul.f32 %v2886, 0.17677669
        %v2893 = vsel %vm1323, %v2889, -inf
        %2894 = vmax.xlane.f32.xlu0 %v2893
        %v2895 = vpop.xlane.xlu0 %2894
        %v2896 = vsel %vm1323, %v2890, -inf
        %2897 = vmax.xlane.f32.xlu0 %v2896
        %v2898 = vpop.xlane.xlu0 %2897
        %v2899 = vsel %vm1323, %v2891, -inf
        %2900 = vmax.xlane.f32.xlu0 %v2899
        %v2901 = vpop.xlane.xlu0 %2900
        %v2902 = vsel %vm1323, %v2892, -inf
        %2903 = vmax.xlane.f32.xlu0 %v2902
        %v2904 = vpop.xlane.xlu0 %2903
        %v2905 = vsub.f32 %v2889, %v2895
        %v2906 = vsub.f32 %v2890, %v2898
        %v2907 = vsub.f32 %v2891, %v2901
        %v2908 = vsub.f32 %v2892, %v2904
        %v2909 = vmul.f32 %v2905, 1.442695
        %v2910 = vpow.pop %v2909
        %v2911 = vmul.f32 %v2906, 1.442695
        %v2912 = vpow.pop %v2911
        %v2913 = vmul.f32 %v2907, 1.442695
        %v2914 = vpow.pop %v2913
        %v2915 = vmul.f32 %v2908, 1.442695
        %v2916 = vpow.pop %v2915
        %v2917 = vsel %vm1323, %v2910, 0.0
        %2918 = vadd.xlane.f32.xlu0 %v2917
        %v2919 = vpop.xlane.xlu0 %2918
        %v2920 = vsel %vm1323, %v2912, 0.0
        %2921 = vadd.xlane.f32.xlu0 %v2920
        %v2922 = vpop.xlane.xlu0 %2921
        %v2923 = vsel %vm1323, %v2914, 0.0
        %2924 = vadd.xlane.f32.xlu0 %v2923
        %v2925 = vpop.xlane.xlu0 %2924
        %v2926 = vsel %vm1323, %v2916, 0.0
        %2927 = vadd.xlane.f32.xlu0 %v2926
        %v2928 = vpop.xlane.xlu0 %2927
        %v2929 = vrcp.pop %v2919
        %v2930 = vrcp.pop %v2922
        %v2931 = vrcp.pop %v2925
        %v2932 = vrcp.pop %v2928
        %v2933 = vmul.f32 %v2910, %v2929
        %v2934 = vmul.f32 %v2912, %v2930
        %v2935 = vmul.f32 %v2914, %v2931
        %v2936 = vmul.f32 %v2916, %v2932
        %v2938 = vsel %vm1323, %v2933, 0
        %2940 = vmatprep.subr.mxu0 0.0
        %2941 = vmatpush1.msra.mxu0 %v2566
        %2942 = vmatprep.subr.mxu0 0.0
        %2943 = vmatpush1.msra.mxu0 0.0
        %2944 = vmatprep.subr.mxu0 0.0
        %2945 = vmatpush1.msra.mxu0 0.0
        %2946 = vmatprep.subr.mxu0 0.0
        %2947 = vmatpush1.msra.mxu0 0.0
        %2948 = vmatprep.subr.mxu0 0.0
        %2949 = vmatpush1.msra.mxu0 0.0
        %2950 = vmatprep.subr.mxu0 0.0
        %2951 = vmatpush1.msra.mxu0 0.0
        %2952 = vmatprep.subr.mxu0 0.0
        %2953 = vmatpush1.msra.mxu0 0.0
        %2954 = vmatprep.subr.mxu0 0.0
        %2955 = vmatpush1.msra.mxu0 0.0
        %2956 = vmatprep.subr.mxu0 0.0
        %2957 = vmatpush1.msra.mxu0 0.0
        %2958 = vmatprep.subr.mxu0 0.0
        %2959 = vmatpush1.msra.mxu0 0.0
        %2960 = vmatprep.subr.mxu0 0.0
        %2961 = vmatpush1.msra.mxu0 0.0
        %2962 = vmatprep.subr.mxu0 0.0
        %2963 = vmatpush1.msra.mxu0 0.0
        %2964 = vmatprep.subr.mxu0 0.0
        %2965 = vmatpush1.msra.mxu0 0.0
        %2966 = vmatprep.subr.mxu0 0.0
        %2967 = vmatpush1.msra.mxu0 0.0
        %2968 = vmatprep.subr.mxu0 0.0
        %2969 = vmatpush1.msra.mxu0 0.0
        %2970 = vmatprep.subr.mxu0 0.0
        %2971 = vmatpush1.msra.mxu0 0.0
        %2972 = vmatprep.subr.mxu0 0.0
        %2973 = vmatpush1.msra.mxu0 0.0
        %2974 = vmatprep.subr.mxu0 0.0
        %2975 = vmatpush1.msra.mxu0 0.0
        %2976 = vmatprep.subr.mxu0 0.0
        %2977 = vmatpush1.msra.mxu0 0.0
        %2978 = vmatprep.subr.mxu0 0.0
        %2979 = vmatpush1.msra.mxu0 0.0
        %2980 = vmatprep.subr.mxu0 0.0
        %2981 = vmatpush1.msra.mxu0 0.0
        %2982 = vmatprep.subr.mxu0 0.0
        %2983 = vmatpush1.msra.mxu0 0.0
        %2984 = vmatprep.subr.mxu0 0.0
        %2985 = vmatpush1.msra.mxu0 0.0
        %2986 = vmatprep.subr.mxu0 0.0
        %2987 = vmatpush1.msra.mxu0 0.0
        %2988 = vmatprep.subr.mxu0 0.0
        %2989 = vmatpush1.msra.mxu0 0.0
        %2990 = vmatprep.subr.mxu0 0.0
        %2991 = vmatpush1.msra.mxu0 0.0
        %2992 = vmatprep.subr.mxu0 0.0
        %2993 = vmatpush1.msra.mxu0 0.0
        %2994 = vmatprep.subr.mxu0 0.0
        %2995 = vmatpush1.msra.mxu0 0.0
        %2996 = vmatprep.subr.mxu0 0.0
        %2997 = vmatpush1.msra.mxu0 0.0
        %2998 = vmatprep.subr.mxu0 0.0
        %2999 = vmatpush1.msra.mxu0 0.0
        %3000 = vmatprep.subr.mxu0 0.0
        %3001 = vmatpush1.msra.mxu0 0.0
        %3002 = vmatprep.subr.mxu0 0.0
        %3003 = vmatpush1.msra.mxu0 0.0
        %3004 = vmatprep.mubr.f32.mxu0 0.0
        %3005 = vmatmul.mubr.f32.gmra.mrb[0].mxu0 %v2938
        %v3006 = vpop.f32.mrb[0].mxu0
        %v3007 = vadd.f32 0.0, %v3006
        %v3008 = vpop.f32.mrb[0].mxu0
        %3009 = vdwg.mxu0
        %v3011 = vsel %vm1323, %v2934, 0
        %3013 = vmatprep.subr.mxu0 0.0
        %3014 = vmatpush1.msra.mxu0 %v2585
        %3015 = vmatprep.subr.mxu0 0.0
        %3016 = vmatpush1.msra.mxu0 0.0
        %3017 = vmatprep.subr.mxu0 0.0
        %3018 = vmatpush1.msra.mxu0 0.0
        %3019 = vmatprep.subr.mxu0 0.0
        %3020 = vmatpush1.msra.mxu0 0.0
        %3021 = vmatprep.subr.mxu0 0.0
        %3022 = vmatpush1.msra.mxu0 0.0
        %3023 = vmatprep.subr.mxu0 0.0
        %3024 = vmatpush1.msra.mxu0 0.0
        %3025 = vmatprep.subr.mxu0 0.0
        %3026 = vmatpush1.msra.mxu0 0.0
        %3027 = vmatprep.subr.mxu0 0.0
        %3028 = vmatpush1.msra.mxu0 0.0
        %3029 = vmatprep.subr.mxu0 0.0
        %3030 = vmatpush1.msra.mxu0 0.0
        %3031 = vmatprep.subr.mxu0 0.0
        %3032 = vmatpush1.msra.mxu0 0.0
        %3033 = vmatprep.subr.mxu0 0.0
        %3034 = vmatpush1.msra.mxu0 0.0
        %3035 = vmatprep.subr.mxu0 0.0
        %3036 = vmatpush1.msra.mxu0 0.0
        %3037 = vmatprep.subr.mxu0 0.0
        %3038 = vmatpush1.msra.mxu0 0.0
        %3039 = vmatprep.subr.mxu0 0.0
        %3040 = vmatpush1.msra.mxu0 0.0
        %3041 = vmatprep.subr.mxu0 0.0
        %3042 = vmatpush1.msra.mxu0 0.0
        %3043 = vmatprep.subr.mxu0 0.0
        %3044 = vmatpush1.msra.mxu0 0.0
        %3045 = vmatprep.subr.mxu0 0.0
        %3046 = vmatpush1.msra.mxu0 0.0
        %3047 = vmatprep.subr.mxu0 0.0
        %3048 = vmatpush1.msra.mxu0 0.0
        %3049 = vmatprep.subr.mxu0 0.0
        %3050 = vmatpush1.msra.mxu0 0.0
        %3051 = vmatprep.subr.mxu0 0.0
        %3052 = vmatpush1.msra.mxu0 0.0
        %3053 = vmatprep.subr.mxu0 0.0
        %3054 = vmatpush1.msra.mxu0 0.0
        %3055 = vmatprep.subr.mxu0 0.0
        %3056 = vmatpush1.msra.mxu0 0.0
        %3057 = vmatprep.subr.mxu0 0.0
        %3058 = vmatpush1.msra.mxu0 0.0
        %3059 = vmatprep.subr.mxu0 0.0
        %3060 = vmatpush1.msra.mxu0 0.0
        %3061 = vmatprep.subr.mxu0 0.0
        %3062 = vmatpush1.msra.mxu0 0.0
        %3063 = vmatprep.subr.mxu0 0.0
        %3064 = vmatpush1.msra.mxu0 0.0
        %3065 = vmatprep.subr.mxu0 0.0
        %3066 = vmatpush1.msra.mxu0 0.0
        %3067 = vmatprep.subr.mxu0 0.0
        %3068 = vmatpush1.msra.mxu0 0.0
        %3069 = vmatprep.subr.mxu0 0.0
        %3070 = vmatpush1.msra.mxu0 0.0
        %3071 = vmatprep.subr.mxu0 0.0
        %3072 = vmatpush1.msra.mxu0 0.0
        %3073 = vmatprep.subr.mxu0 0.0
        %3074 = vmatpush1.msra.mxu0 0.0
        %3075 = vmatprep.subr.mxu0 0.0
        %3076 = vmatpush1.msra.mxu0 0.0
        %3077 = vmatprep.mubr.f32.mxu0 0.0
        %3078 = vmatmul.mubr.f32.gmra.mrb[0].mxu0 %v3011
        %v3079 = vpop.f32.mrb[0].mxu0
        %v3080 = vadd.f32 0.0, %v3079
        %v3081 = vpop.f32.mrb[0].mxu0
        %3082 = vdwg.mxu0
        %v3084 = vsel %vm1323, %v2935, 0
        %3086 = vmatprep.subr.mxu0 0.0
        %3087 = vmatpush1.msra.mxu0 %v2588
        %3088 = vmatprep.subr.mxu0 0.0
        %3089 = vmatpush1.msra.mxu0 0.0
        %3090 = vmatprep.subr.mxu0 0.0
        %3091 = vmatpush1.msra.mxu0 0.0
        %3092 = vmatprep.subr.mxu0 0.0
        %3093 = vmatpush1.msra.mxu0 0.0
        %3094 = vmatprep.subr.mxu0 0.0
        %3095 = vmatpush1.msra.mxu0 0.0
        %3096 = vmatprep.subr.mxu0 0.0
        %3097 = vmatpush1.msra.mxu0 0.0
        %3098 = vmatprep.subr.mxu0 0.0
        %3099 = vmatpush1.msra.mxu0 0.0
        %3100 = vmatprep.subr.mxu0 0.0
        %3101 = vmatpush1.msra.mxu0 0.0
        %3102 = vmatprep.subr.mxu0 0.0
        %3103 = vmatpush1.msra.mxu0 0.0
        %3104 = vmatprep.subr.mxu0 0.0
        %3105 = vmatpush1.msra.mxu0 0.0
        %3106 = vmatprep.subr.mxu0 0.0
        %3107 = vmatpush1.msra.mxu0 0.0
        %3108 = vmatprep.subr.mxu0 0.0
        %3109 = vmatpush1.msra.mxu0 0.0
        %3110 = vmatprep.subr.mxu0 0.0
        %3111 = vmatpush1.msra.mxu0 0.0
        %3112 = vmatprep.subr.mxu0 0.0
        %3113 = vmatpush1.msra.mxu0 0.0
        %3114 = vmatprep.subr.mxu0 0.0
        %3115 = vmatpush1.msra.mxu0 0.0
        %3116 = vmatprep.subr.mxu0 0.0
        %3117 = vmatpush1.msra.mxu0 0.0
        %3118 = vmatprep.subr.mxu0 0.0
        %3119 = vmatpush1.msra.mxu0 0.0
        %3120 = vmatprep.subr.mxu0 0.0
        %3121 = vmatpush1.msra.mxu0 0.0
        %3122 = vmatprep.subr.mxu0 0.0
        %3123 = vmatpush1.msra.mxu0 0.0
        %3124 = vmatprep.subr.mxu0 0.0
        %3125 = vmatpush1.msra.mxu0 0.0
        %3126 = vmatprep.subr.mxu0 0.0
        %3127 = vmatpush1.msra.mxu0 0.0
        %3128 = vmatprep.subr.mxu0 0.0
        %3129 = vmatpush1.msra.mxu0 0.0
        %3130 = vmatprep.subr.mxu0 0.0
        %3131 = vmatpush1.msra.mxu0 0.0
        %3132 = vmatprep.subr.mxu0 0.0
        %3133 = vmatpush1.msra.mxu0 0.0
        %3134 = vmatprep.subr.mxu0 0.0
        %3135 = vmatpush1.msra.mxu0 0.0
        %3136 = vmatprep.subr.mxu0 0.0
        %3137 = vmatpush1.msra.mxu0 0.0
        %3138 = vmatprep.subr.mxu0 0.0
        %3139 = vmatpush1.msra.mxu0 0.0
        %3140 = vmatprep.subr.mxu0 0.0
        %3141 = vmatpush1.msra.mxu0 0.0
        %3142 = vmatprep.subr.mxu0 0.0
        %3143 = vmatpush1.msra.mxu0 0.0
        %3144 = vmatprep.subr.mxu0 0.0
        %3145 = vmatpush1.msra.mxu0 0.0
        %3146 = vmatprep.subr.mxu0 0.0
        %3147 = vmatpush1.msra.mxu0 0.0
        %3148 = vmatprep.subr.mxu0 0.0
        %3149 = vmatpush1.msra.mxu0 0.0
        %3150 = vmatprep.mubr.f32.mxu0 0.0
        %3151 = vmatmul.mubr.f32.gmra.mrb[0].mxu0 %v3084
        %v3152 = vpop.f32.mrb[0].mxu0
        %v3153 = vadd.f32 0.0, %v3152
        %v3154 = vpop.f32.mrb[0].mxu0
        %3155 = vdwg.mxu0
        %v3157 = vsel %vm1323, %v2936, 0
        %3159 = vmatprep.subr.mxu0 0.0
        %3160 = vmatpush1.msra.mxu0 %v2591
        %3161 = vmatprep.subr.mxu0 0.0
        %3162 = vmatpush1.msra.mxu0 0.0
        %3163 = vmatprep.subr.mxu0 0.0
        %3164 = vmatpush1.msra.mxu0 0.0
        %3165 = vmatprep.subr.mxu0 0.0
        %3166 = vmatpush1.msra.mxu0 0.0
        %3167 = vmatprep.subr.mxu0 0.0
        %3168 = vmatpush1.msra.mxu0 0.0
        %3169 = vmatprep.subr.mxu0 0.0
        %3170 = vmatpush1.msra.mxu0 0.0
        %3171 = vmatprep.subr.mxu0 0.0
        %3172 = vmatpush1.msra.mxu0 0.0
        %3173 = vmatprep.subr.mxu0 0.0
        %3174 = vmatpush1.msra.mxu0 0.0
        %3175 = vmatprep.subr.mxu0 0.0
        %3176 = vmatpush1.msra.mxu0 0.0
        %3177 = vmatprep.subr.mxu0 0.0
        %3178 = vmatpush1.msra.mxu0 0.0
        %3179 = vmatprep.subr.mxu0 0.0
        %3180 = vmatpush1.msra.mxu0 0.0
        %3181 = vmatprep.subr.mxu0 0.0
        %3182 = vmatpush1.msra.mxu0 0.0
        %3183 = vmatprep.subr.mxu0 0.0
        %3184 = vmatpush1.msra.mxu0 0.0
        %3185 = vmatprep.subr.mxu0 0.0
        %3186 = vmatpush1.msra.mxu0 0.0
        %3187 = vmatprep.subr.mxu0 0.0
        %3188 = vmatpush1.msra.mxu0 0.0
        %3189 = vmatprep.subr.mxu0 0.0
        %3190 = vmatpush1.msra.mxu0 0.0
        %3191 = vmatprep.subr.mxu0 0.0
        %3192 = vmatpush1.msra.mxu0 0.0
        %3193 = vmatprep.subr.mxu0 0.0
        %3194 = vmatpush1.msra.mxu0 0.0
        %3195 = vmatprep.subr.mxu0 0.0
        %3196 = vmatpush1.msra.mxu0 0.0
        %3197 = vmatprep.subr.mxu0 0.0
        %3198 = vmatpush1.msra.mxu0 0.0
        %3199 = vmatprep.subr.mxu0 0.0
        %3200 = vmatpush1.msra.mxu0 0.0
        %3201 = vmatprep.subr.mxu0 0.0
        %3202 = vmatpush1.msra.mxu0 0.0
        %3203 = vmatprep.subr.mxu0 0.0
        %3204 = vmatpush1.msra.mxu0 0.0
        %3205 = vmatprep.subr.mxu0 0.0
        %3206 = vmatpush1.msra.mxu0 0.0
        %3207 = vmatprep.subr.mxu0 0.0
        %3208 = vmatpush1.msra.mxu0 0.0
        %3209 = vmatprep.subr.mxu0 0.0
        %3210 = vmatpush1.msra.mxu0 0.0
        %3211 = vmatprep.subr.mxu0 0.0
        %3212 = vmatpush1.msra.mxu0 0.0
        %3213 = vmatprep.subr.mxu0 0.0
        %3214 = vmatpush1.msra.mxu0 0.0
        %3215 = vmatprep.subr.mxu0 0.0
        %3216 = vmatpush1.msra.mxu0 0.0
        %3217 = vmatprep.subr.mxu0 0.0
        %3218 = vmatpush1.msra.mxu0 0.0
        %3219 = vmatprep.subr.mxu0 0.0
        %3220 = vmatpush1.msra.mxu0 0.0
        %3221 = vmatprep.subr.mxu0 0.0
        %3222 = vmatpush1.msra.mxu0 0.0
        %3223 = vmatprep.mubr.f32.mxu0 0.0
        %3224 = vmatmul.mubr.f32.gmra.mrb[0].mxu0 %v3157
        %v3225 = vpop.f32.mrb[0].mxu0
        %v3226 = vadd.f32 0.0, %v3225
        %v3227 = vpop.f32.mrb[0].mxu0
        %3228 = vdwg.mxu0
        %v3230 = vsel %vm1323, %v3007, 0
        %3232 = vmatprep.subr.mxu0 0.0
        %3233 = vmatpush1.msra.mxu0 %v2309
        %3234 = vmatprep.subr.mxu0 0.0
        %3235 = vmatpush1.msra.mxu0 0.0
        %3236 = vmatprep.subr.mxu0 0.0
        %3237 = vmatpush1.msra.mxu0 0.0
        %3238 = vmatprep.subr.mxu0 0.0
        %3239 = vmatpush1.msra.mxu0 0.0
        %3240 = vmatprep.subr.mxu0 0.0
        %3241 = vmatpush1.msra.mxu0 0.0
        %3242 = vmatprep.subr.mxu0 0.0
        %3243 = vmatpush1.msra.mxu0 0.0
        %3244 = vmatprep.subr.mxu0 0.0
        %3245 = vmatpush1.msra.mxu0 0.0
        %3246 = vmatprep.subr.mxu0 0.0
        %3247 = vmatpush1.msra.mxu0 0.0
        %3248 = vmatprep.subr.mxu0 0.0
        %3249 = vmatpush1.msra.mxu0 0.0
        %3250 = vmatprep.subr.mxu0 0.0
        %3251 = vmatpush1.msra.mxu0 0.0
        %3252 = vmatprep.subr.mxu0 0.0
        %3253 = vmatpush1.msra.mxu0 0.0
        %3254 = vmatprep.subr.mxu0 0.0
        %3255 = vmatpush1.msra.mxu0 0.0
        %3256 = vmatprep.subr.mxu0 0.0
        %3257 = vmatpush1.msra.mxu0 0.0
        %3258 = vmatprep.subr.mxu0 0.0
        %3259 = vmatpush1.msra.mxu0 0.0
        %3260 = vmatprep.subr.mxu0 0.0
        %3261 = vmatpush1.msra.mxu0 0.0
        %3262 = vmatprep.subr.mxu0 0.0
        %3263 = vmatpush1.msra.mxu0 0.0
        %3264 = vmatprep.subr.mxu0 0.0
        %3265 = vmatpush1.msra.mxu0 0.0
        %3266 = vmatprep.subr.mxu0 0.0
        %3267 = vmatpush1.msra.mxu0 0.0
        %3268 = vmatprep.subr.mxu0 0.0
        %3269 = vmatpush1.msra.mxu0 0.0
        %3270 = vmatprep.subr.mxu0 0.0
        %3271 = vmatpush1.msra.mxu0 0.0
        %3272 = vmatprep.subr.mxu0 0.0
        %3273 = vmatpush1.msra.mxu0 0.0
        %3274 = vmatprep.subr.mxu0 0.0
        %3275 = vmatpush1.msra.mxu0 0.0
        %3276 = vmatprep.subr.mxu0 0.0
        %3277 = vmatpush1.msra.mxu0 0.0
        %3278 = vmatprep.subr.mxu0 0.0
        %3279 = vmatpush1.msra.mxu0 0.0
        %3280 = vmatprep.subr.mxu0 0.0
        %3281 = vmatpush1.msra.mxu0 0.0
        %3282 = vmatprep.subr.mxu0 0.0
        %3283 = vmatpush1.msra.mxu0 0.0
        %3284 = vmatprep.subr.mxu0 0.0
        %3285 = vmatpush1.msra.mxu0 0.0
        %3286 = vmatprep.subr.mxu0 0.0
        %3287 = vmatpush1.msra.mxu0 0.0
        %3288 = vmatprep.subr.mxu0 0.0
        %3289 = vmatpush1.msra.mxu0 0.0
        %3290 = vmatprep.subr.mxu0 0.0
        %3291 = vmatpush1.msra.mxu0 0.0
        %3292 = vmatprep.subr.mxu0 0.0
        %3293 = vmatpush1.msra.mxu0 0.0
        %3294 = vmatprep.subr.mxu0 0.0
        %3295 = vmatpush1.msra.mxu0 0.0
        %3296 = vmatprep.mubr.f32.mxu0 0.0
        %3297 = vmatmul.mubr.f32.gmra.mrb[0].mxu0 %v3230
        %v3298 = vpop.f32.mrb[0].mxu0
        %v3299 = vadd.f32 0.0, %v3298
        %v3300 = vpop.f32.mrb[0].mxu0
        %3301 = vdwg.mxu0
        %v3303 = vsel %vm1323, %v3080, 0
        %3305 = vmatprep.subr.mxu0 0.0
        %3306 = vmatpush1.msra.mxu0 %v2310
        %3307 = vmatprep.subr.mxu0 0.0
        %3308 = vmatpush1.msra.mxu0 0.0
        %3309 = vmatprep.subr.mxu0 0.0
        %3310 = vmatpush1.msra.mxu0 0.0
        %3311 = vmatprep.subr.mxu0 0.0
        %3312 = vmatpush1.msra.mxu0 0.0
        %3313 = vmatprep.subr.mxu0 0.0
        %3314 = vmatpush1.msra.mxu0 0.0
        %3315 = vmatprep.subr.mxu0 0.0
        %3316 = vmatpush1.msra.mxu0 0.0
        %3317 = vmatprep.subr.mxu0 0.0
        %3318 = vmatpush1.msra.mxu0 0.0
        %3319 = vmatprep.subr.mxu0 0.0
        %3320 = vmatpush1.msra.mxu0 0.0
        %3321 = vmatprep.subr.mxu0 0.0
        %3322 = vmatpush1.msra.mxu0 0.0
        %3323 = vmatprep.subr.mxu0 0.0
        %3324 = vmatpush1.msra.mxu0 0.0
        %3325 = vmatprep.subr.mxu0 0.0
        %3326 = vmatpush1.msra.mxu0 0.0
        %3327 = vmatprep.subr.mxu0 0.0
        %3328 = vmatpush1.msra.mxu0 0.0
        %3329 = vmatprep.subr.mxu0 0.0
        %3330 = vmatpush1.msra.mxu0 0.0
        %3331 = vmatprep.subr.mxu0 0.0
        %3332 = vmatpush1.msra.mxu0 0.0
        %3333 = vmatprep.subr.mxu0 0.0
        %3334 = vmatpush1.msra.mxu0 0.0
        %3335 = vmatprep.subr.mxu0 0.0
        %3336 = vmatpush1.msra.mxu0 0.0
        %3337 = vmatprep.subr.mxu0 0.0
        %3338 = vmatpush1.msra.mxu0 0.0
        %3339 = vmatprep.subr.mxu0 0.0
        %3340 = vmatpush1.msra.mxu0 0.0
        %3341 = vmatprep.subr.mxu0 0.0
        %3342 = vmatpush1.msra.mxu0 0.0
        %3343 = vmatprep.subr.mxu0 0.0
        %3344 = vmatpush1.msra.mxu0 0.0
        %3345 = vmatprep.subr.mxu0 0.0
        %3346 = vmatpush1.msra.mxu0 0.0
        %3347 = vmatprep.subr.mxu0 0.0
        %3348 = vmatpush1.msra.mxu0 0.0
        %3349 = vmatprep.subr.mxu0 0.0
        %3350 = vmatpush1.msra.mxu0 0.0
        %3351 = vmatprep.subr.mxu0 0.0
        %3352 = vmatpush1.msra.mxu0 0.0
        %3353 = vmatprep.subr.mxu0 0.0
        %3354 = vmatpush1.msra.mxu0 0.0
        %3355 = vmatprep.subr.mxu0 0.0
        %3356 = vmatpush1.msra.mxu0 0.0
        %3357 = vmatprep.subr.mxu0 0.0
        %3358 = vmatpush1.msra.mxu0 0.0
        %3359 = vmatprep.subr.mxu0 0.0
        %3360 = vmatpush1.msra.mxu0 0.0
        %3361 = vmatprep.subr.mxu0 0.0
        %3362 = vmatpush1.msra.mxu0 0.0
        %3363 = vmatprep.subr.mxu0 0.0
        %3364 = vmatpush1.msra.mxu0 0.0
        %3365 = vmatprep.subr.mxu0 0.0
        %3366 = vmatpush1.msra.mxu0 0.0
        %3367 = vmatprep.subr.mxu0 0.0
        %3368 = vmatpush1.msra.mxu0 0.0
        %3369 = vmatprep.mubr.f32.mxu0 0.0
        %3370 = vmatmul.mubr.f32.gmra.mrb[0].mxu0 %v3303
        %v3371 = vpop.f32.mrb[0].mxu0
        %v3372 = vadd.f32 0.0, %v3371
        %v3373 = vpop.f32.mrb[0].mxu0
        %3374 = vdwg.mxu0
        %v3376 = vsel %vm1323, %v3153, 0
        %3378 = vmatprep.subr.mxu0 0.0
        %3379 = vmatpush1.msra.mxu0 %v2311
        %3380 = vmatprep.subr.mxu0 0.0
        %3381 = vmatpush1.msra.mxu0 0.0
        %3382 = vmatprep.subr.mxu0 0.0
        %3383 = vmatpush1.msra.mxu0 0.0
        %3384 = vmatprep.subr.mxu0 0.0
        %3385 = vmatpush1.msra.mxu0 0.0
        %3386 = vmatprep.subr.mxu0 0.0
        %3387 = vmatpush1.msra.mxu0 0.0
        %3388 = vmatprep.subr.mxu0 0.0
        %3389 = vmatpush1.msra.mxu0 0.0
        %3390 = vmatprep.subr.mxu0 0.0
        %3391 = vmatpush1.msra.mxu0 0.0
        %3392 = vmatprep.subr.mxu0 0.0
        %3393 = vmatpush1.msra.mxu0 0.0
        %3394 = vmatprep.subr.mxu0 0.0
        %3395 = vmatpush1.msra.mxu0 0.0
        %3396 = vmatprep.subr.mxu0 0.0
        %3397 = vmatpush1.msra.mxu0 0.0
        %3398 = vmatprep.subr.mxu0 0.0
        %3399 = vmatpush1.msra.mxu0 0.0
        %3400 = vmatprep.subr.mxu0 0.0
        %3401 = vmatpush1.msra.mxu0 0.0
        %3402 = vmatprep.subr.mxu0 0.0
        %3403 = vmatpush1.msra.mxu0 0.0
        %3404 = vmatprep.subr.mxu0 0.0
        %3405 = vmatpush1.msra.mxu0 0.0
        %3406 = vmatprep.subr.mxu0 0.0
        %3407 = vmatpush1.msra.mxu0 0.0
        %3408 = vmatprep.subr.mxu0 0.0
        %3409 = vmatpush1.msra.mxu0 0.0
        %3410 = vmatprep.subr.mxu0 0.0
        %3411 = vmatpush1.msra.mxu0 0.0
        %3412 = vmatprep.subr.mxu0 0.0
        %3413 = vmatpush1.msra.mxu0 0.0
        %3414 = vmatprep.subr.mxu0 0.0
        %3415 = vmatpush1.msra.mxu0 0.0
        %3416 = vmatprep.subr.mxu0 0.0
        %3417 = vmatpush1.msra.mxu0 0.0
        %3418 = vmatprep.subr.mxu0 0.0
        %3419 = vmatpush1.msra.mxu0 0.0
        %3420 = vmatprep.subr.mxu0 0.0
        %3421 = vmatpush1.msra.mxu0 0.0
        %3422 = vmatprep.subr.mxu0 0.0
        %3423 = vmatpush1.msra.mxu0 0.0
        %3424 = vmatprep.subr.mxu0 0.0
        %3425 = vmatpush1.msra.mxu0 0.0
        %3426 = vmatprep.subr.mxu0 0.0
        %3427 = vmatpush1.msra.mxu0 0.0
        %3428 = vmatprep.subr.mxu0 0.0
        %3429 = vmatpush1.msra.mxu0 0.0
        %3430 = vmatprep.subr.mxu0 0.0
        %3431 = vmatpush1.msra.mxu0 0.0
        %3432 = vmatprep.subr.mxu0 0.0
        %3433 = vmatpush1.msra.mxu0 0.0
        %3434 = vmatprep.subr.mxu0 0.0
        %3435 = vmatpush1.msra.mxu0 0.0
        %3436 = vmatprep.subr.mxu0 0.0
        %3437 = vmatpush1.msra.mxu0 0.0
        %3438 = vmatprep.subr.mxu0 0.0
        %3439 = vmatpush1.msra.mxu0 0.0
        %3440 = vmatprep.subr.mxu0 0.0
        %3441 = vmatpush1.msra.mxu0 0.0
        %3442 = vmatprep.mubr.f32.mxu0 0.0
        %3443 = vmatmul.mubr.f32.gmra.mrb[0].mxu0 %v3376
        %v3444 = vpop.f32.mrb[0].mxu0
        %v3445 = vadd.f32 0.0, %v3444
        %v3446 = vpop.f32.mrb[0].mxu0
        %3447 = vdwg.mxu0
        %v3449 = vsel %vm1323, %v3226, 0
        %3451 = vmatprep.subr.mxu0 0.0
        %3452 = vmatpush1.msra.mxu0 %v2312
        %3453 = vmatprep.subr.mxu0 0.0
        %3454 = vmatpush1.msra.mxu0 0.0
        %3455 = vmatprep.subr.mxu0 0.0
        %3456 = vmatpush1.msra.mxu0 0.0
        %3457 = vmatprep.subr.mxu0 0.0
        %3458 = vmatpush1.msra.mxu0 0.0
        %3459 = vmatprep.subr.mxu0 0.0
        %3460 = vmatpush1.msra.mxu0 0.0
        %3461 = vmatprep.subr.mxu0 0.0
        %3462 = vmatpush1.msra.mxu0 0.0
        %3463 = vmatprep.subr.mxu0 0.0
        %3464 = vmatpush1.msra.mxu0 0.0
        %3465 = vmatprep.subr.mxu0 0.0
        %3466 = vmatpush1.msra.mxu0 0.0
        %3467 = vmatprep.subr.mxu0 0.0
        %3468 = vmatpush1.msra.mxu0 0.0
        %3469 = vmatprep.subr.mxu0 0.0
        %3470 = vmatpush1.msra.mxu0 0.0
        %3471 = vmatprep.subr.mxu0 0.0
        %3472 = vmatpush1.msra.mxu0 0.0
        %3473 = vmatprep.subr.mxu0 0.0
        %3474 = vmatpush1.msra.mxu0 0.0
        %3475 = vmatprep.subr.mxu0 0.0
        %3476 = vmatpush1.msra.mxu0 0.0
        %3477 = vmatprep.subr.mxu0 0.0
        %3478 = vmatpush1.msra.mxu0 0.0
        %3479 = vmatprep.subr.mxu0 0.0
        %3480 = vmatpush1.msra.mxu0 0.0
        %3481 = vmatprep.subr.mxu0 0.0
        %3482 = vmatpush1.msra.mxu0 0.0
        %3483 = vmatprep.subr.mxu0 0.0
        %3484 = vmatpush1.msra.mxu0 0.0
        %3485 = vmatprep.subr.mxu0 0.0
        %3486 = vmatpush1.msra.mxu0 0.0
        %3487 = vmatprep.subr.mxu0 0.0
        %3488 = vmatpush1.msra.mxu0 0.0
        %3489 = vmatprep.subr.mxu0 0.0
        %3490 = vmatpush1.msra.mxu0 0.0
        %3491 = vmatprep.subr.mxu0 0.0
        %3492 = vmatpush1.msra.mxu0 0.0
        %3493 = vmatprep.subr.mxu0 0.0
        %3494 = vmatpush1.msra.mxu0 0.0
        %3495 = vmatprep.subr.mxu0 0.0
        %3496 = vmatpush1.msra.mxu0 0.0
        %3497 = vmatprep.subr.mxu0 0.0
        %3498 = vmatpush1.msra.mxu0 0.0
        %3499 = vmatprep.subr.mxu0 0.0
        %3500 = vmatpush1.msra.mxu0 0.0
        %3501 = vmatprep.subr.mxu0 0.0
        %3502 = vmatpush1.msra.mxu0 0.0
        %3503 = vmatprep.subr.mxu0 0.0
        %3504 = vmatpush1.msra.mxu0 0.0
        %3505 = vmatprep.subr.mxu0 0.0
        %3506 = vmatpush1.msra.mxu0 0.0
        %3507 = vmatprep.subr.mxu0 0.0
        %3508 = vmatpush1.msra.mxu0 0.0
        %3509 = vmatprep.subr.mxu0 0.0
        %3510 = vmatpush1.msra.mxu0 0.0
        %3511 = vmatprep.subr.mxu0 0.0
        %3512 = vmatpush1.msra.mxu0 0.0
        %3513 = vmatprep.subr.mxu0 0.0
        %3514 = vmatpush1.msra.mxu0 0.0
        %3515 = vmatprep.mubr.f32.mxu0 0.0
        %3516 = vmatmul.mubr.f32.gmra.mrb[0].mxu0 %v3449
        %v3517 = vpop.f32.mrb[0].mxu0
        %v3518 = vadd.f32 0.0, %v3517
        %v3519 = vpop.f32.mrb[0].mxu0
        %3520 = vdwg.mxu0
        %v3521 = vsel %vm1049, %v3299, 0.0
        %v3522 = vsel %vm1049, %v3372, 0.0
        %v3523 = vadd.f32 %v3521, %v3522
        %v3524 = vsel %vm1049, %v3445, 0.0
        %v3525 = vadd.f32 %v3523, %v3524
        %v3526 = vsel %vm1049, %v3518, 0.0
        %v3527 = vadd.f32 %v3525, %v3526
        %v3529 = vlaneseq
        %v3530 = vshrl.u32 %v3529, 7
        %v3531 = vsub.s32 0, %v3530
        %v3532 = vrot.slane %v2313, %v3531
        %v3534 = vadd.f32 %v3527, %v3532
        %v3535 = vld [vmem:[#allocation20] sm:$0x1]
        %v3536 = vld [vmem:[%s18] sm:$0x1]
        %v3537 = vadd.f32 %v3534, %v2295
        %v3538 = vsel %vm1049, %v3537, 0.0
        %3539 = vadd.xlane.f32.xlu0 %v3538
        %v3540 = vpop.xlane.xlu0 %3539
        %v3541 = vmul.f32 %v3540, 0.03125
        %v3542 = vsub.f32 %v3537, %v3541
        %v3543 = vmul.f32 %v3542, %v3542
        %v3544 = vsel %vm1049, %v3543, 0.0
        %3545 = vadd.xlane.f32.xlu0 %v3544
        %v3546 = vpop.xlane.xlu0 %3545
        %v3547 = vmul.f32 %v3546, 0.03125
        %v3548 = vadd.f32 %v3547, 1e-05
        %v3549 = vrsqrt.pop %v3548
        %v3550 = vmul.f32 %v3542, %v3549
        %v3552 = vlaneseq
        %v3553 = vshrl.u32 %v3552, 7
        %v3554 = vsub.s32 0, %v3553
        %v3555 = vrot.slane %v3535, %v3554
        %v3557 = vmul.f32 %v3550, %v3555
        %v3559 = vlaneseq
        %v3560 = vshrl.u32 %v3559, 7
        %v3561 = vsub.s32 0, %v3560
        %v3562 = vrot.slane %v3536, %v3561
        %v3564 = vadd.f32 %v3557, %v3562
        %v3565 = vld [vmem:[%s19] sm:$0xff]
        %v3566 = vld [vmem:[%s19 + $0x8] sm:$0xff]
        %v3567 = vld [vmem:[%s19 + $0x10] sm:$0xff]
        %v3568 = vld [vmem:[%s19 + $0x18] sm:$0xff]
        %v3569 = vld [vmem:[%s19 + $0x20] sm:$0xff]
        %v3570 = vld [vmem:[%s19 + $0x28] sm:$0xff]
        %v3571 = vld [vmem:[%s19 + $0x30] sm:$0xff]
        %v3572 = vld [vmem:[%s19 + $0x38] sm:$0xff]
        %v3573 = vld [vmem:[%s19 + $0x40] sm:$0xff]
        %v3574 = vld [vmem:[%s19 + $0x48] sm:$0xff]
        %v3575 = vld [vmem:[%s19 + $0x50] sm:$0xff]
        %v3576 = vld [vmem:[%s19 + $0x58] sm:$0xff]
        %v3577 = vld [vmem:[%s19 + $0x60] sm:$0xff]
        %v3578 = vld [vmem:[%s19 + $0x68] sm:$0xff]
        %v3579 = vld [vmem:[%s19 + $0x70] sm:$0xff]
        %v3580 = vld [vmem:[%s19 + $0x78] sm:$0xff]
        %v3581 = vld [vmem:[%s20] sm:$0x1]
        %v3583 = vlaneseq
        %v3584 = vshrl.u32 %v3583, 7
        %v3585 = vsub.s32 0, %v3584
        %v3586 = vrot.slane %v3581, %v3585
        %v3589 = vsel %vm1049, %v3564, 0
        %v3592 = vsel %vm1049, %v3565, 0
        %v3595 = vsel %vm1049, %v3566, 0
        %v3598 = vsel %vm1049, %v3567, 0
        %v3601 = vsel %vm1049, %v3568, 0
        %v3604 = vsel %vm1049, %v3569, 0
        %v3607 = vsel %vm1049, %v3570, 0
        %v3610 = vsel %vm1049, %v3571, 0
        %v3613 = vsel %vm1049, %v3572, 0
        %v3616 = vsel %vm1049, %v3573, 0
        %v3619 = vsel %vm1049, %v3574, 0
        %v3622 = vsel %vm1049, %v3575, 0
        %v3625 = vsel %vm1049, %v3576, 0
        %v3628 = vsel %vm1049, %v3577, 0
        %v3631 = vsel %vm1049, %v3578, 0
        %v3634 = vsel %vm1049, %v3579, 0
        %v3637 = vsel %vm1049, %v3580, 0
        %3639 = vmatprep.subr.mxu0 0.0
        %3640 = vmatpush1.xpose.msra.mxu0 %v3592
        %3641 = vmatprep.subr.mxu0 0.0
        %3642 = vmatpush1.xpose.msra.mxu0 %v3595
        %3643 = vmatprep.subr.mxu0 0.0
        %3644 = vmatpush1.xpose.msra.mxu0 %v3598
        %3645 = vmatprep.subr.mxu0 0.0
        %3646 = vmatpush1.xpose.msra.mxu0 %v3601
        %3647 = vmatprep.subr.mxu0 0.0
        %3648 = vmatpush1.xpose.msra.mxu0 %v3604
        %3649 = vmatprep.subr.mxu0 0.0
        %3650 = vmatpush1.xpose.msra.mxu0 %v3607
        %3651 = vmatprep.subr.mxu0 0.0
        %3652 = vmatpush1.xpose.msra.mxu0 %v3610
        %3653 = vmatprep.subr.mxu0 0.0
        %3654 = vmatpush1.xpose.msra.mxu0 %v3613
        %3655 = vmatprep.subr.mxu0 0.0
        %3656 = vmatpush1.xpose.msra.mxu0 %v3616
        %3657 = vmatprep.subr.mxu0 0.0
        %3658 = vmatpush1.xpose.msra.mxu0 %v3619
        %3659 = vmatprep.subr.mxu0 0.0
        %3660 = vmatpush1.xpose.msra.mxu0 %v3622
        %3661 = vmatprep.subr.mxu0 0.0
        %3662 = vmatpush1.xpose.msra.mxu0 %v3625
        %3663 = vmatprep.subr.mxu0 0.0
        %3664 = vmatpush1.xpose.msra.mxu0 %v3628
        %3665 = vmatprep.subr.mxu0 0.0
        %3666 = vmatpush1.xpose.msra.mxu0 %v3631
        %3667 = vmatprep.subr.mxu0 0.0
        %3668 = vmatpush1.xpose.msra.mxu0 %v3634
        %3669 = vmatprep.subr.mxu0 0.0
        %3670 = vmatpush1.xpose.msra.mxu0 %v3637
        %3671 = vmatprep.subr.mxu0 0.0
        %3672 = vmatpush1.xpose.msra.mxu0 0.0
        %3673 = vmatprep.subr.mxu0 0.0
        %3674 = vmatpush1.xpose.msra.mxu0 0.0
        %3675 = vmatprep.subr.mxu0 0.0
        %3676 = vmatpush1.xpose.msra.mxu0 0.0
        %3677 = vmatprep.subr.mxu0 0.0
        %3678 = vmatpush1.xpose.msra.mxu0 0.0
        %3679 = vmatprep.subr.mxu0 0.0
        %3680 = vmatpush1.xpose.msra.mxu0 0.0
        %3681 = vmatprep.subr.mxu0 0.0
        %3682 = vmatpush1.xpose.msra.mxu0 0.0
        %3683 = vmatprep.subr.mxu0 0.0
        %3684 = vmatpush1.xpose.msra.mxu0 0.0
        %3685 = vmatprep.subr.mxu0 0.0
        %3686 = vmatpush1.xpose.msra.mxu0 0.0
        %3687 = vmatprep.subr.mxu0 0.0
        %3688 = vmatpush1.xpose.msra.mxu0 0.0
        %3689 = vmatprep.subr.mxu0 0.0
        %3690 = vmatpush1.xpose.msra.mxu0 0.0
        %3691 = vmatprep.subr.mxu0 0.0
        %3692 = vmatpush1.xpose.msra.mxu0 0.0
        %3693 = vmatprep.subr.mxu0 0.0
        %3694 = vmatpush1.xpose.msra.mxu0 0.0
        %3695 = vmatprep.subr.mxu0 0.0
        %3696 = vmatpush1.xpose.msra.mxu0 0.0
        %3697 = vmatprep.subr.mxu0 0.0
        %3698 = vmatpush1.xpose.msra.mxu0 0.0
        %3699 = vmatprep.subr.mxu0 0.0
        %3700 = vmatpush1.xpose.msra.mxu0 0.0
        %3701 = vmatprep.subr.mxu0 0.0
        %3702 = vmatpush1.xpose.msra.mxu0 0.0
        %3703 = vmatprep.mubr.f32.mxu0 0.0
        %3704 = vmatmul.mubr.f32.gmra.mrb[0].mxu0 %v3589
        %v3705 = vpop.f32.mrb[0].mxu0
        %v3706 = vadd.f32 %v3586, %v3705
        %v3707 = vpop.f32.mrb[0].mxu0
        %3708 = vdwg.mxu0
        %v3709 = vmax.f32 %v3706, 0.0
        %v3710 = vld [vmem:[#allocation22] sm:$0xff]
        %v3711 = vld [vmem:[#allocation22 + $0x8] sm:$0xff]
        %v3712 = vld [vmem:[#allocation22 + $0x10] sm:$0xff]
        %v3713 = vld [vmem:[#allocation22 + $0x18] sm:$0xff]
        %v3714 = vld [vmem:[%s22] sm:$0x1]
        %v3716 = vlaneseq
        %v3717 = vshrl.u32 %v3716, 7
        %v3718 = vsub.s32 0, %v3717
        %v3719 = vrot.slane %v3714, %v3718
        %3721 = vmatprep.subr.mxu0 0.0
        %3722 = vmatpush1.xpose.msra.mxu0 %v3710
        %3723 = vmatprep.subr.mxu0 0.0
        %3724 = vmatpush1.xpose.msra.mxu0 %v3711
        %3725 = vmatprep.subr.mxu0 0.0
        %3726 = vmatpush1.xpose.msra.mxu0 %v3712
        %3727 = vmatprep.subr.mxu0 0.0
        %3728 = vmatpush1.xpose.msra.mxu0 %v3713
        %3729 = vmatprep.subr.mxu0 0.0
        %3730 = vmatpush1.xpose.msra.mxu0 0.0
        %3731 = vmatprep.subr.mxu0 0.0
        %3732 = vmatpush1.xpose.msra.mxu0 0.0
        %3733 = vmatprep.subr.mxu0 0.0
        %3734 = vmatpush1.xpose.msra.mxu0 0.0
        %3735 = vmatprep.subr.mxu0 0.0
        %3736 = vmatpush1.xpose.msra.mxu0 0.0
        %3737 = vmatprep.subr.mxu0 0.0
        %3738 = vmatpush1.xpose.msra.mxu0 0.0
        %3739 = vmatprep.subr.mxu0 0.0
        %3740 = vmatpush1.xpose.msra.mxu0 0.0
        %3741 = vmatprep.subr.mxu0 0.0
        %3742 = vmatpush1.xpose.msra.mxu0 0.0
        %3743 = vmatprep.subr.mxu0 0.0
        %3744 = vmatpush1.xpose.msra.mxu0 0.0
        %3745 = vmatprep.subr.mxu0 0.0
        %3746 = vmatpush1.xpose.msra.mxu0 0.0
        %3747 = vmatprep.subr.mxu0 0.0
        %3748 = vmatpush1.xpose.msra.mxu0 0.0
        %3749 = vmatprep.subr.mxu0 0.0
        %3750 = vmatpush1.xpose.msra.mxu0 0.0
        %3751 = vmatprep.subr.mxu0 0.0
        %3752 = vmatpush1.xpose.msra.mxu0 0.0
        %3753 = vmatprep.subr.mxu0 0.0
        %3754 = vmatpush1.xpose.msra.mxu0 0.0
        %3755 = vmatprep.subr.mxu0 0.0
        %3756 = vmatpush1.xpose.msra.mxu0 0.0
        %3757 = vmatprep.subr.mxu0 0.0
        %3758 = vmatpush1.xpose.msra.mxu0 0.0
        %3759 = vmatprep.subr.mxu0 0.0
        %3760 = vmatpush1.xpose.msra.mxu0 0.0
        %3761 = vmatprep.subr.mxu0 0.0
        %3762 = vmatpush1.xpose.msra.mxu0 0.0
        %3763 = vmatprep.subr.mxu0 0.0
        %3764 = vmatpush1.xpose.msra.mxu0 0.0
        %3765 = vmatprep.subr.mxu0 0.0
        %3766 = vmatpush1.xpose.msra.mxu0 0.0
        %3767 = vmatprep.subr.mxu0 0.0
        %3768 = vmatpush1.xpose.msra.mxu0 0.0
        %3769 = vmatprep.subr.mxu0 0.0
        %3770 = vmatpush1.xpose.msra.mxu0 0.0
        %3771 = vmatprep.subr.mxu0 0.0
        %3772 = vmatpush1.xpose.msra.mxu0 0.0
        %3773 = vmatprep.subr.mxu0 0.0
        %3774 = vmatpush1.xpose.msra.mxu0 0.0
        %3775 = vmatprep.subr.mxu0 0.0
        %3776 = vmatpush1.xpose.msra.mxu0 0.0
        %3777 = vmatprep.subr.mxu0 0.0
        %3778 = vmatpush1.xpose.msra.mxu0 0.0
        %3779 = vmatprep.subr.mxu0 0.0
        %3780 = vmatpush1.xpose.msra.mxu0 0.0
        %3781 = vmatprep.subr.mxu0 0.0
        %3782 = vmatpush1.xpose.msra.mxu0 0.0
        %3783 = vmatprep.subr.mxu0 0.0
        %3784 = vmatpush1.xpose.msra.mxu0 0.0
        %3785 = vmatprep.mubr.f32.mxu0 0.0
        %3786 = vmatmul.mubr.f32.gmra.mrb[0].mxu0 %v3709
        %v3787 = vpop.f32.mrb[0].mxu0
        %v3788 = vadd.f32 %v3719, %v3787
        %v3789 = vpop.f32.mrb[0].mxu0
        %3790 = vdwg.mxu0
        %v3791 = vld [vmem:[%s23] sm:$0x1]
        %v3792 = vld [vmem:[%s24] sm:$0x1]
        %v3793 = vadd.f32 %v3788, %v3564
        %v3794 = vsel %vm1049, %v3793, 0.0
        %3795 = vadd.xlane.f32.xlu0 %v3794
        %v3796 = vpop.xlane.xlu0 %3795
        %v3797 = vmul.f32 %v3796, 0.03125
        %v3798 = vsub.f32 %v3793, %v3797
        %v3799 = vmul.f32 %v3798, %v3798
        %v3800 = vsel %vm1049, %v3799, 0.0
        %3801 = vadd.xlane.f32.xlu0 %v3800
        %v3802 = vpop.xlane.xlu0 %3801
        %v3803 = vmul.f32 %v3802, 0.03125
        %v3804 = vadd.f32 %v3803, 1e-05
        %v3805 = vrsqrt.pop %v3804
        %v3806 = vmul.f32 %v3798, %v3805
        %v3808 = vlaneseq
        %v3809 = vshrl.u32 %v3808, 7
        %v3810 = vsub.s32 0, %v3809
        %v3811 = vrot.slane %v3791, %v3810
        %v3813 = vmul.f32 %v3806, %v3811
        %v3815 = vlaneseq
        %v3816 = vshrl.u32 %v3815, 7
        %v3817 = vsub.s32 0, %v3816
        %v3818 = vrot.slane %v3792, %v3817
        %v3820 = vadd.f32 %v3813, %v3818
        %3821 = vst.msk [vmem:[%s1027] sm:$0xff] %vm1049, %v3820
        %s3822 = sand.u32 %s610, 1
        %s3823 = scalar_lea.sflag [#allocation4], %s3822
        %s3824 = sand.u32 %s610, 1
        %s3825 = smul.addr %s3824, 8
        %s3826 = scalar_lea.vmem [#allocation23], %s3825
        // Predicated region
        $region173: #{tpu_custom_call.1} parent=119 // pred_check
          %p3827 = pneg %p620
        $region174: #{tpu_custom_call.1} parent=119 // pred_check_branch
          %3829 = sbr.rel (%p3827) target = $region176
        $region175: #{tpu_custom_call.1} parent=119 // pred_region
          %s3831 = ssub.s32 128, 128
          %3832 = vsyncadd %s3823, %s3831
          %s3833 = smul.addr %s52, 128
          %s3834 = scalar_lea.hbm %s25, %s3833
          %s3836 = sshll.u32 %s3826, 4
          %s3837 = int_to_ptr.vmem [resolvable:$true] %s3836
          %3839 = dma.vmem_to_hbm [thread:$0]  %s3837, 128, %s3834, %s3823
        $region176: #{tpu_custom_call.1} parent=119 // pred_fallthru
          _
      $region120: #{tpu_custom_call.1} parent=5 // pred_fallthru
        _
      %p3840 = scmp.le.s32.totalorder 2, %s47
      // Predicated region
      $region177: #{tpu_custom_call.1} parent=5 // pred_check
        %p3841 = pneg %p3840
      $region178: #{tpu_custom_call.1} parent=5 // pred_check_branch
        %3843 = sbr.rel (%p3841) target = $region180
      $region179: #{tpu_custom_call.1} parent=5 // pred_region
        %s3844 = ssub.s32 %s47, 2
        // Predicated region
        $region181: #{tpu_custom_call.1} parent=179 // pred_check
          %p3845 = pneg %p626
        $region182: #{tpu_custom_call.1} parent=179 // pred_check_branch
          %3847 = sbr.rel (%p3845) target = $region184
        $region183: #{tpu_custom_call.1} parent=179 // pred_region
          %s3848 = sand.u32 %s611, 1
          %s3849 = scalar_lea.sflag [#allocation4], %s3848
          %s3850 = sand.u32 %s611, 1
          %s3851 = smul.addr %s3850, 8
          %s3852 = scalar_lea.vmem [#allocation23], %s3851
          %3853 = dma.done %s3849, 128
        $region184: #{tpu_custom_call.1} parent=179 // pred_fallthru
          _
      $region180: #{tpu_custom_call.1} parent=5 // pred_fallthru
        _
    $region6: #{tpu_custom_call.1} parent=1 // loop_footer
      %s51 = sadd.s32 1, %s47
    $region7: #{tpu_custom_call.1} parent=1 // loop_footer_branch
      %46 = sbr.rel target = $region3
    $region8: #{tpu_custom_call.1} parent=1 // loop_exit
      _
    %3854 = vsyncpa [#allocation3], 1
    %s3855 = scalar_lea.sflag [#allocation3], 1
    %3856 = vsyncpa %s3855, 1
    %3857 = vsyncpa [#allocation6], 1
    %s3858 = scalar_lea.sflag [#allocation6], 1
    %3859 = vsyncpa %s3858, 1
    %3860 = vsyncpa [#allocation9], 1
    %s3861 = scalar_lea.sflag [#allocation9], 1
    %3862 = vsyncpa %s3861, 1
    %3863 = vsyncpa [#allocation12], 1
    %3864 = vsyncpa [#allocation15], 1
    %3865 = vsyncpa [#allocation18], 1
    %3866 = vsyncpa [#allocation21], 1
    %3867 = vsyncpa [#allocation4], 1
    %s3868 = scalar_lea.sflag [#allocation4], 1
    %3869 = vsyncpa %s3868, 1

</llo_original>
